<compile_context>
chip_gen: v5e
topology: v5e:2x2
jax: 0.10.0
libtpu: 0.0.40
codegen_flags: <defaults>
</compile_context>

<pallas_src>
import functools

import jax
import jax.numpy as jnp
from jax.experimental import pallas as pl
from jax.experimental.pallas import tpu as pltpu

EPS = 1e-5


# ----------------------------------------------------------------------------
# Kernel 1: per-image, per-channel sum / sum-of-squares of x (BN1 statistics).
# Each grid step writes its own (1, 1, C) slot -> grid axis stays "parallel";
# the tiny reduction over N happens in the wrapper.
# ----------------------------------------------------------------------------
def _bn_stats_kernel(x_ref, sum_ref, sumsq_ref):
    x = x_ref[...].astype(jnp.float32)                      # (1, H, W, C)
    sum_ref[...] = jnp.sum(x, axis=(0, 1, 2)).reshape(1, 1, -1)
    sumsq_ref[...] = jnp.sum(x * x, axis=(0, 1, 2)).reshape(1, 1, -1)


def bn_stats(x_nhwc):
    N, H, W, C = x_nhwc.shape
    return pl.pallas_call(
        _bn_stats_kernel,
        out_shape=(
            jax.ShapeDtypeStruct((N, 1, C), jnp.float32),
            jax.ShapeDtypeStruct((N, 1, C), jnp.float32),
        ),
        grid=(N,),
        in_specs=[pl.BlockSpec((1, H, W, C), lambda n: (n, 0, 0, 0))],
        out_specs=(
            pl.BlockSpec((1, 1, C), lambda n: (n, 0, 0)),
            pl.BlockSpec((1, 1, C), lambda n: (n, 0, 0)),
        ),
        compiler_params=pltpu.CompilerParams(dimension_semantics=("parallel",)),
    )(x_nhwc)


# ----------------------------------------------------------------------------
# Kernel 2 (fused): BN1 affine + ReLU  ->  zero-padded VMEM scratch  ->
# 3x3 conv as 9 shifted (H*W, Cin) @ (Cin, Cout) bf16 MXU matmuls with f32
# accumulation  ->  + bias  ->  conv output (bf16) + per-image BN2 sum/sumsq.
# ----------------------------------------------------------------------------
def _conv_bn_fused_kernel(x_ref, scale_ref, shift_ref, w_ref, b_ref,
                          y_ref, s2_ref, q2_ref, xp_ref, acc_ref):
    # x_ref:   (1, H, W, Cin) f32   raw input tile (one image)
    # scale/shift: (1, Cin) f32     BN1 batch-stats affine (folded)
    # w_ref:   (3, 3, Cin, Cout) bf16
    # b_ref:   (1, Cout) f32
    # y_ref:   (1, H, W, Cout) bf16 conv output (HBM intermediate)
    # s2/q2:   (1, 1, Cout) f32     per-image partial BN2 statistics
    # xp_ref:  (H+2, W+2, Cin) f32  padded post-BN1-ReLU activation (VMEM)
    # acc_ref: (H*W, Cout) f32      matmul accumulator (VMEM)
    _, H, W, Cout = y_ref.shape
    Cin = x_ref.shape[3]

    # Fused BN1 affine + ReLU, written into the interior of the zeroed padded
    # scratch (border stays 0 == correct zero padding of the ReLU output).
    x = x_ref[0].astype(jnp.float32)                        # (H, W, Cin)
    a = jnp.maximum(
        x * scale_ref[...].reshape(1, 1, Cin) + shift_ref[...].reshape(1, 1, Cin),
        0.0)
    xp_ref[...] = jnp.zeros_like(xp_ref)
    xp_ref[1:H + 1, 1:W + 1, :] = a

    # 9-tap conv: bf16 operands, f32 accumulation in VMEM scratch.
    acc_ref[...] = jnp.zeros_like(acc_ref)
    for dh in range(3):
        for dw in range(3):
            patch = xp_ref[dh:dh + H, dw:dw + W, :].reshape(H * W, Cin)
            acc_ref[...] += jnp.dot(
                patch.astype(jnp.bfloat16), w_ref[dh, dw, :, :],
                preferred_element_type=jnp.float32)

    acc = acc_ref[...] + b_ref[...]                         # (H*W, Cout)

    # Fused BN2 partial statistics (from the f32 accumulator, full precision).
    s2_ref[...] = jnp.sum(acc, axis=0).reshape(1, 1, Cout)
    q2_ref[...] = jnp.sum(acc * acc, axis=0).reshape(1, 1, Cout)

    y_ref[...] = acc.reshape(1, H, W, Cout).astype(y_ref.dtype)


def conv_bn1_relu_bn2stats(x_nhwc, scale1, shift1, w_bf16, bias):
    N, H, W, Cin = x_nhwc.shape
    Cout = w_bf16.shape[3]
    return pl.pallas_call(
        _conv_bn_fused_kernel,
        out_shape=(
            jax.ShapeDtypeStruct((N, H, W, Cout), jnp.bfloat16),
            jax.ShapeDtypeStruct((N, 1, Cout), jnp.float32),
            jax.ShapeDtypeStruct((N, 1, Cout), jnp.float32),
        ),
        grid=(N,),
        in_specs=[
            pl.BlockSpec((1, H, W, Cin), lambda n: (n, 0, 0, 0)),
            pl.BlockSpec((1, Cin), lambda n: (0, 0)),
            pl.BlockSpec((1, Cin), lambda n: (0, 0)),
            pl.BlockSpec((3, 3, Cin, Cout), lambda n: (0, 0, 0, 0)),
            pl.BlockSpec((1, Cout), lambda n: (0, 0)),
        ],
        out_specs=(
            pl.BlockSpec((1, H, W, Cout), lambda n: (n, 0, 0, 0)),
            pl.BlockSpec((1, 1, Cout), lambda n: (n, 0, 0)),
            pl.BlockSpec((1, 1, Cout), lambda n: (n, 0, 0)),
        ),
        scratch_shapes=[
            pltpu.VMEM((H + 2, W + 2, Cin), jnp.float32),
            pltpu.VMEM((H * W, Cout), jnp.float32),
        ],
        compiler_params=pltpu.CompilerParams(
            dimension_semantics=("parallel",),
            vmem_limit_bytes=32 * 1024 * 1024,
        ),
    )(x_nhwc, scale1, shift1, w_bf16, bias.reshape(1, Cout))


# ----------------------------------------------------------------------------
# Kernel 3: BN2 affine applied to the bf16 conv output (pure memory pass).
# ----------------------------------------------------------------------------
def _bn2_apply_kernel(y_ref, scale_ref, shift_ref, o_ref):
    y = y_ref[...].astype(jnp.float32)                      # (1, H, W, C)
    scale = scale_ref[...].reshape(1, 1, 1, -1)
    shift = shift_ref[...].reshape(1, 1, 1, -1)
    o_ref[...] = (y * scale + shift).astype(o_ref.dtype)


def bn2_apply(y_nhwc, scale, shift):
    N, H, W, C = y_nhwc.shape
    return pl.pallas_call(
        _bn2_apply_kernel,
        out_shape=jax.ShapeDtypeStruct((N, H, W, C), jnp.float32),
        grid=(N,),
        in_specs=[
            pl.BlockSpec((1, H, W, C), lambda n: (n, 0, 0, 0)),
            pl.BlockSpec((1, C), lambda n: (0, 0)),
            pl.BlockSpec((1, C), lambda n: (0, 0)),
        ],
        out_specs=pl.BlockSpec((1, H, W, C), lambda n: (n, 0, 0, 0)),
        compiler_params=pltpu.CompilerParams(dimension_semantics=("parallel",)),
    )(y_nhwc, scale, shift)


# ----------------------------------------------------------------------------
# Glue: batch-norm scale/shift from (sum, sumsq) stats.
# ----------------------------------------------------------------------------
def _bn_scale_shift(s, ssq, count, gamma, beta):
    mean = s / count
    var = ssq / count - mean * mean            # biased variance (PyTorch BN fwd)
    scale = gamma.reshape(1, -1) * jax.lax.rsqrt(var + EPS)
    shift = beta.reshape(1, -1) - mean * scale
    return scale, shift


@jax.jit
def model_forward(x_nchw, params):
    # NCHW -> NHWC
    x = jnp.transpose(x_nchw, (0, 2, 3, 1)).astype(jnp.float32)
    N, H, W, C = x.shape
    count = float(N * H * W)

    # Pass 1: BN1 statistics.
    s1, q1 = bn_stats(x)
    s1 = jnp.sum(s1, axis=0)                   # (1, C)
    q1 = jnp.sum(q1, axis=0)
    scale1, shift1 = _bn_scale_shift(s1, q1, count, params["g1"], params["b1"])

    # Pass 2: fused BN1-apply + ReLU + conv3x3 + bias + BN2 statistics.
    w_bf16 = params["w"].astype(jnp.bfloat16)
    y, s2, q2 = conv_bn1_relu_bn2stats(x, scale1, shift1, w_bf16, params["cb"])
    s2 = jnp.sum(s2, axis=0)                   # (1, Cout)
    q2 = jnp.sum(q2, axis=0)
    scale2, shift2 = _bn_scale_shift(s2, q2, count, params["g2"], params["b2"])

    # Pass 3: BN2 apply.
    out = bn2_apply(y, scale2, shift2)

    # NHWC -> NCHW
    return jnp.transpose(out, (0, 3, 1, 2))


# ----------------------------------------------------------------------------
# Pure-JAX f32 reference for verification.
# ----------------------------------------------------------------------------
def reference_forward(x_nchw, params):
    x = x_nchw.astype(jnp.float32)

    def bn(v, gamma, beta):
        mean = jnp.mean(v, axis=(0, 2, 3), keepdims=True)
        var = jnp.var(v, axis=(0, 2, 3), keepdims=True)
        g = gamma.reshape(1, -1, 1, 1)
        b = beta.reshape(1, -1, 1, 1)
        return (v - mean) * jax.lax.rsqrt(var + EPS) * g + b

    x = jnp.maximum(bn(x, params["g1"], params["b1"]), 0.0)
    w_oihw = jnp.transpose(params["w"], (3, 2, 0, 1))          # HWIO -> OIHW
    y = jax.lax.conv_general_dilated(
        x, w_oihw, window_strides=(1, 1), padding=((1, 1), (1, 1)),
        dimension_numbers=("NCHW", "OIHW", "NCHW"),
    ) + params["cb"].reshape(1, -1, 1, 1)
    return bn(y, params["g2"], params["b2"])


if __name__ == "__main__":
    # Small shapes consistent with the module: channels fixed at 256 by the
    # conv / BN layers; batch and spatial kept small for the test.
    N, C, H, W = 2, 256, 8, 8

    key = jax.random.PRNGKey(0)
    k_x, k_g1, k_b1, k_w, k_cb, k_g2, k_b2 = jax.random.split(key, 7)

    x = jax.random.normal(k_x, (N, C, H, W), dtype=jnp.float32)

    params = {
        "g1": 1.0 + 0.1 * jax.random.normal(k_g1, (C,), jnp.float32),
        "b1": 0.1 * jax.random.normal(k_b1, (C,), jnp.float32),
        # conv weight in HWIO layout (3, 3, Cin, Cout); kaiming-ish scale
        "w": 0.03 * jax.random.normal(k_w, (3, 3, C, C), jnp.float32),
        "cb": 0.05 * jax.random.normal(k_cb, (C,), jnp.float32),
        "g2": 1.0 + 0.1 * jax.random.normal(k_g2, (C,), jnp.float32),
        "b2": 0.1 * jax.random.normal(k_b2, (C,), jnp.float32),
    }

    out = jax.block_until_ready(model_forward(x, params))
    ref = jax.block_until_ready(reference_forward(x, params))

    assert out.shape == (N, C, H, W), out.shape
    max_err = float(jnp.max(jnp.abs(out - ref)))
    # bf16 matmul operands + bf16 conv-output intermediate vs. f32 reference:
    # tolerance loosened accordingly (outputs are ~unit scale after BN2).
    if max_err > 3e-2:
        raise AssertionError(f"mismatch vs reference: max abs err {max_err}")

    print("KERNEL_OK")
</pallas_src>

<mosaic_0001>
module attributes {stable_mosaic.version = 11 : i64} {
  func.func @_bn_stats_kernel(%arg0: i32, %arg1: memref<1x8x8x256xf32, #tpu.memory_space<vmem>>, %arg2: memref<1x1x256xf32, #tpu.memory_space<vmem>>, %arg3: memref<1x1x256xf32, #tpu.memory_space<vmem>>) attributes {dimension_semantics = [#tpu.dimension_semantics<parallel>], iteration_bounds = array<i64: 2>, scalar_prefetch = 0 : i64, scratch_operands = 0 : i64, tpu.core_type = #tpu.core_type<tc>, window_params = [{transform_indices = @transform_0, window_bounds = array<i64: 1, 8, 8, 256>}, {transform_indices = @transform_1, window_bounds = array<i64: 1, 1, 256>}, {transform_indices = @transform_2, window_bounds = array<i64: 1, 1, 256>}]} {
    %c0 = arith.constant 0 : index
    %c0_0 = arith.constant 0 : index
    %c0_1 = arith.constant 0 : index
    %c0_2 = arith.constant 0 : index
    %0 = vector.load %arg1[%c0, %c0_0, %c0_1, %c0_2] : memref<1x8x8x256xf32, #tpu.memory_space<vmem>>, vector<1x8x8x256xf32>
    %cst = arith.constant dense<0.000000e+00> : vector<256xf32>
    %1 = vector.multi_reduction <add>, %0, %cst [0, 1, 2] : vector<1x8x8x256xf32> to vector<256xf32>
    %2 = vector.shape_cast %1 : vector<256xf32> to vector<1x1x256xf32>
    %c0_3 = arith.constant 0 : index
    %c0_4 = arith.constant 0 : index
    %c0_5 = arith.constant 0 : index
    %3 = vector.load %arg2[%c0_3, %c0_4, %c0_5] : memref<1x1x256xf32, #tpu.memory_space<vmem>>, vector<1x1x256xf32>
    tpu.vector_store %arg2[%c0_3, %c0_4, %c0_5], %2 {strides = array<i32>} : memref<1x1x256xf32, #tpu.memory_space<vmem>>, vector<1x1x256xf32>,
    %4 = arith.mulf %0, %0 : vector<1x8x8x256xf32>
    %cst_6 = arith.constant dense<0.000000e+00> : vector<256xf32>
    %5 = vector.multi_reduction <add>, %4, %cst_6 [0, 1, 2] : vector<1x8x8x256xf32> to vector<256xf32>
    %6 = vector.shape_cast %5 : vector<256xf32> to vector<1x1x256xf32>
    %c0_7 = arith.constant 0 : index
    %c0_8 = arith.constant 0 : index
    %c0_9 = arith.constant 0 : index
    %7 = vector.load %arg3[%c0_7, %c0_8, %c0_9] : memref<1x1x256xf32, #tpu.memory_space<vmem>>, vector<1x1x256xf32>
    tpu.vector_store %arg3[%c0_7, %c0_8, %c0_9], %6 {strides = array<i32>} : memref<1x1x256xf32, #tpu.memory_space<vmem>>, vector<1x1x256xf32>,
    return
  }
  func.func @transform_0(%arg0: i32) -> (i32, i32, i32, i32) {
    %c0_i32 = arith.constant 0 : i32
    %c0_i32_0 = arith.constant 0 : i32
    %c0_i32_1 = arith.constant 0 : i32
    %c0_i32_2 = arith.constant 0 : i32
    return %arg0, %c0_i32, %c0_i32_0, %c0_i32_1 : i32, i32, i32, i32
  }
  func.func @transform_1(%arg0: i32) -> (i32, i32, i32) {
    %c0_i32 = arith.constant 0 : i32
    %c0_i32_0 = arith.constant 0 : i32
    %c0_i32_1 = arith.constant 0 : i32
    return %arg0, %c0_i32, %c0_i32_0 : i32, i32, i32
  }
  func.func @transform_2(%arg0: i32) -> (i32, i32, i32) {
    %c0_i32 = arith.constant 0 : i32
    %c0_i32_0 = arith.constant 0 : i32
    %c0_i32_1 = arith.constant 0 : i32
    return %arg0, %c0_i32, %c0_i32_0 : i32, i32, i32
  }
}

module attributes {stable_mosaic.version = 11 : i64} {
  func.func @_bn2_apply_kernel(%arg0: i32, %arg1: memref<1x8x8x256xbf16, #tpu.memory_space<vmem>>, %arg2: memref<1x256xf32, #tpu.memory_space<vmem>>, %arg3: memref<1x256xf32, #tpu.memory_space<vmem>>, %arg4: memref<1x8x8x256xf32, #tpu.memory_space<vmem>>) attributes {dimension_semantics = [#tpu.dimension_semantics<parallel>], iteration_bounds = array<i64: 2>, scalar_prefetch = 0 : i64, scratch_operands = 0 : i64, tpu.core_type = #tpu.core_type<tc>, window_params = [{transform_indices = @transform_0, window_bounds = array<i64: 1, 8, 8, 256>}, {pipeline_mode = #tpu.pipeline_mode<synchronous>, transform_indices = @transform_1, window_bounds = array<i64: 1, 256>}, {pipeline_mode = #tpu.pipeline_mode<synchronous>, transform_indices = @transform_2, window_bounds = array<i64: 1, 256>}, {transform_indices = @transform_3, window_bounds = array<i64: 1, 8, 8, 256>}]} {
    %c0 = arith.constant 0 : index
    %c0_0 = arith.constant 0 : index
    %c0_1 = arith.constant 0 : index
    %c0_2 = arith.constant 0 : index
    %0 = vector.load %arg1[%c0, %c0_0, %c0_1, %c0_2] : memref<1x8x8x256xbf16, #tpu.memory_space<vmem>>, vector<1x8x8x256xbf16>
    %1 = arith.extf %0 : vector<1x8x8x256xbf16> to vector<1x8x8x256xf32>
    %c0_3 = arith.constant 0 : index
    %c0_4 = arith.constant 0 : index
    %2 = vector.load %arg2[%c0_3, %c0_4] : memref<1x256xf32, #tpu.memory_space<vmem>>, vector<1x256xf32>
    %3 = vector.shape_cast %2 : vector<1x256xf32> to vector<1x1x1x256xf32>
    %c0_5 = arith.constant 0 : index
    %c0_6 = arith.constant 0 : index
    %4 = vector.load %arg3[%c0_5, %c0_6] : memref<1x256xf32, #tpu.memory_space<vmem>>, vector<1x256xf32>
    %5 = vector.shape_cast %4 : vector<1x256xf32> to vector<1x1x1x256xf32>
    %6 = vector.broadcast %3 : vector<1x1x1x256xf32> to vector<1x8x8x256xf32>
    %7 = arith.mulf %1, %6 : vector<1x8x8x256xf32>
    %8 = vector.broadcast %5 : vector<1x1x1x256xf32> to vector<1x8x8x256xf32>
    %9 = arith.addf %7, %8 : vector<1x8x8x256xf32>
    %c0_7 = arith.constant 0 : index
    %c0_8 = arith.constant 0 : index
    %c0_9 = arith.constant 0 : index
    %c0_10 = arith.constant 0 : index
    %10 = vector.load %arg4[%c0_7, %c0_8, %c0_9, %c0_10] : memref<1x8x8x256xf32, #tpu.memory_space<vmem>>, vector<1x8x8x256xf32>
    tpu.vector_store %arg4[%c0_7, %c0_8, %c0_9, %c0_10], %9 {strides = array<i32>} : memref<1x8x8x256xf32, #tpu.memory_space<vmem>>, vector<1x8x8x256xf32>,
    return
  }
  func.func @transform_0(%arg0: i32) -> (i32, i32, i32, i32) {
    %c0_i32 = arith.constant 0 : i32
    %c0_i32_0 = arith.constant 0 : i32
    %c0_i32_1 = arith.constant 0 : i32
    %c0_i32_2 = arith.constant 0 : i32
    return %arg0, %c0_i32, %c0_i32_0, %c0_i32_1 : i32, i32, i32, i32
  }
  func.func @transform_1(%arg0: i32) -> (i32, i32) {
    %c0_i32 = arith.constant 0 : i32
    %c0_i32_0 = arith.constant 0 : i32
    %c0_i32_1 = arith.constant 0 : i32
    return %c0_i32, %c0_i32_0 : i32, i32
  }
  func.func @transform_2(%arg0: i32) -> (i32, i32) {
    %c0_i32 = arith.constant 0 : i32
    %c0_i32_0 = arith.constant 0 : i32
    %c0_i32_1 = arith.constant 0 : i32
    return %c0_i32, %c0_i32_0 : i32, i32
  }
  func.func @transform_3(%arg0: i32) -> (i32, i32, i32, i32) {
    %c0_i32 = arith.constant 0 : i32
    %c0_i32_0 = arith.constant 0 : i32
    %c0_i32_1 = arith.constant 0 : i32
    %c0_i32_2 = arith.constant 0 : i32
    return %arg0, %c0_i32, %c0_i32_0, %c0_i32_1 : i32, i32, i32, i32
  }
}

module attributes {stable_mosaic.version = 11 : i64} {
  func.func @_conv_bn_fused_kernel(%arg0: i32, %arg1: memref<1x8x8x256xf32, #tpu.memory_space<vmem>>, %arg2: memref<1x256xf32, #tpu.memory_space<vmem>>, %arg3: memref<1x256xf32, #tpu.memory_space<vmem>>, %arg4: memref<3x3x256x256xbf16, #tpu.memory_space<vmem>>, %arg5: memref<1x256xf32, #tpu.memory_space<vmem>>, %arg6: memref<1x8x8x256xbf16, #tpu.memory_space<vmem>>, %arg7: memref<1x1x256xf32, #tpu.memory_space<vmem>>, %arg8: memref<1x1x256xf32, #tpu.memory_space<vmem>>, %arg9: memref<10x10x256xf32, #tpu.memory_space<vmem>>, %arg10: memref<64x256xf32, #tpu.memory_space<vmem>>) attributes {dimension_semantics = [#tpu.dimension_semantics<parallel>], iteration_bounds = array<i64: 2>, scalar_prefetch = 0 : i64, scratch_operands = 2 : i64, tpu.core_type = #tpu.core_type<tc>, window_params = [{transform_indices = @transform_0, window_bounds = array<i64: 1, 8, 8, 256>}, {pipeline_mode = #tpu.pipeline_mode<synchronous>, transform_indices = @transform_1, window_bounds = array<i64: 1, 256>}, {pipeline_mode = #tpu.pipeline_mode<synchronous>, transform_indices = @transform_2, window_bounds = array<i64: 1, 256>}, {pipeline_mode = #tpu.pipeline_mode<synchronous>, transform_indices = @transform_3, window_bounds = array<i64: 3, 3, 256, 256>}, {pipeline_mode = #tpu.pipeline_mode<synchronous>, transform_indices = @transform_4, window_bounds = array<i64: 1, 256>}, {transform_indices = @transform_5, window_bounds = array<i64: 1, 8, 8, 256>}, {transform_indices = @transform_6, window_bounds = array<i64: 1, 1, 256>}, {transform_indices = @transform_7, window_bounds = array<i64: 1, 1, 256>}]} {
    %c0 = arith.constant 0 : index
    %c0_0 = arith.constant 0 : index
    %c0_1 = arith.constant 0 : index
    %c0_2 = arith.constant 0 : index
    %0 = vector.load %arg1[%c0, %c0_0, %c0_1, %c0_2] : memref<1x8x8x256xf32, #tpu.memory_space<vmem>>, vector<1x8x8x256xf32>
    %1 = vector.shape_cast %0 : vector<1x8x8x256xf32> to vector<8x8x256xf32>
    %c0_3 = arith.constant 0 : index
    %c0_4 = arith.constant 0 : index
    %2 = vector.load %arg2[%c0_3, %c0_4] : memref<1x256xf32, #tpu.memory_space<vmem>>, vector<1x256xf32>
    %3 = vector.shape_cast %2 : vector<1x256xf32> to vector<1x1x256xf32>
    %4 = vector.broadcast %3 : vector<1x1x256xf32> to vector<8x8x256xf32>
    %5 = arith.mulf %1, %4 : vector<8x8x256xf32>
    %c0_5 = arith.constant 0 : index
    %c0_6 = arith.constant 0 : index
    %6 = vector.load %arg3[%c0_5, %c0_6] : memref<1x256xf32, #tpu.memory_space<vmem>>, vector<1x256xf32>
    %7 = vector.shape_cast %6 : vector<1x256xf32> to vector<1x1x256xf32>
    %8 = vector.broadcast %7 : vector<1x1x256xf32> to vector<8x8x256xf32>
    %9 = arith.addf %5, %8 : vector<8x8x256xf32>
    %cst = arith.constant 0.000000e+00 : f32
    %10 = vector.broadcast %cst : f32 to vector<8x8x256xf32>
    %11 = arith.maximumf %9, %10 : vector<8x8x256xf32>
    %cst_7 = arith.constant 0.000000e+00 : f32
    %12 = vector.broadcast %cst_7 : f32 to vector<10x10x256xf32>
    %c0_8 = arith.constant 0 : index
    %c0_9 = arith.constant 0 : index
    %c0_10 = arith.constant 0 : index
    %13 = vector.load %arg9[%c0_8, %c0_9, %c0_10] : memref<10x10x256xf32, #tpu.memory_space<vmem>>, vector<10x10x256xf32>
    tpu.vector_store %arg9[%c0_8, %c0_9, %c0_10], %12 {strides = array<i32>} : memref<10x10x256xf32, #tpu.memory_space<vmem>>, vector<10x10x256xf32>,
    %c1 = arith.constant 1 : index
    %c1_11 = arith.constant 1 : index
    %c0_12 = arith.constant 0 : index
    %14 = vector.load %arg9[%c1, %c1_11, %c0_12] : memref<10x10x256xf32, #tpu.memory_space<vmem>>, vector<8x8x256xf32>
    tpu.vector_store %arg9[%c1, %c1_11, %c0_12], %11 {strides = array<i32>} : memref<10x10x256xf32, #tpu.memory_space<vmem>>, vector<8x8x256xf32>,
    %cst_13 = arith.constant 0.000000e+00 : f32
    %15 = vector.broadcast %cst_13 : f32 to vector<64x256xf32>
    %c0_14 = arith.constant 0 : index
    %c0_15 = arith.constant 0 : index
    %16 = vector.load %arg10[%c0_14, %c0_15] : memref<64x256xf32, #tpu.memory_space<vmem>>, vector<64x256xf32>
    tpu.vector_store %arg10[%c0_14, %c0_15], %15 {strides = array<i32>} : memref<64x256xf32, #tpu.memory_space<vmem>>, vector<64x256xf32>,
    %c0_16 = arith.constant 0 : index
    %c0_17 = arith.constant 0 : index
    %c0_18 = arith.constant 0 : index
    %17 = vector.load %arg9[%c0_16, %c0_17, %c0_18] : memref<10x10x256xf32, #tpu.memory_space<vmem>>, vector<8x8x256xf32>
    %18 = vector.shape_cast %17 : vector<8x8x256xf32> to vector<64x256xf32>
    %c0_19 = arith.constant 0 : index
    %c0_20 = arith.constant 0 : index
    %19 = vector.load %arg10[%c0_19, %c0_20] : memref<64x256xf32, #tpu.memory_space<vmem>>, vector<64x256xf32>
    %20 = arith.truncf %18 : vector<64x256xf32> to vector<64x256xbf16>
    %c0_21 = arith.constant 0 : index
    %c0_22 = arith.constant 0 : index
    %c0_23 = arith.constant 0 : index
    %c0_24 = arith.constant 0 : index
    %21 = vector.load %arg4[%c0_21, %c0_22, %c0_23, %c0_24] : memref<3x3x256x256xbf16, #tpu.memory_space<vmem>>, vector<1x1x256x256xbf16>
    %22 = vector.shape_cast %21 : vector<1x1x256x256xbf16> to vector<256x256xbf16>
    %cst_25 = arith.constant dense<0.000000e+00> : vector<64x256xf32>
    %23 = tpu.matmul %20, %22, %cst_25 {dimension_numbers = #tpu.dot_dimension_numbers<[1], [0], [0], [1], [0, 0, 1, 1], [], []>} : vector<64x256xbf16>, vector<256x256xbf16>, vector<64x256xf32> -> vector<64x256xf32>
    %24 = arith.addf %19, %23 : vector<64x256xf32>
    %c0_26 = arith.constant 0 : index
    %c0_27 = arith.constant 0 : index
    %25 = vector.load %arg10[%c0_26, %c0_27] : memref<64x256xf32, #tpu.memory_space<vmem>>, vector<64x256xf32>
    tpu.vector_store %arg10[%c0_26, %c0_27], %24 {strides = array<i32>} : memref<64x256xf32, #tpu.memory_space<vmem>>, vector<64x256xf32>,
    %c0_28 = arith.constant 0 : index
    %c1_29 = arith.constant 1 : index
    %c0_30 = arith.constant 0 : index
    %26 = vector.load %arg9[%c0_28, %c1_29, %c0_30] : memref<10x10x256xf32, #tpu.memory_space<vmem>>, vector<8x8x256xf32>
    %27 = vector.shape_cast %26 : vector<8x8x256xf32> to vector<64x256xf32>
    %c0_31 = arith.constant 0 : index
    %c0_32 = arith.constant 0 : index
    %28 = vector.load %arg10[%c0_31, %c0_32] : memref<64x256xf32, #tpu.memory_space<vmem>>, vector<64x256xf32>
    %29 = arith.truncf %27 : vector<64x256xf32> to vector<64x256xbf16>
    %c0_33 = arith.constant 0 : index
    %c1_34 = arith.constant 1 : index
    %c0_35 = arith.constant 0 : index
    %c0_36 = arith.constant 0 : index
    %30 = vector.load %arg4[%c0_33, %c1_34, %c0_35, %c0_36] : memref<3x3x256x256xbf16, #tpu.memory_space<vmem>>, vector<1x1x256x256xbf16>
    %31 = vector.shape_cast %30 : vector<1x1x256x256xbf16> to vector<256x256xbf16>
    %cst_37 = arith.constant dense<0.000000e+00> : vector<64x256xf32>
    %32 = tpu.matmul %29, %31, %cst_37 {dimension_numbers = #tpu.dot_dimension_numbers<[1], [0], [0], [1], [0, 0, 1, 1], [], []>} : vector<64x256xbf16>, vector<256x256xbf16>, vector<64x256xf32> -> vector<64x256xf32>
    %33 = arith.addf %28, %32 : vector<64x256xf32>
    %c0_38 = arith.constant 0 : index
    %c0_39 = arith.constant 0 : index
    %34 = vector.load %arg10[%c0_38, %c0_39] : memref<64x256xf32, #tpu.memory_space<vmem>>, vector<64x256xf32>
    tpu.vector_store %arg10[%c0_38, %c0_39], %33 {strides = array<i32>} : memref<64x256xf32, #tpu.memory_space<vmem>>, vector<64x256xf32>,
    %c0_40 = arith.constant 0 : index
    %c2 = arith.constant 2 : index
    %c0_41 = arith.constant 0 : index
    %35 = vector.load %arg9[%c0_40, %c2, %c0_41] : memref<10x10x256xf32, #tpu.memory_space<vmem>>, vector<8x8x256xf32>
    %36 = vector.shape_cast %35 : vector<8x8x256xf32> to vector<64x256xf32>
    %c0_42 = arith.constant 0 : index
    %c0_43 = arith.constant 0 : index
    %37 = vector.load %arg10[%c0_42, %c0_43] : memref<64x256xf32, #tpu.memory_space<vmem>>, vector<64x256xf32>
    %38 = arith.truncf %36 : vector<64x256xf32> to vector<64x256xbf16>
    %c0_44 = arith.constant 0 : index
    %c2_45 = arith.constant 2 : index
    %c0_46 = arith.constant 0 : index
    %c0_47 = arith.constant 0 : index
    %39 = vector.load %arg4[%c0_44, %c2_45, %c0_46, %c0_47] : memref<3x3x256x256xbf16, #tpu.memory_space<vmem>>, vector<1x1x256x256xbf16>
    %40 = vector.shape_cast %39 : vector<1x1x256x256xbf16> to vector<256x256xbf16>
    %cst_48 = arith.constant dense<0.000000e+00> : vector<64x256xf32>
    %41 = tpu.matmul %38, %40, %cst_48 {dimension_numbers = #tpu.dot_dimension_numbers<[1], [0], [0], [1], [0, 0, 1, 1], [], []>} : vector<64x256xbf16>, vector<256x256xbf16>, vector<64x256xf32> -> vector<64x256xf32>
    %42 = arith.addf %37, %41 : vector<64x256xf32>
    %c0_49 = arith.constant 0 : index
    %c0_50 = arith.constant 0 : index
    %43 = vector.load %arg10[%c0_49, %c0_50] : memref<64x256xf32, #tpu.memory_space<vmem>>, vector<64x256xf32>
    tpu.vector_store %arg10[%c0_49, %c0_50], %42 {strides = array<i32>} : memref<64x256xf32, #tpu.memory_space<vmem>>, vector<64x256xf32>,
    %c1_51 = arith.constant 1 : index
    %c0_52 = arith.constant 0 : index
    %c0_53 = arith.constant 0 : index
    %44 = vector.load %arg9[%c1_51, %c0_52, %c0_53] : memref<10x10x256xf32, #tpu.memory_space<vmem>>, vector<8x8x256xf32>
    %45 = vector.shape_cast %44 : vector<8x8x256xf32> to vector<64x256xf32>
    %c0_54 = arith.constant 0 : index
    %c0_55 = arith.constant 0 : index
    %46 = vector.load %arg10[%c0_54, %c0_55] : memref<64x256xf32, #tpu.memory_space<vmem>>, vector<64x256xf32>
    %47 = arith.truncf %45 : vector<64x256xf32> to vector<64x256xbf16>
    %c1_56 = arith.constant 1 : index
    %c0_57 = arith.constant 0 : index
    %c0_58 = arith.constant 0 : index
    %c0_59 = arith.constant 0 : index
    %48 = vector.load %arg4[%c1_56, %c0_57, %c0_58, %c0_59] : memref<3x3x256x256xbf16, #tpu.memory_space<vmem>>, vector<1x1x256x256xbf16>
    %49 = vector.shape_cast %48 : vector<1x1x256x256xbf16> to vector<256x256xbf16>
    %cst_60 = arith.constant dense<0.000000e+00> : vector<64x256xf32>
    %50 = tpu.matmul %47, %49, %cst_60 {dimension_numbers = #tpu.dot_dimension_numbers<[1], [0], [0], [1], [0, 0, 1, 1], [], []>} : vector<64x256xbf16>, vector<256x256xbf16>, vector<64x256xf32> -> vector<64x256xf32>
    %51 = arith.addf %46, %50 : vector<64x256xf32>
    %c0_61 = arith.constant 0 : index
    %c0_62 = arith.constant 0 : index
    %52 = vector.load %arg10[%c0_61, %c0_62] : memref<64x256xf32, #tpu.memory_space<vmem>>, vector<64x256xf32>
    tpu.vector_store %arg10[%c0_61, %c0_62], %51 {strides = array<i32>} : memref<64x256xf32, #tpu.memory_space<vmem>>, vector<64x256xf32>,
    %c1_63 = arith.constant 1 : index
    %c1_64 = arith.constant 1 : index
    %c0_65 = arith.constant 0 : index
    %53 = vector.load %arg9[%c1_63, %c1_64, %c0_65] : memref<10x10x256xf32, #tpu.memory_space<vmem>>, vector<8x8x256xf32>
    %54 = vector.shape_cast %53 : vector<8x8x256xf32> to vector<64x256xf32>
    %c0_66 = arith.constant 0 : index
    %c0_67 = arith.constant 0 : index
    %55 = vector.load %arg10[%c0_66, %c0_67] : memref<64x256xf32, #tpu.memory_space<vmem>>, vector<64x256xf32>
    %56 = arith.truncf %54 : vector<64x256xf32> to vector<64x256xbf16>
    %c1_68 = arith.constant 1 : index
    %c1_69 = arith.constant 1 : index
    %c0_70 = arith.constant 0 : index
    %c0_71 = arith.constant 0 : index
    %57 = vector.load %arg4[%c1_68, %c1_69, %c0_70, %c0_71] : memref<3x3x256x256xbf16, #tpu.memory_space<vmem>>, vector<1x1x256x256xbf16>
    %58 = vector.shape_cast %57 : vector<1x1x256x256xbf16> to vector<256x256xbf16>
    %cst_72 = arith.constant dense<0.000000e+00> : vector<64x256xf32>
    %59 = tpu.matmul %56, %58, %cst_72 {dimension_numbers = #tpu.dot_dimension_numbers<[1], [0], [0], [1], [0, 0, 1, 1], [], []>} : vector<64x256xbf16>, vector<256x256xbf16>, vector<64x256xf32> -> vector<64x256xf32>
    %60 = arith.addf %55, %59 : vector<64x256xf32>
    %c0_73 = arith.constant 0 : index
    %c0_74 = arith.constant 0 : index
    %61 = vector.load %arg10[%c0_73, %c0_74] : memref<64x256xf32, #tpu.memory_space<vmem>>, vector<64x256xf32>
    tpu.vector_store %arg10[%c0_73, %c0_74], %60 {strides = array<i32>} : memref<64x256xf32, #tpu.memory_space<vmem>>, vector<64x256xf32>,
    %c1_75 = arith.constant 1 : index
    %c2_76 = arith.constant 2 : index
    %c0_77 = arith.constant 0 : index
    %62 = vector.load %arg9[%c1_75, %c2_76, %c0_77] : memref<10x10x256xf32, #tpu.memory_space<vmem>>, vector<8x8x256xf32>
    %63 = vector.shape_cast %62 : vector<8x8x256xf32> to vector<64x256xf32>
    %c0_78 = arith.constant 0 : index
    %c0_79 = arith.constant 0 : index
    %64 = vector.load %arg10[%c0_78, %c0_79] : memref<64x256xf32, #tpu.memory_space<vmem>>, vector<64x256xf32>
    %65 = arith.truncf %63 : vector<64x256xf32> to vector<64x256xbf16>
    %c1_80 = arith.constant 1 : index
    %c2_81 = arith.constant 2 : index
    %c0_82 = arith.constant 0 : index
    %c0_83 = arith.constant 0 : index
    %66 = vector.load %arg4[%c1_80, %c2_81, %c0_82, %c0_83] : memref<3x3x256x256xbf16, #tpu.memory_space<vmem>>, vector<1x1x256x256xbf16>
    %67 = vector.shape_cast %66 : vector<1x1x256x256xbf16> to vector<256x256xbf16>
    %cst_84 = arith.constant dense<0.000000e+00> : vector<64x256xf32>
    %68 = tpu.matmul %65, %67, %cst_84 {dimension_numbers = #tpu.dot_dimension_numbers<[1], [0], [0], [1], [0, 0, 1, 1], [], []>} : vector<64x256xbf16>, vector<256x256xbf16>, vector<64x256xf32> -> vector<64x256xf32>
    %69 = arith.addf %64, %68 : vector<64x256xf32>
    %c0_85 = arith.constant 0 : index
    %c0_86 = arith.constant 0 : index
    %70 = vector.load %arg10[%c0_85, %c0_86] : memref<64x256xf32, #tpu.memory_space<vmem>>, vector<64x256xf32>
    tpu.vector_store %arg10[%c0_85, %c0_86], %69 {strides = array<i32>} : memref<64x256xf32, #tpu.memory_space<vmem>>, vector<64x256xf32>,
    %c2_87 = arith.constant 2 : index
    %c0_88 = arith.constant 0 : index
    %c0_89 = arith.constant 0 : index
    %71 = vector.load %arg9[%c2_87, %c0_88, %c0_89] : memref<10x10x256xf32, #tpu.memory_space<vmem>>, vector<8x8x256xf32>
    %72 = vector.shape_cast %71 : vector<8x8x256xf32> to vector<64x256xf32>
    %c0_90 = arith.constant 0 : index
    %c0_91 = arith.constant 0 : index
    %73 = vector.load %arg10[%c0_90, %c0_91] : memref<64x256xf32, #tpu.memory_space<vmem>>, vector<64x256xf32>
    %74 = arith.truncf %72 : vector<64x256xf32> to vector<64x256xbf16>
    %c2_92 = arith.constant 2 : index
    %c0_93 = arith.constant 0 : index
    %c0_94 = arith.constant 0 : index
    %c0_95 = arith.constant 0 : index
    %75 = vector.load %arg4[%c2_92, %c0_93, %c0_94, %c0_95] : memref<3x3x256x256xbf16, #tpu.memory_space<vmem>>, vector<1x1x256x256xbf16>
    %76 = vector.shape_cast %75 : vector<1x1x256x256xbf16> to vector<256x256xbf16>
    %cst_96 = arith.constant dense<0.000000e+00> : vector<64x256xf32>
    %77 = tpu.matmul %74, %76, %cst_96 {dimension_numbers = #tpu.dot_dimension_numbers<[1], [0], [0], [1], [0, 0, 1, 1], [], []>} : vector<64x256xbf16>, vector<256x256xbf16>, vector<64x256xf32> -> vector<64x256xf32>
    %78 = arith.addf %73, %77 : vector<64x256xf32>
    %c0_97 = arith.constant 0 : index
    %c0_98 = arith.constant 0 : index
    %79 = vector.load %arg10[%c0_97, %c0_98] : memref<64x256xf32, #tpu.memory_space<vmem>>, vector<64x256xf32>
    tpu.vector_store %arg10[%c0_97, %c0_98], %78 {strides = array<i32>} : memref<64x256xf32, #tpu.memory_space<vmem>>, vector<64x256xf32>,
    %c2_99 = arith.constant 2 : index
    %c1_100 = arith.constant 1 : index
    %c0_101 = arith.constant 0 : index
    %80 = vector.load %arg9[%c2_99, %c1_100, %c0_101] : memref<10x10x256xf32, #tpu.memory_space<vmem>>, vector<8x8x256xf32>
    %81 = vector.shape_cast %80 : vector<8x8x256xf32> to vector<64x256xf32>
    %c0_102 = arith.constant 0 : index
    %c0_103 = arith.constant 0 : index
    %82 = vector.load %arg10[%c0_102, %c0_103] : memref<64x256xf32, #tpu.memory_space<vmem>>, vector<64x256xf32>
    %83 = arith.truncf %81 : vector<64x256xf32> to vector<64x256xbf16>
    %c2_104 = arith.constant 2 : index
    %c1_105 = arith.constant 1 : index
    %c0_106 = arith.constant 0 : index
    %c0_107 = arith.constant 0 : index
    %84 = vector.load %arg4[%c2_104, %c1_105, %c0_106, %c0_107] : memref<3x3x256x256xbf16, #tpu.memory_space<vmem>>, vector<1x1x256x256xbf16>
    %85 = vector.shape_cast %84 : vector<1x1x256x256xbf16> to vector<256x256xbf16>
    %cst_108 = arith.constant dense<0.000000e+00> : vector<64x256xf32>
    %86 = tpu.matmul %83, %85, %cst_108 {dimension_numbers = #tpu.dot_dimension_numbers<[1], [0], [0], [1], [0, 0, 1, 1], [], []>} : vector<64x256xbf16>, vector<256x256xbf16>, vector<64x256xf32> -> vector<64x256xf32>
    %87 = arith.addf %82, %86 : vector<64x256xf32>
    %c0_109 = arith.constant 0 : index
    %c0_110 = arith.constant 0 : index
    %88 = vector.load %arg10[%c0_109, %c0_110] : memref<64x256xf32, #tpu.memory_space<vmem>>, vector<64x256xf32>
    tpu.vector_store %arg10[%c0_109, %c0_110], %87 {strides = array<i32>} : memref<64x256xf32, #tpu.memory_space<vmem>>, vector<64x256xf32>,
    %c2_111 = arith.constant 2 : index
    %c2_112 = arith.constant 2 : index
    %c0_113 = arith.constant 0 : index
    %89 = vector.load %arg9[%c2_111, %c2_112, %c0_113] : memref<10x10x256xf32, #tpu.memory_space<vmem>>, vector<8x8x256xf32>
    %90 = vector.shape_cast %89 : vector<8x8x256xf32> to vector<64x256xf32>
    %c0_114 = arith.constant 0 : index
    %c0_115 = arith.constant 0 : index
    %91 = vector.load %arg10[%c0_114, %c0_115] : memref<64x256xf32, #tpu.memory_space<vmem>>, vector<64x256xf32>
    %92 = arith.truncf %90 : vector<64x256xf32> to vector<64x256xbf16>
    %c2_116 = arith.constant 2 : index
    %c2_117 = arith.constant 2 : index
    %c0_118 = arith.constant 0 : index
    %c0_119 = arith.constant 0 : index
    %93 = vector.load %arg4[%c2_116, %c2_117, %c0_118, %c0_119] : memref<3x3x256x256xbf16, #tpu.memory_space<vmem>>, vector<1x1x256x256xbf16>
    %94 = vector.shape_cast %93 : vector<1x1x256x256xbf16> to vector<256x256xbf16>
    %cst_120 = arith.constant dense<0.000000e+00> : vector<64x256xf32>
    %95 = tpu.matmul %92, %94, %cst_120 {dimension_numbers = #tpu.dot_dimension_numbers<[1], [0], [0], [1], [0, 0, 1, 1], [], []>} : vector<64x256xbf16>, vector<256x256xbf16>, vector<64x256xf32> -> vector<64x256xf32>
    %96 = arith.addf %91, %95 : vector<64x256xf32>
    %c0_121 = arith.constant 0 : index
    %c0_122 = arith.constant 0 : index
    %97 = vector.load %arg10[%c0_121, %c0_122] : memref<64x256xf32, #tpu.memory_space<vmem>>, vector<64x256xf32>
    tpu.vector_store %arg10[%c0_121, %c0_122], %96 {strides = array<i32>} : memref<64x256xf32, #tpu.memory_space<vmem>>, vector<64x256xf32>,
    %c0_123 = arith.constant 0 : index
    %c0_124 = arith.constant 0 : index
    %98 = vector.load %arg10[%c0_123, %c0_124] : memref<64x256xf32, #tpu.memory_space<vmem>>, vector<64x256xf32>
    %c0_125 = arith.constant 0 : index
    %c0_126 = arith.constant 0 : index
    %99 = vector.load %arg5[%c0_125, %c0_126] : memref<1x256xf32, #tpu.memory_space<vmem>>, vector<1x256xf32>
    %100 = vector.broadcast %99 : vector<1x256xf32> to vector<64x256xf32>
    %101 = arith.addf %98, %100 : vector<64x256xf32>
    %cst_127 = arith.constant dense<0.000000e+00> : vector<256xf32>
    %102 = vector.multi_reduction <add>, %101, %cst_127 [0] : vector<64x256xf32> to vector<256xf32>
    %103 = vector.shape_cast %102 : vector<256xf32> to vector<1x1x256xf32>
    %c0_128 = arith.constant 0 : index
    %c0_129 = arith.constant 0 : index
    %c0_130 = arith.constant 0 : index
    %104 = vector.load %arg7[%c0_128, %c0_129, %c0_130] : memref<1x1x256xf32, #tpu.memory_space<vmem>>, vector<1x1x256xf32>
    tpu.vector_store %arg7[%c0_128, %c0_129, %c0_130], %103 {strides = array<i32>} : memref<1x1x256xf32, #tpu.memory_space<vmem>>, vector<1x1x256xf32>,
    %105 = arith.mulf %101, %101 : vector<64x256xf32>
    %cst_131 = arith.constant dense<0.000000e+00> : vector<256xf32>
    %106 = vector.multi_reduction <add>, %105, %cst_131 [0] : vector<64x256xf32> to vector<256xf32>
    %107 = vector.shape_cast %106 : vector<256xf32> to vector<1x1x256xf32>
    %c0_132 = arith.constant 0 : index
    %c0_133 = arith.constant 0 : index
    %c0_134 = arith.constant 0 : index
    %108 = vector.load %arg8[%c0_132, %c0_133, %c0_134] : memref<1x1x256xf32, #tpu.memory_space<vmem>>, vector<1x1x256xf32>
    tpu.vector_store %arg8[%c0_132, %c0_133, %c0_134], %107 {strides = array<i32>} : memref<1x1x256xf32, #tpu.memory_space<vmem>>, vector<1x1x256xf32>,
    %109 = vector.shape_cast %101 : vector<64x256xf32> to vector<1x8x8x256xf32>
    %110 = arith.truncf %109 : vector<1x8x8x256xf32> to vector<1x8x8x256xbf16>
    %c0_135 = arith.constant 0 : index
    %c0_136 = arith.constant 0 : index
    %c0_137 = arith.constant 0 : index
    %c0_138 = arith.constant 0 : index
    %111 = vector.load %arg6[%c0_135, %c0_136, %c0_137, %c0_138] : memref<1x8x8x256xbf16, #tpu.memory_space<vmem>>, vector<1x8x8x256xbf16>
    tpu.vector_store %arg6[%c0_135, %c0_136, %c0_137, %c0_138], %110 {strides = array<i32>} : memref<1x8x8x256xbf16, #tpu.memory_space<vmem>>, vector<1x8x8x256xbf16>,
    return
  }
  func.func @transform_0(%arg0: i32) -> (i32, i32, i32, i32) {
    %c0_i32 = arith.constant 0 : i32
    %c0_i32_0 = arith.constant 0 : i32
    %c0_i32_1 = arith.constant 0 : i32
    %c0_i32_2 = arith.constant 0 : i32
    return %arg0, %c0_i32, %c0_i32_0, %c0_i32_1 : i32, i32, i32, i32
  }
  func.func @transform_1(%arg0: i32) -> (i32, i32) {
    %c0_i32 = arith.constant 0 : i32
    %c0_i32_0 = arith.constant 0 : i32
    %c0_i32_1 = arith.constant 0 : i32
    return %c0_i32, %c0_i32_0 : i32, i32
  }
  func.func @transform_2(%arg0: i32) -> (i32, i32) {
    %c0_i32 = arith.constant 0 : i32
    %c0_i32_0 = arith.constant 0 : i32
    %c0_i32_1 = arith.constant 0 : i32
    return %c0_i32, %c0_i32_0 : i32, i32
  }
  func.func @transform_3(%arg0: i32) -> (i32, i32, i32, i32) {
    %c0_i32 = arith.constant 0 : i32
    %c0_i32_0 = arith.constant 0 : i32
    %c0_i32_1 = arith.constant 0 : i32
    %c0_i32_2 = arith.constant 0 : i32
    %c0_i32_3 = arith.constant 0 : i32
    return %c0_i32, %c0_i32_0, %c0_i32_1, %c0_i32_2 : i32, i32, i32, i32
  }
  func.func @transform_4(%arg0: i32) -> (i32, i32) {
    %c0_i32 = arith.constant 0 : i32
    %c0_i32_0 = arith.constant 0 : i32
    %c0_i32_1 = arith.constant 0 : i32
    return %c0_i32, %c0_i32_0 : i32, i32
  }
  func.func @transform_5(%arg0: i32) -> (i32, i32, i32, i32) {
    %c0_i32 = arith.constant 0 : i32
    %c0_i32_0 = arith.constant 0 : i32
    %c0_i32_1 = arith.constant 0 : i32
    %c0_i32_2 = arith.constant 0 : i32
    return %arg0, %c0_i32, %c0_i32_0, %c0_i32_1 : i32, i32, i32, i32
  }
  func.func @transform_6(%arg0: i32) -> (i32, i32, i32) {
    %c0_i32 = arith.constant 0 : i32
    %c0_i32_0 = arith.constant 0 : i32
    %c0_i32_1 = arith.constant 0 : i32
    return %arg0, %c0_i32, %c0_i32_0 : i32, i32, i32
  }
  func.func @transform_7(%arg0: i32) -> (i32, i32, i32) {
    %c0_i32 = arith.constant 0 : i32
    %c0_i32_0 = arith.constant 0 : i32
    %c0_i32_1 = arith.constant 0 : i32
    return %arg0, %c0_i32, %c0_i32_0 : i32, i32, i32
  }
}

</mosaic_0001>

<llo_original>
// kernel: model_forward.5
$region0: #{model_forward.5}
  #allocation0 [shape = 'u32[]', space=smem, size = 0x4, offset = 0x4, fixed_abs, tag = 'smem constant byte address 0x4 - core index']
  #allocation1 [shape = 'u32[72,128]{1,0:T(1,128)}', space=vmem, size = 0x9000, scoped, tag = 'internal scratch']
  %s0 = inlined_call_operand.vmem [shape: bf16[2,8,8,256], index: 0, kind: input, shape index: {}]
  %s1 = inlined_call_operand.vmem [shape: f32[1,256], index: 1, kind: input, shape index: {}]
  %s2 = inlined_call_operand.vmem [shape: f32[1,256], index: 2, kind: input, shape index: {}]
  %s3 = inlined_call_operand.hbm [shape: f32[2,8,8,256], index: 3, kind: output, shape index: {}]
  %s4 = sld [smem:[#allocation0]]
  $region45: #{model_forward.5} parent=0
    _
  %s6 = ssub.s32 1, %s4
  %s7 = scalar_select 0, %s6, %s4
  $region1: #{model_forward.5} parent=0
    #allocation2 [shape = 'u8[131072]{0}', space=vmem, size = 0x20000, scoped, tag = 'output window, operand 0']
    #allocation3 [shape = 's32[2]{0}', space=sflag, size = 0x8, scoped, tag = 'scoped memory for model_forward.5']
    %8 = vsyncpa [#allocation3], 0
    %s9 = scalar_lea.sflag [#allocation3], 1
    %10 = vsyncpa %s9, 0
    loop: start=0, step=1, limit=4
    $region2: #{model_forward.5} parent=1 // loop_pre_header
      _
    $region3: #{model_forward.5} parent=1 // loop_header
      %s12 = sphi 0, %s16
      %p13 = scmp.ge.s32.totalorder %s12, 4
      %s22 = sphi 0, %s24
      %s25 = sphi 0, %s22
      %s26 = sphi 0, %s25
      %s42 = sphi 0, %s26
      %s46 = sphi 0, %s46
      %s48 = sphi 0, %s46
      %s49 = sphi 0, %s48
      %s63 = sphi 0, %s49
      %s67 = sphi 0, %s67
      %s69 = sphi 0, %s67
      %s70 = sphi 0, %s69
      %s84 = sphi 0, %s70
      %s90 = sphi 0, %s92
      %s93 = sphi 0, %s90
      %s94 = sphi 0, %s93
      %s110 = sphi 0, %s94
    $region4: #{model_forward.5} parent=1 // loop_header_branch
      %15 = sbr.rel (%p13) target = $region8
    $region5: #{model_forward.5} parent=1 // loop_body
      %s17 = ssub.s32 %s12, 1
      %s18 = ssub.s32 %s12, 2
      %s19 = sadd.s32 %s12, 1
      %s20 = ssub.s32 %s12, %s19
      %p21 = scmp.eq.s32.totalorder %s20, 0
      %s23 = sadd.s32 %s22, 1
      %s24 = scalar_select %p21, %s22, %s23
      %p27 = pneg %p21
      %p28 = scmp.eq.s32.totalorder %s12, 1
      %p29 = por %p27, %p28
      %p30 = scmp.ne.s32.totalorder %s22, %s25
      %p31 = scmp.eq.s32.totalorder %s12, 0
      %p32 = por %p30, %p31
      %p33 = scmp.ne.s32.totalorder %s22, %s25
      %p34 = scmp.eq.s32.totalorder %s17, 1
      %p35 = por %p33, %p34
      %p36 = scmp.ne.s32.totalorder %s25, %s26
      %p37 = scmp.eq.s32.totalorder %s17, 0
      %p38 = por %p36, %p37
      %p39 = scmp.ne.s32.totalorder %s25, %s26
      %p40 = scmp.eq.s32.totalorder %s18, 1
      %p41 = por %p39, %p40
      %p43 = scmp.ne.s32.totalorder %s26, %s42
      %p44 = scmp.eq.s32.totalorder %s18, 0
      %p45 = por %p43, %p44
      %s47 = sadd.s32 %s46, 1
      %p50 = scmp.eq.s32.totalorder %s12, 1
      %p51 = scmp.ne.s32.totalorder %s46, %s48
      %p52 = scmp.eq.s32.totalorder %s12, 0
      %p53 = por %p51, %p52
      %p54 = scmp.ne.s32.totalorder %s46, %s48
      %p55 = scmp.eq.s32.totalorder %s17, 1
      %p56 = por %p54, %p55
      %p57 = scmp.ne.s32.totalorder %s48, %s49
      %p58 = scmp.eq.s32.totalorder %s17, 0
      %p59 = por %p57, %p58
      %p60 = scmp.ne.s32.totalorder %s48, %s49
      %p61 = scmp.eq.s32.totalorder %s18, 1
      %p62 = por %p60, %p61
      %p64 = scmp.ne.s32.totalorder %s49, %s63
      %p65 = scmp.eq.s32.totalorder %s18, 0
      %p66 = por %p64, %p65
      %s68 = sadd.s32 %s67, 1
      %p71 = scmp.eq.s32.totalorder %s12, 1
      %p72 = scmp.ne.s32.totalorder %s67, %s69
      %p73 = scmp.eq.s32.totalorder %s12, 0
      %p74 = por %p72, %p73
      %p75 = scmp.ne.s32.totalorder %s67, %s69
      %p76 = scmp.eq.s32.totalorder %s17, 1
      %p77 = por %p75, %p76
      %p78 = scmp.ne.s32.totalorder %s69, %s70
      %p79 = scmp.eq.s32.totalorder %s17, 0
      %p80 = por %p78, %p79
      %p81 = scmp.ne.s32.totalorder %s69, %s70
      %p82 = scmp.eq.s32.totalorder %s18, 1
      %p83 = por %p81, %p82
      %p85 = scmp.ne.s32.totalorder %s70, %s84
      %p86 = scmp.eq.s32.totalorder %s18, 0
      %p87 = por %p85, %p86
      %s88 = ssub.s32 %s12, %s19
      %p89 = scmp.eq.s32.totalorder %s88, 0
      %s91 = sadd.s32 %s90, 1
      %s92 = scalar_select %p89, %s90, %s91
      %p95 = pneg %p89
      %p96 = scmp.eq.s32.totalorder %s12, 1
      %p97 = por %p95, %p96
      %p98 = scmp.ne.s32.totalorder %s90, %s93
      %p99 = scmp.eq.s32.totalorder %s12, 0
      %p100 = por %p98, %p99
      %p101 = scmp.ne.s32.totalorder %s90, %s93
      %p102 = scmp.eq.s32.totalorder %s17, 1
      %p103 = por %p101, %p102
      %p104 = scmp.ne.s32.totalorder %s93, %s94
      %p105 = scmp.eq.s32.totalorder %s17, 0
      %p106 = por %p104, %p105
      %p107 = scmp.ne.s32.totalorder %s93, %s94
      %p108 = scmp.eq.s32.totalorder %s18, 1
      %p109 = por %p107, %p108
      %p111 = scmp.ne.s32.totalorder %s94, %s110
      %p112 = scmp.eq.s32.totalorder %s18, 0
      %p113 = por %p111, %p112
      %p114 = scmp.le.s32.totalorder 1, %s12
      %p115 = scmp.lt.s32.totalorder %s12, 3
      %p116 = pnand %p114, %p115
      %p117 = pneg %p116
      // Predicated region
      $region9: #{model_forward.5} parent=5 // pred_check
        _
      $region10: #{model_forward.5} parent=5 // pred_check_branch
        %119 = sbr.rel (%p116) target = $region12
      $region11: #{model_forward.5} parent=5 // pred_region
        %s120 = ssub.s32 %s12, 1
        // Predicated region
        $region13: #{model_forward.5} parent=11 // pred_check
          %p121 = pneg %p59
        $region14: #{model_forward.5} parent=11 // pred_check_branch
          %123 = sbr.rel (%p121) target = $region16
        $region15: #{model_forward.5} parent=11 // pred_region
          _
        $region16: #{model_forward.5} parent=11 // pred_fallthru
          _
        // Predicated region
        $region17: #{model_forward.5} parent=11 // pred_check
          %p124 = pneg %p80
        $region18: #{model_forward.5} parent=11 // pred_check_branch
          %126 = sbr.rel (%p124) target = $region20
        $region19: #{model_forward.5} parent=11 // pred_region
          _
        $region20: #{model_forward.5} parent=11 // pred_fallthru
          _
      $region12: #{model_forward.5} parent=5 // pred_fallthru
        _
      %p127 = scmp.lt.s32.totalorder %s12, 2
      // Predicated region
      $region21: #{model_forward.5} parent=5 // pred_check
        %p128 = pneg %p127
      $region22: #{model_forward.5} parent=5 // pred_check_branch
        %130 = sbr.rel (%p128) target = $region24
      $region23: #{model_forward.5} parent=5 // pred_region
        // Predicated region
        $region25: #{model_forward.5} parent=23 // pred_check
          %p131 = pneg %p32
        $region26: #{model_forward.5} parent=23 // pred_check_branch
          %133 = sbr.rel (%p131) target = $region28
        $region27: #{model_forward.5} parent=23 // pred_region
          %p134 = scmp.lt.s32.totalorder %s12, 1
          %s135 = scalar_select %p134, %s12, 1
          %s136 = smul.addr %s135, 16
          %s137 = smul.addr %s136, 4
          %s138 = scalar_lea.vmem %s0, %s137
        $region28: #{model_forward.5} parent=23 // pred_fallthru
          _
      $region24: #{model_forward.5} parent=5 // pred_fallthru
        _
      %p139 = scmp.le.s32.totalorder 1, %s12
      %p140 = scmp.lt.s32.totalorder %s12, 3
      %p141 = pnand %p139, %p140
      %p142 = pneg %p141
      // Predicated region
      $region29: #{model_forward.5} parent=5 // pred_check
        _
      $region30: #{model_forward.5} parent=5 // pred_check_branch
        %144 = sbr.rel (%p141) target = $region32
      $region31: #{model_forward.5} parent=5 // pred_region
        %s145 = ssub.s32 %s12, 1
        %p146 = scmp.lt.s32.totalorder %s17, 1
        %s147 = scalar_select %p146, %s17, 1
        %s148 = smul.addr %s147, 16
        %s149 = smul.addr %s148, 4
        %s150 = scalar_lea.vmem %s0, %s149
        %p151 = pneg %p38
        %p152 = pneg %p35
        %p153 = pneg %p59
        %p154 = pneg %p56
        %p155 = pneg %p80
        %p156 = pneg %p77
        %p157 = pneg %p106
        %p158 = pneg %p103
        %s159 = sand.u32 %s93, 1
        %s160 = scalar_lea.sflag [#allocation3], %s159
        %s161 = sand.u32 %s93, 1
        %s162 = smul.addr %s161, 128
        %s163 = scalar_lea.vmem [#allocation2], %s162
        %p164 = scmp.lt.s32.totalorder %s17, 1
        %s165 = scalar_select %p164, %s17, 1
        %s166 = smul.addr %s165, 16
        %s167 = smul.addr %s166, 4
        %s168 = scalar_lea.vmem %s0, %s167
        %v169 = vld [vmem:[%s168] sm:$0xff]
        %v170 = vld [vmem:[%s168 + $0x8] sm:$0xff]
        %v171 = vld [vmem:[%s168 + $0x10] sm:$0xff]
        %v172 = vld [vmem:[%s168 + $0x18] sm:$0xff]
        %v173 = vld [vmem:[%s168 + $0x20] sm:$0xff]
        %v174 = vld [vmem:[%s168 + $0x28] sm:$0xff]
        %v175 = vld [vmem:[%s168 + $0x30] sm:$0xff]
        %v176 = vld [vmem:[%s168 + $0x38] sm:$0xff]
        %v177 = vunpack.c.l.bf16 %v169
        %v178 = vunpack.c.h.bf16 %v169
        %v179 = vunpack.c.l.bf16 %v170
        %v180 = vunpack.c.h.bf16 %v170
        %v181 = vunpack.c.l.bf16 %v171
        %v182 = vunpack.c.h.bf16 %v171
        %v183 = vunpack.c.l.bf16 %v172
        %v184 = vunpack.c.h.bf16 %v172
        %v185 = vunpack.c.l.bf16 %v173
        %v186 = vunpack.c.h.bf16 %v173
        %v187 = vunpack.c.l.bf16 %v174
        %v188 = vunpack.c.h.bf16 %v174
        %v189 = vunpack.c.l.bf16 %v175
        %v190 = vunpack.c.h.bf16 %v175
        %v191 = vunpack.c.l.bf16 %v176
        %v192 = vunpack.c.h.bf16 %v176
        %v193 = vld [vmem:[%s1] sm:$0x3]
        %v194 = vld [vmem:[%s2] sm:$0x3]
        %v196 = vperm.slane %v193, 0
        %v197 = vperm.slane %v193, 1
        %v200 = vmul.f32 %v177, %v196
        %v201 = vmul.f32 %v178, %v197
        %v202 = vmul.f32 %v179, %v196
        %v203 = vmul.f32 %v180, %v197
        %v204 = vmul.f32 %v181, %v196
        %v205 = vmul.f32 %v182, %v197
        %v206 = vmul.f32 %v183, %v196
        %v207 = vmul.f32 %v184, %v197
        %v208 = vmul.f32 %v185, %v196
        %v209 = vmul.f32 %v186, %v197
        %v210 = vmul.f32 %v187, %v196
        %v211 = vmul.f32 %v188, %v197
        %v212 = vmul.f32 %v189, %v196
        %v213 = vmul.f32 %v190, %v197
        %v214 = vmul.f32 %v191, %v196
        %v215 = vmul.f32 %v192, %v197
        %v217 = vperm.slane %v194, 0
        %v218 = vperm.slane %v194, 1
        %v221 = vadd.f32 %v200, %v217
        %v222 = vadd.f32 %v201, %v218
        %v223 = vadd.f32 %v202, %v217
        %v224 = vadd.f32 %v203, %v218
        %v225 = vadd.f32 %v204, %v217
        %v226 = vadd.f32 %v205, %v218
        %v227 = vadd.f32 %v206, %v217
        %v228 = vadd.f32 %v207, %v218
        %v229 = vadd.f32 %v208, %v217
        %v230 = vadd.f32 %v209, %v218
        %v231 = vadd.f32 %v210, %v217
        %v232 = vadd.f32 %v211, %v218
        %v233 = vadd.f32 %v212, %v217
        %v234 = vadd.f32 %v213, %v218
        %v235 = vadd.f32 %v214, %v217
        %v236 = vadd.f32 %v215, %v218
        %237 = vst [vmem:[%s163] sm:$0xff] %v221
        %238 = vst [vmem:[%s163 + $0x8] sm:$0xff] %v222
        %239 = vst [vmem:[%s163 + $0x10] sm:$0xff] %v223
        %240 = vst [vmem:[%s163 + $0x18] sm:$0xff] %v224
        %241 = vst [vmem:[%s163 + $0x20] sm:$0xff] %v225
        %242 = vst [vmem:[%s163 + $0x28] sm:$0xff] %v226
        %243 = vst [vmem:[%s163 + $0x30] sm:$0xff] %v227
        %244 = vst [vmem:[%s163 + $0x38] sm:$0xff] %v228
        %245 = vst [vmem:[%s163 + $0x40] sm:$0xff] %v229
        %246 = vst [vmem:[%s163 + $0x48] sm:$0xff] %v230
        %247 = vst [vmem:[%s163 + $0x50] sm:$0xff] %v231
        %248 = vst [vmem:[%s163 + $0x58] sm:$0xff] %v232
        %249 = vst [vmem:[%s163 + $0x60] sm:$0xff] %v233
        %250 = vst [vmem:[%s163 + $0x68] sm:$0xff] %v234
        %251 = vst [vmem:[%s163 + $0x70] sm:$0xff] %v235
        %252 = vst [vmem:[%s163 + $0x78] sm:$0xff] %v236
        %s253 = sand.u32 %s93, 1
        %s254 = scalar_lea.sflag [#allocation3], %s253
        %s255 = sand.u32 %s93, 1
        %s256 = smul.addr %s255, 128
        %s257 = scalar_lea.vmem [#allocation2], %s256
        // Predicated region
        $region33: #{model_forward.5} parent=31 // pred_check
          %p258 = pneg %p103
        $region34: #{model_forward.5} parent=31 // pred_check_branch
          %260 = sbr.rel (%p258) target = $region36
        $region35: #{model_forward.5} parent=31 // pred_region
          %262 = vsyncadd %s254, 0
          %s263 = smul.addr %s17, 16
          %s264 = smul.addr %s263, 8
          %s265 = scalar_lea.hbm %s3, %s264
          %s266 = sshll.u32 %s257, 4
          %s267 = int_to_ptr.vmem [resolvable:$true] %s266
          %s268 = sshll.u32 %s265, 4
          %s269 = int_to_ptr.hbm [resolvable:$true] %s268
          %274 = dma.vmem_to_hbm [thread:$0]  %s267, 2048, %s269, %s254, 256, 256, 16
        $region36: #{model_forward.5} parent=31 // pred_fallthru
          _
      $region32: #{model_forward.5} parent=5 // pred_fallthru
        _
      %p275 = scmp.le.s32.totalorder 2, %s12
      // Predicated region
      $region37: #{model_forward.5} parent=5 // pred_check
        %p276 = pneg %p275
      $region38: #{model_forward.5} parent=5 // pred_check_branch
        %278 = sbr.rel (%p276) target = $region40
      $region39: #{model_forward.5} parent=5 // pred_region
        %s279 = ssub.s32 %s12, 2
        // Predicated region
        $region41: #{model_forward.5} parent=39 // pred_check
          %p280 = pneg %p109
        $region42: #{model_forward.5} parent=39 // pred_check_branch
          %282 = sbr.rel (%p280) target = $region44
        $region43: #{model_forward.5} parent=39 // pred_region
          %s283 = sand.u32 %s94, 1
          %s284 = scalar_lea.sflag [#allocation3], %s283
          %s285 = sand.u32 %s94, 1
          %s286 = smul.addr %s285, 128
          %s287 = scalar_lea.vmem [#allocation2], %s286
          %289 = dma.done %s284, 2048
        $region44: #{model_forward.5} parent=39 // pred_fallthru
          _
      $region40: #{model_forward.5} parent=5 // pred_fallthru
        _
    $region6: #{model_forward.5} parent=1 // loop_footer
      %s16 = sadd.s32 1, %s12
    $region7: #{model_forward.5} parent=1 // loop_footer_branch
      %11 = sbr.rel target = $region3
    $region8: #{model_forward.5} parent=1 // loop_exit
      _
    %290 = vsyncpa [#allocation3], 1
    %s291 = scalar_lea.sflag [#allocation3], 1
    %292 = vsyncpa %s291, 1

// kernel: model_forward.3
$region0: #{model_forward.3}
  #allocation0 [shape = 'u32[]', space=smem, size = 0x4, offset = 0x4, fixed_abs, tag = 'smem constant byte address 0x4 - core index']
  #allocation1 [shape = 'u32[72,128]{1,0:T(1,128)}', space=vmem, size = 0x9000, scoped, tag = 'internal scratch']
  %s0 = inlined_call_operand.hbm [shape: f32[2,8,8,256], index: 0, kind: input, shape index: {}]
  %s1 = inlined_call_operand.vmem [shape: f32[2,1,256], index: 1, kind: output, shape index: {0}]
  %s2 = inlined_call_operand.vmem [shape: f32[2,1,256], index: 2, kind: output, shape index: {1}]
  %3 = xla_tuple %s1, %s2
  %s4 = sld [smem:[#allocation0]]
  $region49: #{model_forward.3} parent=0
    _
  %s6 = ssub.s32 1, %s4
  %s7 = scalar_select 0, %s6, %s4
  $region1: #{model_forward.3} parent=0
    #allocation2 [shape = 'u8[131072]{0}', space=vmem, size = 0x20000, scoped, tag = 'input window, operand 0']
    #allocation3 [shape = 's32[2]{0}', space=sflag, size = 0x8, scoped, tag = 'scoped memory for model_forward.3']
    %8 = vsyncpa [#allocation3], 0
    %s9 = scalar_lea.sflag [#allocation3], 1
    %10 = vsyncpa %s9, 0
    loop: start=0, step=1, limit=4
    $region2: #{model_forward.3} parent=1 // loop_pre_header
      _
    $region3: #{model_forward.3} parent=1 // loop_header
      %s12 = sphi 0, %s16
      %p13 = scmp.ge.s32.totalorder %s12, 4
      %s22 = sphi 0, %s24
      %s25 = sphi 0, %s22
      %s26 = sphi 0, %s25
      %s42 = sphi 0, %s26
      %s48 = sphi 0, %s50
      %s51 = sphi 0, %s48
      %s52 = sphi 0, %s51
      %s68 = sphi 0, %s52
      %s74 = sphi 0, %s76
      %s77 = sphi 0, %s74
      %s78 = sphi 0, %s77
      %s94 = sphi 0, %s78
    $region4: #{model_forward.3} parent=1 // loop_header_branch
      %15 = sbr.rel (%p13) target = $region8
    $region5: #{model_forward.3} parent=1 // loop_body
      %s17 = ssub.s32 %s12, 1
      %s18 = ssub.s32 %s12, 2
      %s19 = sadd.s32 %s12, 1
      %s20 = ssub.s32 %s12, %s19
      %p21 = scmp.eq.s32.totalorder %s20, 0
      %s23 = sadd.s32 %s22, 1
      %s24 = scalar_select %p21, %s22, %s23
      %p27 = pneg %p21
      %p28 = scmp.eq.s32.totalorder %s12, 1
      %p29 = por %p27, %p28
      %p30 = scmp.ne.s32.totalorder %s22, %s25
      %p31 = scmp.eq.s32.totalorder %s12, 0
      %p32 = por %p30, %p31
      %p33 = scmp.ne.s32.totalorder %s22, %s25
      %p34 = scmp.eq.s32.totalorder %s17, 1
      %p35 = por %p33, %p34
      %p36 = scmp.ne.s32.totalorder %s25, %s26
      %p37 = scmp.eq.s32.totalorder %s17, 0
      %p38 = por %p36, %p37
      %p39 = scmp.ne.s32.totalorder %s25, %s26
      %p40 = scmp.eq.s32.totalorder %s18, 1
      %p41 = por %p39, %p40
      %p43 = scmp.ne.s32.totalorder %s26, %s42
      %p44 = scmp.eq.s32.totalorder %s18, 0
      %p45 = por %p43, %p44
      %s46 = ssub.s32 %s12, %s19
      %p47 = scmp.eq.s32.totalorder %s46, 0
      %s49 = sadd.s32 %s48, 1
      %s50 = scalar_select %p47, %s48, %s49
      %p53 = pneg %p47
      %p54 = scmp.eq.s32.totalorder %s12, 1
      %p55 = por %p53, %p54
      %p56 = scmp.ne.s32.totalorder %s48, %s51
      %p57 = scmp.eq.s32.totalorder %s12, 0
      %p58 = por %p56, %p57
      %p59 = scmp.ne.s32.totalorder %s48, %s51
      %p60 = scmp.eq.s32.totalorder %s17, 1
      %p61 = por %p59, %p60
      %p62 = scmp.ne.s32.totalorder %s51, %s52
      %p63 = scmp.eq.s32.totalorder %s17, 0
      %p64 = por %p62, %p63
      %p65 = scmp.ne.s32.totalorder %s51, %s52
      %p66 = scmp.eq.s32.totalorder %s18, 1
      %p67 = por %p65, %p66
      %p69 = scmp.ne.s32.totalorder %s52, %s68
      %p70 = scmp.eq.s32.totalorder %s18, 0
      %p71 = por %p69, %p70
      %s72 = ssub.s32 %s12, %s19
      %p73 = scmp.eq.s32.totalorder %s72, 0
      %s75 = sadd.s32 %s74, 1
      %s76 = scalar_select %p73, %s74, %s75
      %p79 = pneg %p73
      %p80 = scmp.eq.s32.totalorder %s12, 1
      %p81 = por %p79, %p80
      %p82 = scmp.ne.s32.totalorder %s74, %s77
      %p83 = scmp.eq.s32.totalorder %s12, 0
      %p84 = por %p82, %p83
      %p85 = scmp.ne.s32.totalorder %s74, %s77
      %p86 = scmp.eq.s32.totalorder %s17, 1
      %p87 = por %p85, %p86
      %p88 = scmp.ne.s32.totalorder %s77, %s78
      %p89 = scmp.eq.s32.totalorder %s17, 0
      %p90 = por %p88, %p89
      %p91 = scmp.ne.s32.totalorder %s77, %s78
      %p92 = scmp.eq.s32.totalorder %s18, 1
      %p93 = por %p91, %p92
      %p95 = scmp.ne.s32.totalorder %s78, %s94
      %p96 = scmp.eq.s32.totalorder %s18, 0
      %p97 = por %p95, %p96
      %p98 = scmp.le.s32.totalorder 1, %s12
      %p99 = scmp.lt.s32.totalorder %s12, 3
      %p100 = pnand %p98, %p99
      %p101 = pneg %p100
      // Predicated region
      $region9: #{model_forward.3} parent=5 // pred_check
        _
      $region10: #{model_forward.3} parent=5 // pred_check_branch
        %103 = sbr.rel (%p100) target = $region12
      $region11: #{model_forward.3} parent=5 // pred_region
        %s104 = ssub.s32 %s12, 1
      $region12: #{model_forward.3} parent=5 // pred_fallthru
        _
      %p105 = scmp.lt.s32.totalorder %s12, 2
      // Predicated region
      $region13: #{model_forward.3} parent=5 // pred_check
        %p106 = pneg %p105
      $region14: #{model_forward.3} parent=5 // pred_check_branch
        %108 = sbr.rel (%p106) target = $region16
      $region15: #{model_forward.3} parent=5 // pred_region
        // Predicated region
        $region17: #{model_forward.3} parent=15 // pred_check
          %p109 = pneg %p32
        $region18: #{model_forward.3} parent=15 // pred_check_branch
          %111 = sbr.rel (%p109) target = $region20
        $region19: #{model_forward.3} parent=15 // pred_region
          %s112 = sand.u32 %s22, 1
          %s113 = scalar_lea.sflag [#allocation3], %s112
          %s114 = sand.u32 %s22, 1
          %s115 = smul.addr %s114, 128
          %s116 = scalar_lea.vmem [#allocation2], %s115
          %118 = vsyncadd %s113, 0
          %s119 = smul.addr %s12, 16
          %s120 = smul.addr %s119, 8
          %s121 = scalar_lea.hbm %s0, %s120
          %s122 = sshll.u32 %s121, 4
          %s123 = int_to_ptr.hbm [resolvable:$true] %s122
          %s124 = sshll.u32 %s116, 4
          %s125 = int_to_ptr.vmem [resolvable:$true] %s124
          %130 = dma.hbm_to_vmem [thread:$0]  %s123, 2048, %s125, %s113, 256, 256, 16
        $region20: #{model_forward.3} parent=15 // pred_fallthru
          _
      $region16: #{model_forward.3} parent=5 // pred_fallthru
        _
      %p131 = scmp.le.s32.totalorder 1, %s12
      %p132 = scmp.lt.s32.totalorder %s12, 3
      %p133 = pnand %p131, %p132
      %p134 = pneg %p133
      // Predicated region
      $region21: #{model_forward.3} parent=5 // pred_check
        _
      $region22: #{model_forward.3} parent=5 // pred_check_branch
        %136 = sbr.rel (%p133) target = $region24
      $region23: #{model_forward.3} parent=5 // pred_region
        %s137 = ssub.s32 %s12, 1
        %s138 = sand.u32 %s25, 1
        %s139 = scalar_lea.sflag [#allocation3], %s138
        %s140 = sand.u32 %s25, 1
        %s141 = smul.addr %s140, 128
        %s142 = scalar_lea.vmem [#allocation2], %s141
        // Predicated region
        $region25: #{model_forward.3} parent=23 // pred_check
          %p143 = pneg %p38
        $region26: #{model_forward.3} parent=23 // pred_check_branch
          %145 = sbr.rel (%p143) target = $region28
        $region27: #{model_forward.3} parent=23 // pred_region
          %147 = dma.done %s139, 2048
        $region28: #{model_forward.3} parent=23 // pred_fallthru
          _
        %s148 = sand.u32 %s25, 1
        %s149 = scalar_lea.sflag [#allocation3], %s148
        %s150 = sand.u32 %s25, 1
        %s151 = smul.addr %s150, 128
        %s152 = scalar_lea.vmem [#allocation2], %s151
        %p153 = pneg %p38
        %p154 = pneg %p35
        %p155 = pneg %p64
        %p156 = pneg %p61
        %p157 = scmp.lt.s32.totalorder %s17, 1
        %s158 = scalar_select %p157, %s17, 1
        %s159 = smul.addr %s158, 2
        %s160 = scalar_lea.vmem %s1, %s159
        %p161 = pneg %p90
        %p162 = pneg %p87
        %p163 = scmp.lt.s32.totalorder %s17, 1
        %s164 = scalar_select %p163, %s17, 1
        %s165 = smul.addr %s164, 2
        %s166 = scalar_lea.vmem %s2, %s165
        %p167 = scmp.lt.s32.totalorder %s17, 1
        %s168 = scalar_select %p167, %s17, 1
        %s169 = smul.addr %s168, 2
        %s170 = scalar_lea.vmem %s1, %s169
        %p171 = scmp.lt.s32.totalorder %s17, 1
        %s172 = scalar_select %p171, %s17, 1
        %s173 = smul.addr %s172, 2
        %s174 = scalar_lea.vmem %s2, %s173
        %v175 = vld [vmem:[%s142] sm:$0xff]
        %v176 = vld [vmem:[%s142 + $0x8] sm:$0xff]
        %v177 = vld [vmem:[%s142 + $0x10] sm:$0xff]
        %v178 = vld [vmem:[%s142 + $0x18] sm:$0xff]
        %v179 = vld [vmem:[%s142 + $0x20] sm:$0xff]
        %v180 = vld [vmem:[%s142 + $0x28] sm:$0xff]
        %v181 = vld [vmem:[%s142 + $0x30] sm:$0xff]
        %v182 = vld [vmem:[%s142 + $0x38] sm:$0xff]
        %v183 = vld [vmem:[%s142 + $0x40] sm:$0xff]
        %v184 = vld [vmem:[%s142 + $0x48] sm:$0xff]
        %v185 = vld [vmem:[%s142 + $0x50] sm:$0xff]
        %v186 = vld [vmem:[%s142 + $0x58] sm:$0xff]
        %v187 = vld [vmem:[%s142 + $0x60] sm:$0xff]
        %v188 = vld [vmem:[%s142 + $0x68] sm:$0xff]
        %v189 = vld [vmem:[%s142 + $0x70] sm:$0xff]
        %v190 = vld [vmem:[%s142 + $0x78] sm:$0xff]
        %v191 = vadd.f32 %v175, %v177
        %v192 = vadd.f32 %v191, %v179
        %v193 = vadd.f32 %v192, %v181
        %v194 = vadd.f32 %v193, %v183
        %v195 = vadd.f32 %v194, %v185
        %v196 = vadd.f32 %v195, %v187
        %v197 = vadd.f32 %v196, %v189
        %v198 = vrot.slane %v197, 4
        %v199 = vadd.f32 %v197, %v198
        %v200 = vrot.slane %v199, 2
        %v201 = vadd.f32 %v199, %v200
        %v202 = vrot.slane %v201, 1
        %v203 = vadd.f32 %v201, %v202
        %v204 = vadd.f32 %v176, %v178
        %v205 = vadd.f32 %v204, %v180
        %v206 = vadd.f32 %v205, %v182
        %v207 = vadd.f32 %v206, %v184
        %v208 = vadd.f32 %v207, %v186
        %v209 = vadd.f32 %v208, %v188
        %v210 = vadd.f32 %v209, %v190
        %v211 = vrot.slane %v210, 4
        %v212 = vadd.f32 %v210, %v211
        %v213 = vrot.slane %v212, 2
        %v214 = vadd.f32 %v212, %v213
        %v215 = vrot.slane %v214, 1
        %v216 = vadd.f32 %v214, %v215
        %v219 = vrot.slane %v216, 7
        %vm220 = vcmask 1040384
        %v221 = vsel %vm220, %v203, %v219
        %v223 = vlaneseq
        %vm224 = vcmp.ge.s32.totalorder %v223, 0
        %vm225 = vcmp.lt.s32.totalorder %v223, 256
        %vm226 = vmand %vm224, %vm225
        %227 = vst.msk [vmem:[%s170] sm:$0x3] %vm226, %v221
        %v228 = vmul.f32 %v175, %v175
        %v229 = vmul.f32 %v176, %v176
        %v230 = vmul.f32 %v177, %v177
        %v231 = vmul.f32 %v178, %v178
        %v232 = vmul.f32 %v179, %v179
        %v233 = vmul.f32 %v180, %v180
        %v234 = vmul.f32 %v181, %v181
        %v235 = vmul.f32 %v182, %v182
        %v236 = vmul.f32 %v183, %v183
        %v237 = vmul.f32 %v184, %v184
        %v238 = vmul.f32 %v185, %v185
        %v239 = vmul.f32 %v186, %v186
        %v240 = vmul.f32 %v187, %v187
        %v241 = vmul.f32 %v188, %v188
        %v242 = vmul.f32 %v189, %v189
        %v243 = vmul.f32 %v190, %v190
        %v244 = vadd.f32 %v228, %v230
        %v245 = vadd.f32 %v244, %v232
        %v246 = vadd.f32 %v245, %v234
        %v247 = vadd.f32 %v246, %v236
        %v248 = vadd.f32 %v247, %v238
        %v249 = vadd.f32 %v248, %v240
        %v250 = vadd.f32 %v249, %v242
        %v251 = vrot.slane %v250, 4
        %v252 = vadd.f32 %v250, %v251
        %v253 = vrot.slane %v252, 2
        %v254 = vadd.f32 %v252, %v253
        %v255 = vrot.slane %v254, 1
        %v256 = vadd.f32 %v254, %v255
        %v257 = vadd.f32 %v229, %v231
        %v258 = vadd.f32 %v257, %v233
        %v259 = vadd.f32 %v258, %v235
        %v260 = vadd.f32 %v259, %v237
        %v261 = vadd.f32 %v260, %v239
        %v262 = vadd.f32 %v261, %v241
        %v263 = vadd.f32 %v262, %v243
        %v264 = vrot.slane %v263, 4
        %v265 = vadd.f32 %v263, %v264
        %v266 = vrot.slane %v265, 2
        %v267 = vadd.f32 %v265, %v266
        %v268 = vrot.slane %v267, 1
        %v269 = vadd.f32 %v267, %v268
        %v272 = vrot.slane %v269, 7
        %v273 = vsel %vm220, %v256, %v272
        %275 = vst.msk [vmem:[%s174] sm:$0x3] %vm226, %v273
        %p276 = scmp.lt.s32.totalorder %s17, 1
        %s277 = scalar_select %p276, %s17, 1
        %s278 = smul.addr %s277, 2
        %s279 = scalar_lea.vmem %s1, %s278
        %p280 = scmp.lt.s32.totalorder %s17, 1
        %s281 = scalar_select %p280, %s17, 1
        %s282 = smul.addr %s281, 2
        %s283 = scalar_lea.vmem %s2, %s282
        // Predicated region
        $region29: #{model_forward.3} parent=23 // pred_check
          %p284 = pneg %p61
        $region30: #{model_forward.3} parent=23 // pred_check_branch
          %286 = sbr.rel (%p284) target = $region32
        $region31: #{model_forward.3} parent=23 // pred_region
          _
        $region32: #{model_forward.3} parent=23 // pred_fallthru
          _
        // Predicated region
        $region33: #{model_forward.3} parent=23 // pred_check
          %p287 = pneg %p87
        $region34: #{model_forward.3} parent=23 // pred_check_branch
          %289 = sbr.rel (%p287) target = $region36
        $region35: #{model_forward.3} parent=23 // pred_region
          _
        $region36: #{model_forward.3} parent=23 // pred_fallthru
          _
      $region24: #{model_forward.3} parent=5 // pred_fallthru
        _
      %p290 = scmp.le.s32.totalorder 2, %s12
      // Predicated region
      $region37: #{model_forward.3} parent=5 // pred_check
        %p291 = pneg %p290
      $region38: #{model_forward.3} parent=5 // pred_check_branch
        %293 = sbr.rel (%p291) target = $region40
      $region39: #{model_forward.3} parent=5 // pred_region
        %s294 = ssub.s32 %s12, 2
        // Predicated region
        $region41: #{model_forward.3} parent=39 // pred_check
          %p295 = pneg %p67
        $region42: #{model_forward.3} parent=39 // pred_check_branch
          %297 = sbr.rel (%p295) target = $region44
        $region43: #{model_forward.3} parent=39 // pred_region
          %p298 = scmp.lt.s32.totalorder %s18, 1
          %s299 = scalar_select %p298, %s18, 1
          %s300 = smul.addr %s299, 2
          %s301 = scalar_lea.vmem %s1, %s300
        $region44: #{model_forward.3} parent=39 // pred_fallthru
          _
        // Predicated region
        $region45: #{model_forward.3} parent=39 // pred_check
          %p302 = pneg %p93
        $region46: #{model_forward.3} parent=39 // pred_check_branch
          %304 = sbr.rel (%p302) target = $region48
        $region47: #{model_forward.3} parent=39 // pred_region
          %p305 = scmp.lt.s32.totalorder %s18, 1
          %s306 = scalar_select %p305, %s18, 1
          %s307 = smul.addr %s306, 2
          %s308 = scalar_lea.vmem %s2, %s307
        $region48: #{model_forward.3} parent=39 // pred_fallthru
          _
      $region40: #{model_forward.3} parent=5 // pred_fallthru
        _
    $region6: #{model_forward.3} parent=1 // loop_footer
      %s16 = sadd.s32 1, %s12
    $region7: #{model_forward.3} parent=1 // loop_footer_branch
      %11 = sbr.rel target = $region3
    $region8: #{model_forward.3} parent=1 // loop_exit
      _
    %309 = vsyncpa [#allocation3], 1
    %s310 = scalar_lea.sflag [#allocation3], 1
    %311 = vsyncpa %s310, 1

// kernel: model_forward.4
$region0: #{model_forward.4}
  #allocation0 [shape = 'u32[]', space=smem, size = 0x4, offset = 0x4, fixed_abs, tag = 'smem constant byte address 0x4 - core index']
  #allocation1 [shape = 'u32[72,128]{1,0:T(1,128)}', space=vmem, size = 0x9000, scoped, tag = 'internal scratch']
  #allocation2 [shape = 'f32[10,10,256]{2,1,0:T(8,128)}', space=vmem, size = 0x28000, scoped, tag = 'scratch operand']
  #allocation3 [shape = 'f32[64,256]{1,0:T(8,128)}', space=vmem, size = 0x10000, scoped, tag = 'scratch operand']
  %s0 = inlined_call_operand.vmem [shape: f32[2,8,8,256], index: 0, kind: input, shape index: {}]
  %s1 = inlined_call_operand.vmem [shape: f32[1,256], index: 1, kind: input, shape index: {}]
  %s2 = inlined_call_operand.vmem [shape: f32[1,256], index: 2, kind: input, shape index: {}]
  %s3 = inlined_call_operand.vmem [shape: bf16[3,3,256,256], index: 3, kind: input, shape index: {}]
  %s4 = inlined_call_operand.vmem [shape: f32[1,256], index: 4, kind: input, shape index: {}]
  %s5 = inlined_call_operand.vmem [shape: bf16[2,8,8,256], index: 5, kind: output, shape index: {0}]
  %s6 = inlined_call_operand.vmem [shape: f32[2,1,256], index: 6, kind: output, shape index: {1}]
  %s7 = inlined_call_operand.vmem [shape: f32[2,1,256], index: 7, kind: output, shape index: {2}]
  %8 = xla_tuple %s5, %s6, %s7
  %s9 = sld [smem:[#allocation0]]
  $region69: #{model_forward.4} parent=0
    _
  %s11 = ssub.s32 1, %s9
  %s12 = scalar_select 0, %s11, %s9
  loop: start=0, step=1, limit=4
  $region2: #{model_forward.4} parent=0 // loop_pre_header
    _
  $region3: #{model_forward.4} parent=0 // loop_header
    %s14 = sphi 0, %s18
    %p15 = scmp.ge.s32.totalorder %s14, 4
    %s24 = sphi 0, %s26
    %s27 = sphi 0, %s24
    %s28 = sphi 0, %s27
    %s44 = sphi 0, %s28
    %s48 = sphi 0, %s48
    %s50 = sphi 0, %s48
    %s51 = sphi 0, %s50
    %s65 = sphi 0, %s51
    %s69 = sphi 0, %s69
    %s71 = sphi 0, %s69
    %s72 = sphi 0, %s71
    %s86 = sphi 0, %s72
    %s90 = sphi 0, %s90
    %s92 = sphi 0, %s90
    %s93 = sphi 0, %s92
    %s107 = sphi 0, %s93
    %s111 = sphi 0, %s111
    %s113 = sphi 0, %s111
    %s114 = sphi 0, %s113
    %s128 = sphi 0, %s114
    %s134 = sphi 0, %s136
    %s137 = sphi 0, %s134
    %s138 = sphi 0, %s137
    %s154 = sphi 0, %s138
    %s160 = sphi 0, %s162
    %s163 = sphi 0, %s160
    %s164 = sphi 0, %s163
    %s180 = sphi 0, %s164
    %s186 = sphi 0, %s188
    %s189 = sphi 0, %s186
    %s190 = sphi 0, %s189
    %s206 = sphi 0, %s190
  $region4: #{model_forward.4} parent=0 // loop_header_branch
    %17 = sbr.rel (%p15) target = $region8
  $region5: #{model_forward.4} parent=0 // loop_body
    %s19 = ssub.s32 %s14, 1
    %s20 = ssub.s32 %s14, 2
    %s21 = sadd.s32 %s14, 1
    %s22 = ssub.s32 %s14, %s21
    %p23 = scmp.eq.s32.totalorder %s22, 0
    %s25 = sadd.s32 %s24, 1
    %s26 = scalar_select %p23, %s24, %s25
    %p29 = pneg %p23
    %p30 = scmp.eq.s32.totalorder %s14, 1
    %p31 = por %p29, %p30
    %p32 = scmp.ne.s32.totalorder %s24, %s27
    %p33 = scmp.eq.s32.totalorder %s14, 0
    %p34 = por %p32, %p33
    %p35 = scmp.ne.s32.totalorder %s24, %s27
    %p36 = scmp.eq.s32.totalorder %s19, 1
    %p37 = por %p35, %p36
    %p38 = scmp.ne.s32.totalorder %s27, %s28
    %p39 = scmp.eq.s32.totalorder %s19, 0
    %p40 = por %p38, %p39
    %p41 = scmp.ne.s32.totalorder %s27, %s28
    %p42 = scmp.eq.s32.totalorder %s20, 1
    %p43 = por %p41, %p42
    %p45 = scmp.ne.s32.totalorder %s28, %s44
    %p46 = scmp.eq.s32.totalorder %s20, 0
    %p47 = por %p45, %p46
    %s49 = sadd.s32 %s48, 1
    %p52 = scmp.eq.s32.totalorder %s14, 1
    %p53 = scmp.ne.s32.totalorder %s48, %s50
    %p54 = scmp.eq.s32.totalorder %s14, 0
    %p55 = por %p53, %p54
    %p56 = scmp.ne.s32.totalorder %s48, %s50
    %p57 = scmp.eq.s32.totalorder %s19, 1
    %p58 = por %p56, %p57
    %p59 = scmp.ne.s32.totalorder %s50, %s51
    %p60 = scmp.eq.s32.totalorder %s19, 0
    %p61 = por %p59, %p60
    %p62 = scmp.ne.s32.totalorder %s50, %s51
    %p63 = scmp.eq.s32.totalorder %s20, 1
    %p64 = por %p62, %p63
    %p66 = scmp.ne.s32.totalorder %s51, %s65
    %p67 = scmp.eq.s32.totalorder %s20, 0
    %p68 = por %p66, %p67
    %s70 = sadd.s32 %s69, 1
    %p73 = scmp.eq.s32.totalorder %s14, 1
    %p74 = scmp.ne.s32.totalorder %s69, %s71
    %p75 = scmp.eq.s32.totalorder %s14, 0
    %p76 = por %p74, %p75
    %p77 = scmp.ne.s32.totalorder %s69, %s71
    %p78 = scmp.eq.s32.totalorder %s19, 1
    %p79 = por %p77, %p78
    %p80 = scmp.ne.s32.totalorder %s71, %s72
    %p81 = scmp.eq.s32.totalorder %s19, 0
    %p82 = por %p80, %p81
    %p83 = scmp.ne.s32.totalorder %s71, %s72
    %p84 = scmp.eq.s32.totalorder %s20, 1
    %p85 = por %p83, %p84
    %p87 = scmp.ne.s32.totalorder %s72, %s86
    %p88 = scmp.eq.s32.totalorder %s20, 0
    %p89 = por %p87, %p88
    %s91 = sadd.s32 %s90, 1
    %p94 = scmp.eq.s32.totalorder %s14, 1
    %p95 = scmp.ne.s32.totalorder %s90, %s92
    %p96 = scmp.eq.s32.totalorder %s14, 0
    %p97 = por %p95, %p96
    %p98 = scmp.ne.s32.totalorder %s90, %s92
    %p99 = scmp.eq.s32.totalorder %s19, 1
    %p100 = por %p98, %p99
    %p101 = scmp.ne.s32.totalorder %s92, %s93
    %p102 = scmp.eq.s32.totalorder %s19, 0
    %p103 = por %p101, %p102
    %p104 = scmp.ne.s32.totalorder %s92, %s93
    %p105 = scmp.eq.s32.totalorder %s20, 1
    %p106 = por %p104, %p105
    %p108 = scmp.ne.s32.totalorder %s93, %s107
    %p109 = scmp.eq.s32.totalorder %s20, 0
    %p110 = por %p108, %p109
    %s112 = sadd.s32 %s111, 1
    %p115 = scmp.eq.s32.totalorder %s14, 1
    %p116 = scmp.ne.s32.totalorder %s111, %s113
    %p117 = scmp.eq.s32.totalorder %s14, 0
    %p118 = por %p116, %p117
    %p119 = scmp.ne.s32.totalorder %s111, %s113
    %p120 = scmp.eq.s32.totalorder %s19, 1
    %p121 = por %p119, %p120
    %p122 = scmp.ne.s32.totalorder %s113, %s114
    %p123 = scmp.eq.s32.totalorder %s19, 0
    %p124 = por %p122, %p123
    %p125 = scmp.ne.s32.totalorder %s113, %s114
    %p126 = scmp.eq.s32.totalorder %s20, 1
    %p127 = por %p125, %p126
    %p129 = scmp.ne.s32.totalorder %s114, %s128
    %p130 = scmp.eq.s32.totalorder %s20, 0
    %p131 = por %p129, %p130
    %s132 = ssub.s32 %s14, %s21
    %p133 = scmp.eq.s32.totalorder %s132, 0
    %s135 = sadd.s32 %s134, 1
    %s136 = scalar_select %p133, %s134, %s135
    %p139 = pneg %p133
    %p140 = scmp.eq.s32.totalorder %s14, 1
    %p141 = por %p139, %p140
    %p142 = scmp.ne.s32.totalorder %s134, %s137
    %p143 = scmp.eq.s32.totalorder %s14, 0
    %p144 = por %p142, %p143
    %p145 = scmp.ne.s32.totalorder %s134, %s137
    %p146 = scmp.eq.s32.totalorder %s19, 1
    %p147 = por %p145, %p146
    %p148 = scmp.ne.s32.totalorder %s137, %s138
    %p149 = scmp.eq.s32.totalorder %s19, 0
    %p150 = por %p148, %p149
    %p151 = scmp.ne.s32.totalorder %s137, %s138
    %p152 = scmp.eq.s32.totalorder %s20, 1
    %p153 = por %p151, %p152
    %p155 = scmp.ne.s32.totalorder %s138, %s154
    %p156 = scmp.eq.s32.totalorder %s20, 0
    %p157 = por %p155, %p156
    %s158 = ssub.s32 %s14, %s21
    %p159 = scmp.eq.s32.totalorder %s158, 0
    %s161 = sadd.s32 %s160, 1
    %s162 = scalar_select %p159, %s160, %s161
    %p165 = pneg %p159
    %p166 = scmp.eq.s32.totalorder %s14, 1
    %p167 = por %p165, %p166
    %p168 = scmp.ne.s32.totalorder %s160, %s163
    %p169 = scmp.eq.s32.totalorder %s14, 0
    %p170 = por %p168, %p169
    %p171 = scmp.ne.s32.totalorder %s160, %s163
    %p172 = scmp.eq.s32.totalorder %s19, 1
    %p173 = por %p171, %p172
    %p174 = scmp.ne.s32.totalorder %s163, %s164
    %p175 = scmp.eq.s32.totalorder %s19, 0
    %p176 = por %p174, %p175
    %p177 = scmp.ne.s32.totalorder %s163, %s164
    %p178 = scmp.eq.s32.totalorder %s20, 1
    %p179 = por %p177, %p178
    %p181 = scmp.ne.s32.totalorder %s164, %s180
    %p182 = scmp.eq.s32.totalorder %s20, 0
    %p183 = por %p181, %p182
    %s184 = ssub.s32 %s14, %s21
    %p185 = scmp.eq.s32.totalorder %s184, 0
    %s187 = sadd.s32 %s186, 1
    %s188 = scalar_select %p185, %s186, %s187
    %p191 = pneg %p185
    %p192 = scmp.eq.s32.totalorder %s14, 1
    %p193 = por %p191, %p192
    %p194 = scmp.ne.s32.totalorder %s186, %s189
    %p195 = scmp.eq.s32.totalorder %s14, 0
    %p196 = por %p194, %p195
    %p197 = scmp.ne.s32.totalorder %s186, %s189
    %p198 = scmp.eq.s32.totalorder %s19, 1
    %p199 = por %p197, %p198
    %p200 = scmp.ne.s32.totalorder %s189, %s190
    %p201 = scmp.eq.s32.totalorder %s19, 0
    %p202 = por %p200, %p201
    %p203 = scmp.ne.s32.totalorder %s189, %s190
    %p204 = scmp.eq.s32.totalorder %s20, 1
    %p205 = por %p203, %p204
    %p207 = scmp.ne.s32.totalorder %s190, %s206
    %p208 = scmp.eq.s32.totalorder %s20, 0
    %p209 = por %p207, %p208
    %p210 = scmp.le.s32.totalorder 1, %s14
    %p211 = scmp.lt.s32.totalorder %s14, 3
    %p212 = pnand %p210, %p211
    %p213 = pneg %p212
    // Predicated region
    $region9: #{model_forward.4} parent=5 // pred_check
      _
    $region10: #{model_forward.4} parent=5 // pred_check_branch
      %215 = sbr.rel (%p212) target = $region12
    $region11: #{model_forward.4} parent=5 // pred_region
      %s216 = ssub.s32 %s14, 1
      // Predicated region
      $region13: #{model_forward.4} parent=11 // pred_check
        %p217 = pneg %p61
      $region14: #{model_forward.4} parent=11 // pred_check_branch
        %219 = sbr.rel (%p217) target = $region16
      $region15: #{model_forward.4} parent=11 // pred_region
        _
      $region16: #{model_forward.4} parent=11 // pred_fallthru
        _
      // Predicated region
      $region17: #{model_forward.4} parent=11 // pred_check
        %p220 = pneg %p82
      $region18: #{model_forward.4} parent=11 // pred_check_branch
        %222 = sbr.rel (%p220) target = $region20
      $region19: #{model_forward.4} parent=11 // pred_region
        _
      $region20: #{model_forward.4} parent=11 // pred_fallthru
        _
      // Predicated region
      $region21: #{model_forward.4} parent=11 // pred_check
        %p223 = pneg %p103
      $region22: #{model_forward.4} parent=11 // pred_check_branch
        %225 = sbr.rel (%p223) target = $region24
      $region23: #{model_forward.4} parent=11 // pred_region
        _
      $region24: #{model_forward.4} parent=11 // pred_fallthru
        _
      // Predicated region
      $region25: #{model_forward.4} parent=11 // pred_check
        %p226 = pneg %p124
      $region26: #{model_forward.4} parent=11 // pred_check_branch
        %228 = sbr.rel (%p226) target = $region28
      $region27: #{model_forward.4} parent=11 // pred_region
        _
      $region28: #{model_forward.4} parent=11 // pred_fallthru
        _
    $region12: #{model_forward.4} parent=5 // pred_fallthru
      _
    %p229 = scmp.lt.s32.totalorder %s14, 2
    // Predicated region
    $region29: #{model_forward.4} parent=5 // pred_check
      %p230 = pneg %p229
    $region30: #{model_forward.4} parent=5 // pred_check_branch
      %232 = sbr.rel (%p230) target = $region32
    $region31: #{model_forward.4} parent=5 // pred_region
      // Predicated region
      $region33: #{model_forward.4} parent=31 // pred_check
        %p233 = pneg %p34
      $region34: #{model_forward.4} parent=31 // pred_check_branch
        %235 = sbr.rel (%p233) target = $region36
      $region35: #{model_forward.4} parent=31 // pred_region
        %p236 = scmp.lt.s32.totalorder %s14, 1
        %s237 = scalar_select %p236, %s14, 1
        %s238 = smul.addr %s237, 16
        %s239 = smul.addr %s238, 8
        %s240 = scalar_lea.vmem %s0, %s239
      $region36: #{model_forward.4} parent=31 // pred_fallthru
        _
    $region32: #{model_forward.4} parent=5 // pred_fallthru
      _
    %p241 = scmp.le.s32.totalorder 1, %s14
    %p242 = scmp.lt.s32.totalorder %s14, 3
    %p243 = pnand %p241, %p242
    %p244 = pneg %p243
    // Predicated region
    $region37: #{model_forward.4} parent=5 // pred_check
      _
    $region38: #{model_forward.4} parent=5 // pred_check_branch
      %246 = sbr.rel (%p243) target = $region40
    $region39: #{model_forward.4} parent=5 // pred_region
      %s247 = ssub.s32 %s14, 1
      %p248 = scmp.lt.s32.totalorder %s19, 1
      %s249 = scalar_select %p248, %s19, 1
      %s250 = smul.addr %s249, 16
      %s251 = smul.addr %s250, 8
      %s252 = scalar_lea.vmem %s0, %s251
      %p253 = pneg %p40
      %p254 = pneg %p37
      %p255 = pneg %p61
      %p256 = pneg %p58
      %p257 = pneg %p82
      %p258 = pneg %p79
      %p259 = pneg %p103
      %p260 = pneg %p100
      %p261 = pneg %p124
      %p262 = pneg %p121
      %p263 = pneg %p150
      %p264 = pneg %p147
      %p265 = scmp.lt.s32.totalorder %s19, 1
      %s266 = scalar_select %p265, %s19, 1
      %s267 = smul.addr %s266, 16
      %s268 = smul.addr %s267, 4
      %s269 = scalar_lea.vmem %s5, %s268
      %p270 = pneg %p176
      %p271 = pneg %p173
      %p272 = scmp.lt.s32.totalorder %s19, 1
      %s273 = scalar_select %p272, %s19, 1
      %s274 = smul.addr %s273, 2
      %s275 = scalar_lea.vmem %s6, %s274
      %p276 = pneg %p202
      %p277 = pneg %p199
      %p278 = scmp.lt.s32.totalorder %s19, 1
      %s279 = scalar_select %p278, %s19, 1
      %s280 = smul.addr %s279, 2
      %s281 = scalar_lea.vmem %s7, %s280
      %p282 = scmp.lt.s32.totalorder %s19, 1
      %s283 = scalar_select %p282, %s19, 1
      %s284 = smul.addr %s283, 16
      %s285 = smul.addr %s284, 8
      %s286 = scalar_lea.vmem %s0, %s285
      %p287 = scmp.lt.s32.totalorder %s19, 1
      %s288 = scalar_select %p287, %s19, 1
      %s289 = smul.addr %s288, 16
      %s290 = smul.addr %s289, 4
      %s291 = scalar_lea.vmem %s5, %s290
      %p292 = scmp.lt.s32.totalorder %s19, 1
      %s293 = scalar_select %p292, %s19, 1
      %s294 = smul.addr %s293, 2
      %s295 = scalar_lea.vmem %s6, %s294
      %p296 = scmp.lt.s32.totalorder %s19, 1
      %s297 = scalar_select %p296, %s19, 1
      %s298 = smul.addr %s297, 2
      %s299 = scalar_lea.vmem %s7, %s298
      %v300 = vld [vmem:[%s286] sm:$0xff]
      %v301 = vld [vmem:[%s286 + $0x8] sm:$0xff]
      %v302 = vld [vmem:[%s286 + $0x10] sm:$0xff]
      %v303 = vld [vmem:[%s286 + $0x18] sm:$0xff]
      %v304 = vld [vmem:[%s286 + $0x20] sm:$0xff]
      %v305 = vld [vmem:[%s286 + $0x28] sm:$0xff]
      %v306 = vld [vmem:[%s286 + $0x30] sm:$0xff]
      %v307 = vld [vmem:[%s286 + $0x38] sm:$0xff]
      %v308 = vld [vmem:[%s286 + $0x40] sm:$0xff]
      %v309 = vld [vmem:[%s286 + $0x48] sm:$0xff]
      %v310 = vld [vmem:[%s286 + $0x50] sm:$0xff]
      %v311 = vld [vmem:[%s286 + $0x58] sm:$0xff]
      %v312 = vld [vmem:[%s286 + $0x60] sm:$0xff]
      %v313 = vld [vmem:[%s286 + $0x68] sm:$0xff]
      %v314 = vld [vmem:[%s286 + $0x70] sm:$0xff]
      %v315 = vld [vmem:[%s286 + $0x78] sm:$0xff]
      %v316 = vld [vmem:[%s1] sm:$0x3]
      %v318 = vperm.slane %v316, 0
      %v319 = vperm.slane %v316, 1
      %v322 = vmul.f32 %v300, %v318
      %v323 = vmul.f32 %v301, %v319
      %v324 = vmul.f32 %v302, %v318
      %v325 = vmul.f32 %v303, %v319
      %v326 = vmul.f32 %v304, %v318
      %v327 = vmul.f32 %v305, %v319
      %v328 = vmul.f32 %v306, %v318
      %v329 = vmul.f32 %v307, %v319
      %v330 = vmul.f32 %v308, %v318
      %v331 = vmul.f32 %v309, %v319
      %v332 = vmul.f32 %v310, %v318
      %v333 = vmul.f32 %v311, %v319
      %v334 = vmul.f32 %v312, %v318
      %v335 = vmul.f32 %v313, %v319
      %v336 = vmul.f32 %v314, %v318
      %v337 = vmul.f32 %v315, %v319
      %v338 = vld [vmem:[%s2] sm:$0x3]
      %v340 = vperm.slane %v338, 0
      %v341 = vperm.slane %v338, 1
      %v344 = vadd.f32 %v322, %v340
      %v345 = vadd.f32 %v323, %v341
      %v346 = vadd.f32 %v324, %v340
      %v347 = vadd.f32 %v325, %v341
      %v348 = vadd.f32 %v326, %v340
      %v349 = vadd.f32 %v327, %v341
      %v350 = vadd.f32 %v328, %v340
      %v351 = vadd.f32 %v329, %v341
      %v352 = vadd.f32 %v330, %v340
      %v353 = vadd.f32 %v331, %v341
      %v354 = vadd.f32 %v332, %v340
      %v355 = vadd.f32 %v333, %v341
      %v356 = vadd.f32 %v334, %v340
      %v357 = vadd.f32 %v335, %v341
      %v358 = vadd.f32 %v336, %v340
      %v359 = vadd.f32 %v337, %v341
      %v360 = vmax.f32 %v344, 0.0
      %v361 = vmax.f32 %v345, 0.0
      %v362 = vmax.f32 %v346, 0.0
      %v363 = vmax.f32 %v347, 0.0
      %v364 = vmax.f32 %v348, 0.0
      %v365 = vmax.f32 %v349, 0.0
      %v366 = vmax.f32 %v350, 0.0
      %v367 = vmax.f32 %v351, 0.0
      %v368 = vmax.f32 %v352, 0.0
      %v369 = vmax.f32 %v353, 0.0
      %v370 = vmax.f32 %v354, 0.0
      %v371 = vmax.f32 %v355, 0.0
      %v372 = vmax.f32 %v356, 0.0
      %v373 = vmax.f32 %v357, 0.0
      %v374 = vmax.f32 %v358, 0.0
      %v375 = vmax.f32 %v359, 0.0
      %376 = vst [vmem:[#allocation2] sm:$0xff] 0.0
      %377 = vst [vmem:[#allocation2 + $0x8] sm:$0xff] 0.0
      %378 = vst [vmem:[#allocation2 + $0x10] sm:$0x3] 0.0
      %379 = vst [vmem:[#allocation2 + $0x18] sm:$0x3] 0.0
      %380 = vst [vmem:[#allocation2 + $0x20] sm:$0xff] 0.0
      %381 = vst [vmem:[#allocation2 + $0x28] sm:$0xff] 0.0
      %382 = vst [vmem:[#allocation2 + $0x30] sm:$0x3] 0.0
      %383 = vst [vmem:[#allocation2 + $0x38] sm:$0x3] 0.0
      %384 = vst [vmem:[#allocation2 + $0x40] sm:$0xff] 0.0
      %385 = vst [vmem:[#allocation2 + $0x48] sm:$0xff] 0.0
      %386 = vst [vmem:[#allocation2 + $0x50] sm:$0x3] 0.0
      %387 = vst [vmem:[#allocation2 + $0x58] sm:$0x3] 0.0
      %388 = vst [vmem:[#allocation2 + $0x60] sm:$0xff] 0.0
      %389 = vst [vmem:[#allocation2 + $0x68] sm:$0xff] 0.0
      %390 = vst [vmem:[#allocation2 + $0x70] sm:$0x3] 0.0
      %391 = vst [vmem:[#allocation2 + $0x78] sm:$0x3] 0.0
      %392 = vst [vmem:[#allocation2 + $0x80] sm:$0xff] 0.0
      %393 = vst [vmem:[#allocation2 + $0x88] sm:$0xff] 0.0
      %394 = vst [vmem:[#allocation2 + $0x90] sm:$0x3] 0.0
      %395 = vst [vmem:[#allocation2 + $0x98] sm:$0x3] 0.0
      %396 = vst [vmem:[#allocation2 + $0xa0] sm:$0xff] 0.0
      %397 = vst [vmem:[#allocation2 + $0xa8] sm:$0xff] 0.0
      %398 = vst [vmem:[#allocation2 + $0xb0] sm:$0x3] 0.0
      %399 = vst [vmem:[#allocation2 + $0xb8] sm:$0x3] 0.0
      %400 = vst [vmem:[#allocation2 + $0xc0] sm:$0xff] 0.0
      %401 = vst [vmem:[#allocation2 + $0xc8] sm:$0xff] 0.0
      %402 = vst [vmem:[#allocation2 + $0xd0] sm:$0x3] 0.0
      %403 = vst [vmem:[#allocation2 + $0xd8] sm:$0x3] 0.0
      %404 = vst [vmem:[#allocation2 + $0xe0] sm:$0xff] 0.0
      %405 = vst [vmem:[#allocation2 + $0xe8] sm:$0xff] 0.0
      %406 = vst [vmem:[#allocation2 + $0xf0] sm:$0x3] 0.0
      %407 = vst [vmem:[#allocation2 + $0xf8] sm:$0x3] 0.0
      %408 = vst [vmem:[#allocation2 + $0x100] sm:$0xff] 0.0
      %409 = vst [vmem:[#allocation2 + $0x108] sm:$0xff] 0.0
      %410 = vst [vmem:[#allocation2 + $0x110] sm:$0x3] 0.0
      %411 = vst [vmem:[#allocation2 + $0x118] sm:$0x3] 0.0
      %412 = vst [vmem:[#allocation2 + $0x120] sm:$0xff] 0.0
      %413 = vst [vmem:[#allocation2 + $0x128] sm:$0xff] 0.0
      %414 = vst [vmem:[#allocation2 + $0x130] sm:$0x3] 0.0
      %415 = vst [vmem:[#allocation2 + $0x138] sm:$0x3] 0.0
      %v432 = vrot.slane %v360, 7
      %v433 = vrot.slane %v361, 7
      %v434 = vrot.slane %v362, 7
      %v435 = vrot.slane %v363, 7
      %v436 = vrot.slane %v364, 7
      %v437 = vrot.slane %v365, 7
      %v438 = vrot.slane %v366, 7
      %v439 = vrot.slane %v367, 7
      %v440 = vrot.slane %v368, 7
      %v441 = vrot.slane %v369, 7
      %v442 = vrot.slane %v370, 7
      %v443 = vrot.slane %v371, 7
      %v444 = vrot.slane %v372, 7
      %v445 = vrot.slane %v373, 7
      %v446 = vrot.slane %v374, 7
      %v447 = vrot.slane %v375, 7
      %s464 = scalar_lea.vmem [#allocation2], 32
      %465 = vst [vmem:[%s464] sm:$0xfe] %v432
      %466 = vst [vmem:[%s464 + $0x8] sm:$0xfe] %v433
      %467 = vst [vmem:[%s464 + $0x10] sm:$0x1] %v432
      %468 = vst [vmem:[%s464 + $0x18] sm:$0x1] %v433
      %469 = vst [vmem:[%s464 + $0x20] sm:$0xfe] %v434
      %470 = vst [vmem:[%s464 + $0x28] sm:$0xfe] %v435
      %471 = vst [vmem:[%s464 + $0x30] sm:$0x1] %v434
      %472 = vst [vmem:[%s464 + $0x38] sm:$0x1] %v435
      %473 = vst [vmem:[%s464 + $0x40] sm:$0xfe] %v436
      %474 = vst [vmem:[%s464 + $0x48] sm:$0xfe] %v437
      %475 = vst [vmem:[%s464 + $0x50] sm:$0x1] %v436
      %476 = vst [vmem:[%s464 + $0x58] sm:$0x1] %v437
      %477 = vst [vmem:[%s464 + $0x60] sm:$0xfe] %v438
      %478 = vst [vmem:[%s464 + $0x68] sm:$0xfe] %v439
      %479 = vst [vmem:[%s464 + $0x70] sm:$0x1] %v438
      %480 = vst [vmem:[%s464 + $0x78] sm:$0x1] %v439
      %481 = vst [vmem:[%s464 + $0x80] sm:$0xfe] %v440
      %482 = vst [vmem:[%s464 + $0x88] sm:$0xfe] %v441
      %483 = vst [vmem:[%s464 + $0x90] sm:$0x1] %v440
      %484 = vst [vmem:[%s464 + $0x98] sm:$0x1] %v441
      %485 = vst [vmem:[%s464 + $0xa0] sm:$0xfe] %v442
      %486 = vst [vmem:[%s464 + $0xa8] sm:$0xfe] %v443
      %487 = vst [vmem:[%s464 + $0xb0] sm:$0x1] %v442
      %488 = vst [vmem:[%s464 + $0xb8] sm:$0x1] %v443
      %489 = vst [vmem:[%s464 + $0xc0] sm:$0xfe] %v444
      %490 = vst [vmem:[%s464 + $0xc8] sm:$0xfe] %v445
      %491 = vst [vmem:[%s464 + $0xd0] sm:$0x1] %v444
      %492 = vst [vmem:[%s464 + $0xd8] sm:$0x1] %v445
      %493 = vst [vmem:[%s464 + $0xe0] sm:$0xfe] %v446
      %494 = vst [vmem:[%s464 + $0xe8] sm:$0xfe] %v447
      %495 = vst [vmem:[%s464 + $0xf0] sm:$0x1] %v446
      %496 = vst [vmem:[%s464 + $0xf8] sm:$0x1] %v447
      %497 = vst [vmem:[#allocation3] sm:$0xff] 0.0
      %498 = vst [vmem:[#allocation3 + $0x8] sm:$0xff] 0.0
      %499 = vst [vmem:[#allocation3 + $0x10] sm:$0xff] 0.0
      %500 = vst [vmem:[#allocation3 + $0x18] sm:$0xff] 0.0
      %501 = vst [vmem:[#allocation3 + $0x20] sm:$0xff] 0.0
      %502 = vst [vmem:[#allocation3 + $0x28] sm:$0xff] 0.0
      %503 = vst [vmem:[#allocation3 + $0x30] sm:$0xff] 0.0
      %504 = vst [vmem:[#allocation3 + $0x38] sm:$0xff] 0.0
      %505 = vst [vmem:[#allocation3 + $0x40] sm:$0xff] 0.0
      %506 = vst [vmem:[#allocation3 + $0x48] sm:$0xff] 0.0
      %507 = vst [vmem:[#allocation3 + $0x50] sm:$0xff] 0.0
      %508 = vst [vmem:[#allocation3 + $0x58] sm:$0xff] 0.0
      %509 = vst [vmem:[#allocation3 + $0x60] sm:$0xff] 0.0
      %510 = vst [vmem:[#allocation3 + $0x68] sm:$0xff] 0.0
      %511 = vst [vmem:[#allocation3 + $0x70] sm:$0xff] 0.0
      %512 = vst [vmem:[#allocation3 + $0x78] sm:$0xff] 0.0
      %v513 = vld [vmem:[#allocation2] sm:$0xff]
      %v514 = vld [vmem:[#allocation2 + $0x8] sm:$0xff]
      %v515 = vld [vmem:[#allocation2 + $0x20] sm:$0xff]
      %v516 = vld [vmem:[#allocation2 + $0x28] sm:$0xff]
      %v517 = vld [vmem:[#allocation2 + $0x40] sm:$0xff]
      %v518 = vld [vmem:[#allocation2 + $0x48] sm:$0xff]
      %v519 = vld [vmem:[#allocation2 + $0x60] sm:$0xff]
      %v520 = vld [vmem:[#allocation2 + $0x68] sm:$0xff]
      %v521 = vld [vmem:[#allocation2 + $0x80] sm:$0xff]
      %v522 = vld [vmem:[#allocation2 + $0x88] sm:$0xff]
      %v523 = vld [vmem:[#allocation2 + $0xa0] sm:$0xff]
      %v524 = vld [vmem:[#allocation2 + $0xa8] sm:$0xff]
      %v525 = vld [vmem:[#allocation2 + $0xc0] sm:$0xff]
      %v526 = vld [vmem:[#allocation2 + $0xc8] sm:$0xff]
      %v527 = vld [vmem:[#allocation2 + $0xe0] sm:$0xff]
      %v528 = vld [vmem:[#allocation2 + $0xe8] sm:$0xff]
      %v529 = vld [vmem:[#allocation3] sm:$0xff]
      %v530 = vld [vmem:[#allocation3 + $0x8] sm:$0xff]
      %v531 = vld [vmem:[#allocation3 + $0x10] sm:$0xff]
      %v532 = vld [vmem:[#allocation3 + $0x18] sm:$0xff]
      %v533 = vld [vmem:[#allocation3 + $0x20] sm:$0xff]
      %v534 = vld [vmem:[#allocation3 + $0x28] sm:$0xff]
      %v535 = vld [vmem:[#allocation3 + $0x30] sm:$0xff]
      %v536 = vld [vmem:[#allocation3 + $0x38] sm:$0xff]
      %v537 = vld [vmem:[#allocation3 + $0x40] sm:$0xff]
      %v538 = vld [vmem:[#allocation3 + $0x48] sm:$0xff]
      %v539 = vld [vmem:[#allocation3 + $0x50] sm:$0xff]
      %v540 = vld [vmem:[#allocation3 + $0x58] sm:$0xff]
      %v541 = vld [vmem:[#allocation3 + $0x60] sm:$0xff]
      %v542 = vld [vmem:[#allocation3 + $0x68] sm:$0xff]
      %v543 = vld [vmem:[#allocation3 + $0x70] sm:$0xff]
      %v544 = vld [vmem:[#allocation3 + $0x78] sm:$0xff]
      %v545 = vpack.c.bf16 %v515, %v513
      %v546 = vpack.c.bf16 %v516, %v514
      %v547 = vpack.c.bf16 %v519, %v517
      %v548 = vpack.c.bf16 %v520, %v518
      %v549 = vpack.c.bf16 %v523, %v521
      %v550 = vpack.c.bf16 %v524, %v522
      %v551 = vpack.c.bf16 %v527, %v525
      %v552 = vpack.c.bf16 %v528, %v526
      %v553 = vld [vmem:[%s3] sm:$0xff]
      %v554 = vld [vmem:[%s3 + $0x8] sm:$0xff]
      %v555 = vld [vmem:[%s3 + $0x10] sm:$0xff]
      %v556 = vld [vmem:[%s3 + $0x18] sm:$0xff]
      %v557 = vld [vmem:[%s3 + $0x20] sm:$0xff]
      %v558 = vld [vmem:[%s3 + $0x28] sm:$0xff]
      %v559 = vld [vmem:[%s3 + $0x30] sm:$0xff]
      %v560 = vld [vmem:[%s3 + $0x38] sm:$0xff]
      %v561 = vld [vmem:[%s3 + $0x40] sm:$0xff]
      %v562 = vld [vmem:[%s3 + $0x48] sm:$0xff]
      %v563 = vld [vmem:[%s3 + $0x50] sm:$0xff]
      %v564 = vld [vmem:[%s3 + $0x58] sm:$0xff]
      %v565 = vld [vmem:[%s3 + $0x60] sm:$0xff]
      %v566 = vld [vmem:[%s3 + $0x68] sm:$0xff]
      %v567 = vld [vmem:[%s3 + $0x70] sm:$0xff]
      %v568 = vld [vmem:[%s3 + $0x78] sm:$0xff]
      %v569 = vld [vmem:[%s3 + $0x80] sm:$0xff]
      %v570 = vld [vmem:[%s3 + $0x88] sm:$0xff]
      %v571 = vld [vmem:[%s3 + $0x90] sm:$0xff]
      %v572 = vld [vmem:[%s3 + $0x98] sm:$0xff]
      %v573 = vld [vmem:[%s3 + $0xa0] sm:$0xff]
      %v574 = vld [vmem:[%s3 + $0xa8] sm:$0xff]
      %v575 = vld [vmem:[%s3 + $0xb0] sm:$0xff]
      %v576 = vld [vmem:[%s3 + $0xb8] sm:$0xff]
      %v577 = vld [vmem:[%s3 + $0xc0] sm:$0xff]
      %v578 = vld [vmem:[%s3 + $0xc8] sm:$0xff]
      %v579 = vld [vmem:[%s3 + $0xd0] sm:$0xff]
      %v580 = vld [vmem:[%s3 + $0xd8] sm:$0xff]
      %v581 = vld [vmem:[%s3 + $0xe0] sm:$0xff]
      %v582 = vld [vmem:[%s3 + $0xe8] sm:$0xff]
      %v583 = vld [vmem:[%s3 + $0xf0] sm:$0xff]
      %v584 = vld [vmem:[%s3 + $0xf8] sm:$0xff]
      %v617 = vunpack.c.l.b16 %v553
      %v618 = vunpack.c.h.b16 %v553
      %v619 = vunpack.c.l.b16 %v554
      %v620 = vunpack.c.h.b16 %v554
      %v621 = vunpack.c.l.b16 %v555
      %v622 = vunpack.c.h.b16 %v555
      %v623 = vunpack.c.l.b16 %v556
      %v624 = vunpack.c.h.b16 %v556
      %v625 = vunpack.c.l.b16 %v557
      %v626 = vunpack.c.h.b16 %v557
      %v627 = vunpack.c.l.b16 %v558
      %v628 = vunpack.c.h.b16 %v558
      %v629 = vunpack.c.l.b16 %v559
      %v630 = vunpack.c.h.b16 %v559
      %v631 = vunpack.c.l.b16 %v560
      %v632 = vunpack.c.h.b16 %v560
      %v633 = vunpack.c.l.b16 %v561
      %v634 = vunpack.c.h.b16 %v561
      %v635 = vunpack.c.l.b16 %v562
      %v636 = vunpack.c.h.b16 %v562
      %v637 = vunpack.c.l.b16 %v563
      %v638 = vunpack.c.h.b16 %v563
      %v639 = vunpack.c.l.b16 %v564
      %v640 = vunpack.c.h.b16 %v564
      %v641 = vunpack.c.l.b16 %v565
      %v642 = vunpack.c.h.b16 %v565
      %v643 = vunpack.c.l.b16 %v566
      %v644 = vunpack.c.h.b16 %v566
      %v645 = vunpack.c.l.b16 %v567
      %v646 = vunpack.c.h.b16 %v567
      %v647 = vunpack.c.l.b16 %v568
      %v648 = vunpack.c.h.b16 %v568
      %v649 = vunpack.c.l.b16 %v569
      %v650 = vunpack.c.h.b16 %v569
      %v651 = vunpack.c.l.b16 %v570
      %v652 = vunpack.c.h.b16 %v570
      %v653 = vunpack.c.l.b16 %v571
      %v654 = vunpack.c.h.b16 %v571
      %v655 = vunpack.c.l.b16 %v572
      %v656 = vunpack.c.h.b16 %v572
      %v657 = vunpack.c.l.b16 %v573
      %v658 = vunpack.c.h.b16 %v573
      %v659 = vunpack.c.l.b16 %v574
      %v660 = vunpack.c.h.b16 %v574
      %v661 = vunpack.c.l.b16 %v575
      %v662 = vunpack.c.h.b16 %v575
      %v663 = vunpack.c.l.b16 %v576
      %v664 = vunpack.c.h.b16 %v576
      %v665 = vunpack.c.l.b16 %v577
      %v666 = vunpack.c.h.b16 %v577
      %v667 = vunpack.c.l.b16 %v578
      %v668 = vunpack.c.h.b16 %v578
      %v669 = vunpack.c.l.b16 %v579
      %v670 = vunpack.c.h.b16 %v579
      %v671 = vunpack.c.l.b16 %v580
      %v672 = vunpack.c.h.b16 %v580
      %v673 = vunpack.c.l.b16 %v581
      %v674 = vunpack.c.h.b16 %v581
      %v675 = vunpack.c.l.b16 %v582
      %v676 = vunpack.c.h.b16 %v582
      %v677 = vunpack.c.l.b16 %v583
      %v678 = vunpack.c.h.b16 %v583
      %v679 = vunpack.c.l.b16 %v584
      %v680 = vunpack.c.h.b16 %v584
      %v681 = vpack.c.b16 %v619, %v617
      %v682 = vpack.c.b16 %v620, %v618
      %v683 = vpack.c.b16 %v623, %v621
      %v684 = vpack.c.b16 %v624, %v622
      %v685 = vpack.c.b16 %v627, %v625
      %v686 = vpack.c.b16 %v628, %v626
      %v687 = vpack.c.b16 %v631, %v629
      %v688 = vpack.c.b16 %v632, %v630
      %v689 = vpack.c.b16 %v635, %v633
      %v690 = vpack.c.b16 %v636, %v634
      %v691 = vpack.c.b16 %v639, %v637
      %v692 = vpack.c.b16 %v640, %v638
      %v693 = vpack.c.b16 %v643, %v641
      %v694 = vpack.c.b16 %v644, %v642
      %v695 = vpack.c.b16 %v647, %v645
      %v696 = vpack.c.b16 %v648, %v646
      %v697 = vpack.c.b16 %v651, %v649
      %v698 = vpack.c.b16 %v652, %v650
      %v699 = vpack.c.b16 %v655, %v653
      %v700 = vpack.c.b16 %v656, %v654
      %v701 = vpack.c.b16 %v659, %v657
      %v702 = vpack.c.b16 %v660, %v658
      %v703 = vpack.c.b16 %v663, %v661
      %v704 = vpack.c.b16 %v664, %v662
      %v705 = vpack.c.b16 %v667, %v665
      %v706 = vpack.c.b16 %v668, %v666
      %v707 = vpack.c.b16 %v671, %v669
      %v708 = vpack.c.b16 %v672, %v670
      %v709 = vpack.c.b16 %v675, %v673
      %v710 = vpack.c.b16 %v676, %v674
      %v711 = vpack.c.b16 %v679, %v677
      %v712 = vpack.c.b16 %v680, %v678
      %745 = vmatpush.bf16.msra.mxu0 %v695
      %746 = vmatpush.bf16.msra.mxu0 %v693
      %747 = vmatpush.bf16.msra.mxu0 %v691
      %748 = vmatpush.bf16.msra.mxu0 %v689
      %749 = vmatpush.bf16.msra.mxu0 %v687
      %750 = vmatpush.bf16.msra.mxu0 %v685
      %751 = vmatpush.bf16.msra.mxu0 %v683
      %752 = vmatpush.bf16.msra.mxu0 %v681
      %753 = vmatmul.bf16.gmra.mxu0 %v545
      %v754 = vpop.f32.mrf.mxu0
      %v755 = vadd.f32 0.0, %v754
      %v756 = vpop.f32.mrf.mxu0
      %v757 = vadd.f32 0.0, %v756
      %758 = vmatmul.bf16.gmra.mxu0 %v547
      %v759 = vpop.f32.mrf.mxu0
      %v760 = vadd.f32 0.0, %v759
      %v761 = vpop.f32.mrf.mxu0
      %v762 = vadd.f32 0.0, %v761
      %763 = vmatmul.bf16.gmra.mxu0 %v549
      %v764 = vpop.f32.mrf.mxu0
      %v765 = vadd.f32 0.0, %v764
      %v766 = vpop.f32.mrf.mxu0
      %v767 = vadd.f32 0.0, %v766
      %768 = vmatmul.bf16.gmra.mxu0 %v551
      %v769 = vpop.f32.mrf.mxu0
      %v770 = vadd.f32 0.0, %v769
      %v771 = vpop.f32.mrf.mxu0
      %v772 = vadd.f32 0.0, %v771
      %773 = vdwg.mxu0
      %774 = vmatpush.bf16.msra.mxu0 %v711
      %775 = vmatpush.bf16.msra.mxu0 %v709
      %776 = vmatpush.bf16.msra.mxu0 %v707
      %777 = vmatpush.bf16.msra.mxu0 %v705
      %778 = vmatpush.bf16.msra.mxu0 %v703
      %779 = vmatpush.bf16.msra.mxu0 %v701
      %780 = vmatpush.bf16.msra.mxu0 %v699
      %781 = vmatpush.bf16.msra.mxu0 %v697
      %782 = vmatmul.bf16.gmra.mxu0 %v546
      %v783 = vpop.f32.mrf.mxu0
      %v784 = vadd.f32 %v755, %v783
      %v785 = vpop.f32.mrf.mxu0
      %v786 = vadd.f32 %v757, %v785
      %787 = vmatmul.bf16.gmra.mxu0 %v548
      %v788 = vpop.f32.mrf.mxu0
      %v789 = vadd.f32 %v760, %v788
      %v790 = vpop.f32.mrf.mxu0
      %v791 = vadd.f32 %v762, %v790
      %792 = vmatmul.bf16.gmra.mxu0 %v550
      %v793 = vpop.f32.mrf.mxu0
      %v794 = vadd.f32 %v765, %v793
      %v795 = vpop.f32.mrf.mxu0
      %v796 = vadd.f32 %v767, %v795
      %797 = vmatmul.bf16.gmra.mxu0 %v552
      %v798 = vpop.f32.mrf.mxu0
      %v799 = vadd.f32 %v770, %v798
      %v800 = vpop.f32.mrf.mxu0
      %v801 = vadd.f32 %v772, %v800
      %802 = vdwg.mxu0
      %803 = vmatpush.bf16.msra.mxu0 %v696
      %804 = vmatpush.bf16.msra.mxu0 %v694
      %805 = vmatpush.bf16.msra.mxu0 %v692
      %806 = vmatpush.bf16.msra.mxu0 %v690
      %807 = vmatpush.bf16.msra.mxu0 %v688
      %808 = vmatpush.bf16.msra.mxu0 %v686
      %809 = vmatpush.bf16.msra.mxu0 %v684
      %810 = vmatpush.bf16.msra.mxu0 %v682
      %811 = vmatmul.bf16.gmra.mxu0 %v545
      %v812 = vpop.f32.mrf.mxu0
      %v813 = vadd.f32 0.0, %v812
      %v814 = vpop.f32.mrf.mxu0
      %v815 = vadd.f32 0.0, %v814
      %816 = vmatmul.bf16.gmra.mxu0 %v547
      %v817 = vpop.f32.mrf.mxu0
      %v818 = vadd.f32 0.0, %v817
      %v819 = vpop.f32.mrf.mxu0
      %v820 = vadd.f32 0.0, %v819
      %821 = vmatmul.bf16.gmra.mxu0 %v549
      %v822 = vpop.f32.mrf.mxu0
      %v823 = vadd.f32 0.0, %v822
      %v824 = vpop.f32.mrf.mxu0
      %v825 = vadd.f32 0.0, %v824
      %826 = vmatmul.bf16.gmra.mxu0 %v551
      %v827 = vpop.f32.mrf.mxu0
      %v828 = vadd.f32 0.0, %v827
      %v829 = vpop.f32.mrf.mxu0
      %v830 = vadd.f32 0.0, %v829
      %831 = vdwg.mxu0
      %832 = vmatpush.bf16.msra.mxu0 %v712
      %833 = vmatpush.bf16.msra.mxu0 %v710
      %834 = vmatpush.bf16.msra.mxu0 %v708
      %835 = vmatpush.bf16.msra.mxu0 %v706
      %836 = vmatpush.bf16.msra.mxu0 %v704
      %837 = vmatpush.bf16.msra.mxu0 %v702
      %838 = vmatpush.bf16.msra.mxu0 %v700
      %839 = vmatpush.bf16.msra.mxu0 %v698
      %840 = vmatmul.bf16.gmra.mxu0 %v546
      %v841 = vpop.f32.mrf.mxu0
      %v842 = vadd.f32 %v813, %v841
      %v843 = vpop.f32.mrf.mxu0
      %v844 = vadd.f32 %v815, %v843
      %845 = vmatmul.bf16.gmra.mxu0 %v548
      %v846 = vpop.f32.mrf.mxu0
      %v847 = vadd.f32 %v818, %v846
      %v848 = vpop.f32.mrf.mxu0
      %v849 = vadd.f32 %v820, %v848
      %850 = vmatmul.bf16.gmra.mxu0 %v550
      %v851 = vpop.f32.mrf.mxu0
      %v852 = vadd.f32 %v823, %v851
      %v853 = vpop.f32.mrf.mxu0
      %v854 = vadd.f32 %v825, %v853
      %855 = vmatmul.bf16.gmra.mxu0 %v552
      %v856 = vpop.f32.mrf.mxu0
      %v857 = vadd.f32 %v828, %v856
      %v858 = vpop.f32.mrf.mxu0
      %v859 = vadd.f32 %v830, %v858
      %860 = vdwg.mxu0
      %v861 = vadd.f32 %v529, %v784
      %v862 = vadd.f32 %v530, %v842
      %v863 = vadd.f32 %v531, %v786
      %v864 = vadd.f32 %v532, %v844
      %v865 = vadd.f32 %v533, %v789
      %v866 = vadd.f32 %v534, %v847
      %v867 = vadd.f32 %v535, %v791
      %v868 = vadd.f32 %v536, %v849
      %v869 = vadd.f32 %v537, %v794
      %v870 = vadd.f32 %v538, %v852
      %v871 = vadd.f32 %v539, %v796
      %v872 = vadd.f32 %v540, %v854
      %v873 = vadd.f32 %v541, %v799
      %v874 = vadd.f32 %v542, %v857
      %v875 = vadd.f32 %v543, %v801
      %v876 = vadd.f32 %v544, %v859
      %877 = vst [vmem:[#allocation3] sm:$0xff] %v861
      %878 = vst [vmem:[#allocation3 + $0x8] sm:$0xff] %v862
      %879 = vst [vmem:[#allocation3 + $0x10] sm:$0xff] %v863
      %880 = vst [vmem:[#allocation3 + $0x18] sm:$0xff] %v864
      %881 = vst [vmem:[#allocation3 + $0x20] sm:$0xff] %v865
      %882 = vst [vmem:[#allocation3 + $0x28] sm:$0xff] %v866
      %883 = vst [vmem:[#allocation3 + $0x30] sm:$0xff] %v867
      %884 = vst [vmem:[#allocation3 + $0x38] sm:$0xff] %v868
      %885 = vst [vmem:[#allocation3 + $0x40] sm:$0xff] %v869
      %886 = vst [vmem:[#allocation3 + $0x48] sm:$0xff] %v870
      %887 = vst [vmem:[#allocation3 + $0x50] sm:$0xff] %v871
      %888 = vst [vmem:[#allocation3 + $0x58] sm:$0xff] %v872
      %889 = vst [vmem:[#allocation3 + $0x60] sm:$0xff] %v873
      %890 = vst [vmem:[#allocation3 + $0x68] sm:$0xff] %v874
      %891 = vst [vmem:[#allocation3 + $0x70] sm:$0xff] %v875
      %892 = vst [vmem:[#allocation3 + $0x78] sm:$0xff] %v876
      %v893 = vld [vmem:[#allocation2] sm:$0xfe]
      %v894 = vld [vmem:[#allocation2 + $0x8] sm:$0xfe]
      %v895 = vld [vmem:[#allocation2 + $0x10] sm:$0x1]
      %v896 = vld [vmem:[#allocation2 + $0x18] sm:$0x1]
      %v897 = vld [vmem:[#allocation2 + $0x20] sm:$0xfe]
      %v898 = vld [vmem:[#allocation2 + $0x28] sm:$0xfe]
      %v899 = vld [vmem:[#allocation2 + $0x30] sm:$0x1]
      %v900 = vld [vmem:[#allocation2 + $0x38] sm:$0x1]
      %v901 = vld [vmem:[#allocation2 + $0x40] sm:$0xfe]
      %v902 = vld [vmem:[#allocation2 + $0x48] sm:$0xfe]
      %v903 = vld [vmem:[#allocation2 + $0x50] sm:$0x1]
      %v904 = vld [vmem:[#allocation2 + $0x58] sm:$0x1]
      %v905 = vld [vmem:[#allocation2 + $0x60] sm:$0xfe]
      %v906 = vld [vmem:[#allocation2 + $0x68] sm:$0xfe]
      %v907 = vld [vmem:[#allocation2 + $0x70] sm:$0x1]
      %v908 = vld [vmem:[#allocation2 + $0x78] sm:$0x1]
      %v909 = vld [vmem:[#allocation2 + $0x80] sm:$0xfe]
      %v910 = vld [vmem:[#allocation2 + $0x88] sm:$0xfe]
      %v911 = vld [vmem:[#allocation2 + $0x90] sm:$0x1]
      %v912 = vld [vmem:[#allocation2 + $0x98] sm:$0x1]
      %v913 = vld [vmem:[#allocation2 + $0xa0] sm:$0xfe]
      %v914 = vld [vmem:[#allocation2 + $0xa8] sm:$0xfe]
      %v915 = vld [vmem:[#allocation2 + $0xb0] sm:$0x1]
      %v916 = vld [vmem:[#allocation2 + $0xb8] sm:$0x1]
      %v917 = vld [vmem:[#allocation2 + $0xc0] sm:$0xfe]
      %v918 = vld [vmem:[#allocation2 + $0xc8] sm:$0xfe]
      %v919 = vld [vmem:[#allocation2 + $0xd0] sm:$0x1]
      %v920 = vld [vmem:[#allocation2 + $0xd8] sm:$0x1]
      %v921 = vld [vmem:[#allocation2 + $0xe0] sm:$0xfe]
      %v922 = vld [vmem:[#allocation2 + $0xe8] sm:$0xfe]
      %v923 = vld [vmem:[#allocation2 + $0xf0] sm:$0x1]
      %v924 = vld [vmem:[#allocation2 + $0xf8] sm:$0x1]
      %vm957 = vcmask 1046528
      %v958 = vrot.slane %v893, 1
      %v959 = vrot.slane %v895, 1
      %v960 = vsel %vm957, %v958, %v959
      %v961 = vrot.slane %v894, 1
      %v962 = vrot.slane %v896, 1
      %v963 = vsel %vm957, %v961, %v962
      %v964 = vrot.slane %v897, 1
      %v965 = vrot.slane %v899, 1
      %v966 = vsel %vm957, %v964, %v965
      %v967 = vrot.slane %v898, 1
      %v968 = vrot.slane %v900, 1
      %v969 = vsel %vm957, %v967, %v968
      %v970 = vrot.slane %v901, 1
      %v971 = vrot.slane %v903, 1
      %v972 = vsel %vm957, %v970, %v971
      %v973 = vrot.slane %v902, 1
      %v974 = vrot.slane %v904, 1
      %v975 = vsel %vm957, %v973, %v974
      %v976 = vrot.slane %v905, 1
      %v977 = vrot.slane %v907, 1
      %v978 = vsel %vm957, %v976, %v977
      %v979 = vrot.slane %v906, 1
      %v980 = vrot.slane %v908, 1
      %v981 = vsel %vm957, %v979, %v980
      %v982 = vrot.slane %v909, 1
      %v983 = vrot.slane %v911, 1
      %v984 = vsel %vm957, %v982, %v983
      %v985 = vrot.slane %v910, 1
      %v986 = vrot.slane %v912, 1
      %v987 = vsel %vm957, %v985, %v986
      %v988 = vrot.slane %v913, 1
      %v989 = vrot.slane %v915, 1
      %v990 = vsel %vm957, %v988, %v989
      %v991 = vrot.slane %v914, 1
      %v992 = vrot.slane %v916, 1
      %v993 = vsel %vm957, %v991, %v992
      %v994 = vrot.slane %v917, 1
      %v995 = vrot.slane %v919, 1
      %v996 = vsel %vm957, %v994, %v995
      %v997 = vrot.slane %v918, 1
      %v998 = vrot.slane %v920, 1
      %v999 = vsel %vm957, %v997, %v998
      %v1000 = vrot.slane %v921, 1
      %v1001 = vrot.slane %v923, 1
      %v1002 = vsel %vm957, %v1000, %v1001
      %v1003 = vrot.slane %v922, 1
      %v1004 = vrot.slane %v924, 1
      %v1005 = vsel %vm957, %v1003, %v1004
      %v1022 = vld [vmem:[#allocation3] sm:$0xff]
      %v1023 = vld [vmem:[#allocation3 + $0x8] sm:$0xff]
      %v1024 = vld [vmem:[#allocation3 + $0x10] sm:$0xff]
      %v1025 = vld [vmem:[#allocation3 + $0x18] sm:$0xff]
      %v1026 = vld [vmem:[#allocation3 + $0x20] sm:$0xff]
      %v1027 = vld [vmem:[#allocation3 + $0x28] sm:$0xff]
      %v1028 = vld [vmem:[#allocation3 + $0x30] sm:$0xff]
      %v1029 = vld [vmem:[#allocation3 + $0x38] sm:$0xff]
      %v1030 = vld [vmem:[#allocation3 + $0x40] sm:$0xff]
      %v1031 = vld [vmem:[#allocation3 + $0x48] sm:$0xff]
      %v1032 = vld [vmem:[#allocation3 + $0x50] sm:$0xff]
      %v1033 = vld [vmem:[#allocation3 + $0x58] sm:$0xff]
      %v1034 = vld [vmem:[#allocation3 + $0x60] sm:$0xff]
      %v1035 = vld [vmem:[#allocation3 + $0x68] sm:$0xff]
      %v1036 = vld [vmem:[#allocation3 + $0x70] sm:$0xff]
      %v1037 = vld [vmem:[#allocation3 + $0x78] sm:$0xff]
      %v1038 = vpack.c.bf16 %v966, %v960
      %v1039 = vpack.c.bf16 %v969, %v963
      %v1040 = vpack.c.bf16 %v978, %v972
      %v1041 = vpack.c.bf16 %v981, %v975
      %v1042 = vpack.c.bf16 %v990, %v984
      %v1043 = vpack.c.bf16 %v993, %v987
      %v1044 = vpack.c.bf16 %v1002, %v996
      %v1045 = vpack.c.bf16 %v1005, %v999
      %s1046 = scalar_lea.vmem %s3, 256
      %v1047 = vld [vmem:[%s1046] sm:$0xff]
      %v1048 = vld [vmem:[%s1046 + $0x8] sm:$0xff]
      %v1049 = vld [vmem:[%s1046 + $0x10] sm:$0xff]
      %v1050 = vld [vmem:[%s1046 + $0x18] sm:$0xff]
      %v1051 = vld [vmem:[%s1046 + $0x20] sm:$0xff]
      %v1052 = vld [vmem:[%s1046 + $0x28] sm:$0xff]
      %v1053 = vld [vmem:[%s1046 + $0x30] sm:$0xff]
      %v1054 = vld [vmem:[%s1046 + $0x38] sm:$0xff]
      %v1055 = vld [vmem:[%s1046 + $0x40] sm:$0xff]
      %v1056 = vld [vmem:[%s1046 + $0x48] sm:$0xff]
      %v1057 = vld [vmem:[%s1046 + $0x50] sm:$0xff]
      %v1058 = vld [vmem:[%s1046 + $0x58] sm:$0xff]
      %v1059 = vld [vmem:[%s1046 + $0x60] sm:$0xff]
      %v1060 = vld [vmem:[%s1046 + $0x68] sm:$0xff]
      %v1061 = vld [vmem:[%s1046 + $0x70] sm:$0xff]
      %v1062 = vld [vmem:[%s1046 + $0x78] sm:$0xff]
      %v1063 = vld [vmem:[%s1046 + $0x80] sm:$0xff]
      %v1064 = vld [vmem:[%s1046 + $0x88] sm:$0xff]
      %v1065 = vld [vmem:[%s1046 + $0x90] sm:$0xff]
      %v1066 = vld [vmem:[%s1046 + $0x98] sm:$0xff]
      %v1067 = vld [vmem:[%s1046 + $0xa0] sm:$0xff]
      %v1068 = vld [vmem:[%s1046 + $0xa8] sm:$0xff]
      %v1069 = vld [vmem:[%s1046 + $0xb0] sm:$0xff]
      %v1070 = vld [vmem:[%s1046 + $0xb8] sm:$0xff]
      %v1071 = vld [vmem:[%s1046 + $0xc0] sm:$0xff]
      %v1072 = vld [vmem:[%s1046 + $0xc8] sm:$0xff]
      %v1073 = vld [vmem:[%s1046 + $0xd0] sm:$0xff]
      %v1074 = vld [vmem:[%s1046 + $0xd8] sm:$0xff]
      %v1075 = vld [vmem:[%s1046 + $0xe0] sm:$0xff]
      %v1076 = vld [vmem:[%s1046 + $0xe8] sm:$0xff]
      %v1077 = vld [vmem:[%s1046 + $0xf0] sm:$0xff]
      %v1078 = vld [vmem:[%s1046 + $0xf8] sm:$0xff]
      %v1111 = vunpack.c.l.b16 %v1047
      %v1112 = vunpack.c.h.b16 %v1047
      %v1113 = vunpack.c.l.b16 %v1048
      %v1114 = vunpack.c.h.b16 %v1048
      %v1115 = vunpack.c.l.b16 %v1049
      %v1116 = vunpack.c.h.b16 %v1049
      %v1117 = vunpack.c.l.b16 %v1050
      %v1118 = vunpack.c.h.b16 %v1050
      %v1119 = vunpack.c.l.b16 %v1051
      %v1120 = vunpack.c.h.b16 %v1051
      %v1121 = vunpack.c.l.b16 %v1052
      %v1122 = vunpack.c.h.b16 %v1052
      %v1123 = vunpack.c.l.b16 %v1053
      %v1124 = vunpack.c.h.b16 %v1053
      %v1125 = vunpack.c.l.b16 %v1054
      %v1126 = vunpack.c.h.b16 %v1054
      %v1127 = vunpack.c.l.b16 %v1055
      %v1128 = vunpack.c.h.b16 %v1055
      %v1129 = vunpack.c.l.b16 %v1056
      %v1130 = vunpack.c.h.b16 %v1056
      %v1131 = vunpack.c.l.b16 %v1057
      %v1132 = vunpack.c.h.b16 %v1057
      %v1133 = vunpack.c.l.b16 %v1058
      %v1134 = vunpack.c.h.b16 %v1058
      %v1135 = vunpack.c.l.b16 %v1059
      %v1136 = vunpack.c.h.b16 %v1059
      %v1137 = vunpack.c.l.b16 %v1060
      %v1138 = vunpack.c.h.b16 %v1060
      %v1139 = vunpack.c.l.b16 %v1061
      %v1140 = vunpack.c.h.b16 %v1061
      %v1141 = vunpack.c.l.b16 %v1062
      %v1142 = vunpack.c.h.b16 %v1062
      %v1143 = vunpack.c.l.b16 %v1063
      %v1144 = vunpack.c.h.b16 %v1063
      %v1145 = vunpack.c.l.b16 %v1064
      %v1146 = vunpack.c.h.b16 %v1064
      %v1147 = vunpack.c.l.b16 %v1065
      %v1148 = vunpack.c.h.b16 %v1065
      %v1149 = vunpack.c.l.b16 %v1066
      %v1150 = vunpack.c.h.b16 %v1066
      %v1151 = vunpack.c.l.b16 %v1067
      %v1152 = vunpack.c.h.b16 %v1067
      %v1153 = vunpack.c.l.b16 %v1068
      %v1154 = vunpack.c.h.b16 %v1068
      %v1155 = vunpack.c.l.b16 %v1069
      %v1156 = vunpack.c.h.b16 %v1069
      %v1157 = vunpack.c.l.b16 %v1070
      %v1158 = vunpack.c.h.b16 %v1070
      %v1159 = vunpack.c.l.b16 %v1071
      %v1160 = vunpack.c.h.b16 %v1071
      %v1161 = vunpack.c.l.b16 %v1072
      %v1162 = vunpack.c.h.b16 %v1072
      %v1163 = vunpack.c.l.b16 %v1073
      %v1164 = vunpack.c.h.b16 %v1073
      %v1165 = vunpack.c.l.b16 %v1074
      %v1166 = vunpack.c.h.b16 %v1074
      %v1167 = vunpack.c.l.b16 %v1075
      %v1168 = vunpack.c.h.b16 %v1075
      %v1169 = vunpack.c.l.b16 %v1076
      %v1170 = vunpack.c.h.b16 %v1076
      %v1171 = vunpack.c.l.b16 %v1077
      %v1172 = vunpack.c.h.b16 %v1077
      %v1173 = vunpack.c.l.b16 %v1078
      %v1174 = vunpack.c.h.b16 %v1078
      %v1175 = vpack.c.b16 %v1113, %v1111
      %v1176 = vpack.c.b16 %v1114, %v1112
      %v1177 = vpack.c.b16 %v1117, %v1115
      %v1178 = vpack.c.b16 %v1118, %v1116
      %v1179 = vpack.c.b16 %v1121, %v1119
      %v1180 = vpack.c.b16 %v1122, %v1120
      %v1181 = vpack.c.b16 %v1125, %v1123
      %v1182 = vpack.c.b16 %v1126, %v1124
      %v1183 = vpack.c.b16 %v1129, %v1127
      %v1184 = vpack.c.b16 %v1130, %v1128
      %v1185 = vpack.c.b16 %v1133, %v1131
      %v1186 = vpack.c.b16 %v1134, %v1132
      %v1187 = vpack.c.b16 %v1137, %v1135
      %v1188 = vpack.c.b16 %v1138, %v1136
      %v1189 = vpack.c.b16 %v1141, %v1139
      %v1190 = vpack.c.b16 %v1142, %v1140
      %v1191 = vpack.c.b16 %v1145, %v1143
      %v1192 = vpack.c.b16 %v1146, %v1144
      %v1193 = vpack.c.b16 %v1149, %v1147
      %v1194 = vpack.c.b16 %v1150, %v1148
      %v1195 = vpack.c.b16 %v1153, %v1151
      %v1196 = vpack.c.b16 %v1154, %v1152
      %v1197 = vpack.c.b16 %v1157, %v1155
      %v1198 = vpack.c.b16 %v1158, %v1156
      %v1199 = vpack.c.b16 %v1161, %v1159
      %v1200 = vpack.c.b16 %v1162, %v1160
      %v1201 = vpack.c.b16 %v1165, %v1163
      %v1202 = vpack.c.b16 %v1166, %v1164
      %v1203 = vpack.c.b16 %v1169, %v1167
      %v1204 = vpack.c.b16 %v1170, %v1168
      %v1205 = vpack.c.b16 %v1173, %v1171
      %v1206 = vpack.c.b16 %v1174, %v1172
      %1239 = vmatpush.bf16.msra.mxu0 %v1189
      %1240 = vmatpush.bf16.msra.mxu0 %v1187
      %1241 = vmatpush.bf16.msra.mxu0 %v1185
      %1242 = vmatpush.bf16.msra.mxu0 %v1183
      %1243 = vmatpush.bf16.msra.mxu0 %v1181
      %1244 = vmatpush.bf16.msra.mxu0 %v1179
      %1245 = vmatpush.bf16.msra.mxu0 %v1177
      %1246 = vmatpush.bf16.msra.mxu0 %v1175
      %1247 = vmatmul.bf16.gmra.mxu0 %v1038
      %v1248 = vpop.f32.mrf.mxu0
      %v1249 = vadd.f32 0.0, %v1248
      %v1250 = vpop.f32.mrf.mxu0
      %v1251 = vadd.f32 0.0, %v1250
      %1252 = vmatmul.bf16.gmra.mxu0 %v1040
      %v1253 = vpop.f32.mrf.mxu0
      %v1254 = vadd.f32 0.0, %v1253
      %v1255 = vpop.f32.mrf.mxu0
      %v1256 = vadd.f32 0.0, %v1255
      %1257 = vmatmul.bf16.gmra.mxu0 %v1042
      %v1258 = vpop.f32.mrf.mxu0
      %v1259 = vadd.f32 0.0, %v1258
      %v1260 = vpop.f32.mrf.mxu0
      %v1261 = vadd.f32 0.0, %v1260
      %1262 = vmatmul.bf16.gmra.mxu0 %v1044
      %v1263 = vpop.f32.mrf.mxu0
      %v1264 = vadd.f32 0.0, %v1263
      %v1265 = vpop.f32.mrf.mxu0
      %v1266 = vadd.f32 0.0, %v1265
      %1267 = vdwg.mxu0
      %1268 = vmatpush.bf16.msra.mxu0 %v1205
      %1269 = vmatpush.bf16.msra.mxu0 %v1203
      %1270 = vmatpush.bf16.msra.mxu0 %v1201
      %1271 = vmatpush.bf16.msra.mxu0 %v1199
      %1272 = vmatpush.bf16.msra.mxu0 %v1197
      %1273 = vmatpush.bf16.msra.mxu0 %v1195
      %1274 = vmatpush.bf16.msra.mxu0 %v1193
      %1275 = vmatpush.bf16.msra.mxu0 %v1191
      %1276 = vmatmul.bf16.gmra.mxu0 %v1039
      %v1277 = vpop.f32.mrf.mxu0
      %v1278 = vadd.f32 %v1249, %v1277
      %v1279 = vpop.f32.mrf.mxu0
      %v1280 = vadd.f32 %v1251, %v1279
      %1281 = vmatmul.bf16.gmra.mxu0 %v1041
      %v1282 = vpop.f32.mrf.mxu0
      %v1283 = vadd.f32 %v1254, %v1282
      %v1284 = vpop.f32.mrf.mxu0
      %v1285 = vadd.f32 %v1256, %v1284
      %1286 = vmatmul.bf16.gmra.mxu0 %v1043
      %v1287 = vpop.f32.mrf.mxu0
      %v1288 = vadd.f32 %v1259, %v1287
      %v1289 = vpop.f32.mrf.mxu0
      %v1290 = vadd.f32 %v1261, %v1289
      %1291 = vmatmul.bf16.gmra.mxu0 %v1045
      %v1292 = vpop.f32.mrf.mxu0
      %v1293 = vadd.f32 %v1264, %v1292
      %v1294 = vpop.f32.mrf.mxu0
      %v1295 = vadd.f32 %v1266, %v1294
      %1296 = vdwg.mxu0
      %1297 = vmatpush.bf16.msra.mxu0 %v1190
      %1298 = vmatpush.bf16.msra.mxu0 %v1188
      %1299 = vmatpush.bf16.msra.mxu0 %v1186
      %1300 = vmatpush.bf16.msra.mxu0 %v1184
      %1301 = vmatpush.bf16.msra.mxu0 %v1182
      %1302 = vmatpush.bf16.msra.mxu0 %v1180
      %1303 = vmatpush.bf16.msra.mxu0 %v1178
      %1304 = vmatpush.bf16.msra.mxu0 %v1176
      %1305 = vmatmul.bf16.gmra.mxu0 %v1038
      %v1306 = vpop.f32.mrf.mxu0
      %v1307 = vadd.f32 0.0, %v1306
      %v1308 = vpop.f32.mrf.mxu0
      %v1309 = vadd.f32 0.0, %v1308
      %1310 = vmatmul.bf16.gmra.mxu0 %v1040
      %v1311 = vpop.f32.mrf.mxu0
      %v1312 = vadd.f32 0.0, %v1311
      %v1313 = vpop.f32.mrf.mxu0
      %v1314 = vadd.f32 0.0, %v1313
      %1315 = vmatmul.bf16.gmra.mxu0 %v1042
      %v1316 = vpop.f32.mrf.mxu0
      %v1317 = vadd.f32 0.0, %v1316
      %v1318 = vpop.f32.mrf.mxu0
      %v1319 = vadd.f32 0.0, %v1318
      %1320 = vmatmul.bf16.gmra.mxu0 %v1044
      %v1321 = vpop.f32.mrf.mxu0
      %v1322 = vadd.f32 0.0, %v1321
      %v1323 = vpop.f32.mrf.mxu0
      %v1324 = vadd.f32 0.0, %v1323
      %1325 = vdwg.mxu0
      %1326 = vmatpush.bf16.msra.mxu0 %v1206
      %1327 = vmatpush.bf16.msra.mxu0 %v1204
      %1328 = vmatpush.bf16.msra.mxu0 %v1202
      %1329 = vmatpush.bf16.msra.mxu0 %v1200
      %1330 = vmatpush.bf16.msra.mxu0 %v1198
      %1331 = vmatpush.bf16.msra.mxu0 %v1196
      %1332 = vmatpush.bf16.msra.mxu0 %v1194
      %1333 = vmatpush.bf16.msra.mxu0 %v1192
      %1334 = vmatmul.bf16.gmra.mxu0 %v1039
      %v1335 = vpop.f32.mrf.mxu0
      %v1336 = vadd.f32 %v1307, %v1335
      %v1337 = vpop.f32.mrf.mxu0
      %v1338 = vadd.f32 %v1309, %v1337
      %1339 = vmatmul.bf16.gmra.mxu0 %v1041
      %v1340 = vpop.f32.mrf.mxu0
      %v1341 = vadd.f32 %v1312, %v1340
      %v1342 = vpop.f32.mrf.mxu0
      %v1343 = vadd.f32 %v1314, %v1342
      %1344 = vmatmul.bf16.gmra.mxu0 %v1043
      %v1345 = vpop.f32.mrf.mxu0
      %v1346 = vadd.f32 %v1317, %v1345
      %v1347 = vpop.f32.mrf.mxu0
      %v1348 = vadd.f32 %v1319, %v1347
      %1349 = vmatmul.bf16.gmra.mxu0 %v1045
      %v1350 = vpop.f32.mrf.mxu0
      %v1351 = vadd.f32 %v1322, %v1350
      %v1352 = vpop.f32.mrf.mxu0
      %v1353 = vadd.f32 %v1324, %v1352
      %1354 = vdwg.mxu0
      %v1355 = vadd.f32 %v1022, %v1278
      %v1356 = vadd.f32 %v1023, %v1336
      %v1357 = vadd.f32 %v1024, %v1280
      %v1358 = vadd.f32 %v1025, %v1338
      %v1359 = vadd.f32 %v1026, %v1283
      %v1360 = vadd.f32 %v1027, %v1341
      %v1361 = vadd.f32 %v1028, %v1285
      %v1362 = vadd.f32 %v1029, %v1343
      %v1363 = vadd.f32 %v1030, %v1288
      %v1364 = vadd.f32 %v1031, %v1346
      %v1365 = vadd.f32 %v1032, %v1290
      %v1366 = vadd.f32 %v1033, %v1348
      %v1367 = vadd.f32 %v1034, %v1293
      %v1368 = vadd.f32 %v1035, %v1351
      %v1369 = vadd.f32 %v1036, %v1295
      %v1370 = vadd.f32 %v1037, %v1353
      %1371 = vst [vmem:[#allocation3] sm:$0xff] %v1355
      %1372 = vst [vmem:[#allocation3 + $0x8] sm:$0xff] %v1356
      %1373 = vst [vmem:[#allocation3 + $0x10] sm:$0xff] %v1357
      %1374 = vst [vmem:[#allocation3 + $0x18] sm:$0xff] %v1358
      %1375 = vst [vmem:[#allocation3 + $0x20] sm:$0xff] %v1359
      %1376 = vst [vmem:[#allocation3 + $0x28] sm:$0xff] %v1360
      %1377 = vst [vmem:[#allocation3 + $0x30] sm:$0xff] %v1361
      %1378 = vst [vmem:[#allocation3 + $0x38] sm:$0xff] %v1362
      %1379 = vst [vmem:[#allocation3 + $0x40] sm:$0xff] %v1363
      %1380 = vst [vmem:[#allocation3 + $0x48] sm:$0xff] %v1364
      %1381 = vst [vmem:[#allocation3 + $0x50] sm:$0xff] %v1365
      %1382 = vst [vmem:[#allocation3 + $0x58] sm:$0xff] %v1366
      %1383 = vst [vmem:[#allocation3 + $0x60] sm:$0xff] %v1367
      %1384 = vst [vmem:[#allocation3 + $0x68] sm:$0xff] %v1368
      %1385 = vst [vmem:[#allocation3 + $0x70] sm:$0xff] %v1369
      %1386 = vst [vmem:[#allocation3 + $0x78] sm:$0xff] %v1370
      %v1387 = vld [vmem:[#allocation2] sm:$0xfc]
      %v1388 = vld [vmem:[#allocation2 + $0x8] sm:$0xfc]
      %v1389 = vld [vmem:[#allocation2 + $0x10] sm:$0x3]
      %v1390 = vld [vmem:[#allocation2 + $0x18] sm:$0x3]
      %v1391 = vld [vmem:[#allocation2 + $0x20] sm:$0xfc]
      %v1392 = vld [vmem:[#allocation2 + $0x28] sm:$0xfc]
      %v1393 = vld [vmem:[#allocation2 + $0x30] sm:$0x3]
      %v1394 = vld [vmem:[#allocation2 + $0x38] sm:$0x3]
      %v1395 = vld [vmem:[#allocation2 + $0x40] sm:$0xfc]
      %v1396 = vld [vmem:[#allocation2 + $0x48] sm:$0xfc]
      %v1397 = vld [vmem:[#allocation2 + $0x50] sm:$0x3]
      %v1398 = vld [vmem:[#allocation2 + $0x58] sm:$0x3]
      %v1399 = vld [vmem:[#allocation2 + $0x60] sm:$0xfc]
      %v1400 = vld [vmem:[#allocation2 + $0x68] sm:$0xfc]
      %v1401 = vld [vmem:[#allocation2 + $0x70] sm:$0x3]
      %v1402 = vld [vmem:[#allocation2 + $0x78] sm:$0x3]
      %v1403 = vld [vmem:[#allocation2 + $0x80] sm:$0xfc]
      %v1404 = vld [vmem:[#allocation2 + $0x88] sm:$0xfc]
      %v1405 = vld [vmem:[#allocation2 + $0x90] sm:$0x3]
      %v1406 = vld [vmem:[#allocation2 + $0x98] sm:$0x3]
      %v1407 = vld [vmem:[#allocation2 + $0xa0] sm:$0xfc]
      %v1408 = vld [vmem:[#allocation2 + $0xa8] sm:$0xfc]
      %v1409 = vld [vmem:[#allocation2 + $0xb0] sm:$0x3]
      %v1410 = vld [vmem:[#allocation2 + $0xb8] sm:$0x3]
      %v1411 = vld [vmem:[#allocation2 + $0xc0] sm:$0xfc]
      %v1412 = vld [vmem:[#allocation2 + $0xc8] sm:$0xfc]
      %v1413 = vld [vmem:[#allocation2 + $0xd0] sm:$0x3]
      %v1414 = vld [vmem:[#allocation2 + $0xd8] sm:$0x3]
      %v1415 = vld [vmem:[#allocation2 + $0xe0] sm:$0xfc]
      %v1416 = vld [vmem:[#allocation2 + $0xe8] sm:$0xfc]
      %v1417 = vld [vmem:[#allocation2 + $0xf0] sm:$0x3]
      %v1418 = vld [vmem:[#allocation2 + $0xf8] sm:$0x3]
      %vm1451 = vcmask 1045504
      %v1452 = vrot.slane %v1387, 2
      %v1453 = vrot.slane %v1389, 2
      %v1454 = vsel %vm1451, %v1452, %v1453
      %v1455 = vrot.slane %v1388, 2
      %v1456 = vrot.slane %v1390, 2
      %v1457 = vsel %vm1451, %v1455, %v1456
      %v1458 = vrot.slane %v1391, 2
      %v1459 = vrot.slane %v1393, 2
      %v1460 = vsel %vm1451, %v1458, %v1459
      %v1461 = vrot.slane %v1392, 2
      %v1462 = vrot.slane %v1394, 2
      %v1463 = vsel %vm1451, %v1461, %v1462
      %v1464 = vrot.slane %v1395, 2
      %v1465 = vrot.slane %v1397, 2
      %v1466 = vsel %vm1451, %v1464, %v1465
      %v1467 = vrot.slane %v1396, 2
      %v1468 = vrot.slane %v1398, 2
      %v1469 = vsel %vm1451, %v1467, %v1468
      %v1470 = vrot.slane %v1399, 2
      %v1471 = vrot.slane %v1401, 2
      %v1472 = vsel %vm1451, %v1470, %v1471
      %v1473 = vrot.slane %v1400, 2
      %v1474 = vrot.slane %v1402, 2
      %v1475 = vsel %vm1451, %v1473, %v1474
      %v1476 = vrot.slane %v1403, 2
      %v1477 = vrot.slane %v1405, 2
      %v1478 = vsel %vm1451, %v1476, %v1477
      %v1479 = vrot.slane %v1404, 2
      %v1480 = vrot.slane %v1406, 2
      %v1481 = vsel %vm1451, %v1479, %v1480
      %v1482 = vrot.slane %v1407, 2
      %v1483 = vrot.slane %v1409, 2
      %v1484 = vsel %vm1451, %v1482, %v1483
      %v1485 = vrot.slane %v1408, 2
      %v1486 = vrot.slane %v1410, 2
      %v1487 = vsel %vm1451, %v1485, %v1486
      %v1488 = vrot.slane %v1411, 2
      %v1489 = vrot.slane %v1413, 2
      %v1490 = vsel %vm1451, %v1488, %v1489
      %v1491 = vrot.slane %v1412, 2
      %v1492 = vrot.slane %v1414, 2
      %v1493 = vsel %vm1451, %v1491, %v1492
      %v1494 = vrot.slane %v1415, 2
      %v1495 = vrot.slane %v1417, 2
      %v1496 = vsel %vm1451, %v1494, %v1495
      %v1497 = vrot.slane %v1416, 2
      %v1498 = vrot.slane %v1418, 2
      %v1499 = vsel %vm1451, %v1497, %v1498
      %v1516 = vld [vmem:[#allocation3] sm:$0xff]
      %v1517 = vld [vmem:[#allocation3 + $0x8] sm:$0xff]
      %v1518 = vld [vmem:[#allocation3 + $0x10] sm:$0xff]
      %v1519 = vld [vmem:[#allocation3 + $0x18] sm:$0xff]
      %v1520 = vld [vmem:[#allocation3 + $0x20] sm:$0xff]
      %v1521 = vld [vmem:[#allocation3 + $0x28] sm:$0xff]
      %v1522 = vld [vmem:[#allocation3 + $0x30] sm:$0xff]
      %v1523 = vld [vmem:[#allocation3 + $0x38] sm:$0xff]
      %v1524 = vld [vmem:[#allocation3 + $0x40] sm:$0xff]
      %v1525 = vld [vmem:[#allocation3 + $0x48] sm:$0xff]
      %v1526 = vld [vmem:[#allocation3 + $0x50] sm:$0xff]
      %v1527 = vld [vmem:[#allocation3 + $0x58] sm:$0xff]
      %v1528 = vld [vmem:[#allocation3 + $0x60] sm:$0xff]
      %v1529 = vld [vmem:[#allocation3 + $0x68] sm:$0xff]
      %v1530 = vld [vmem:[#allocation3 + $0x70] sm:$0xff]
      %v1531 = vld [vmem:[#allocation3 + $0x78] sm:$0xff]
      %v1532 = vpack.c.bf16 %v1460, %v1454
      %v1533 = vpack.c.bf16 %v1463, %v1457
      %v1534 = vpack.c.bf16 %v1472, %v1466
      %v1535 = vpack.c.bf16 %v1475, %v1469
      %v1536 = vpack.c.bf16 %v1484, %v1478
      %v1537 = vpack.c.bf16 %v1487, %v1481
      %v1538 = vpack.c.bf16 %v1496, %v1490
      %v1539 = vpack.c.bf16 %v1499, %v1493
      %s1540 = scalar_lea.vmem %s3, 512
      %v1541 = vld [vmem:[%s1540] sm:$0xff]
      %v1542 = vld [vmem:[%s1540 + $0x8] sm:$0xff]
      %v1543 = vld [vmem:[%s1540 + $0x10] sm:$0xff]
      %v1544 = vld [vmem:[%s1540 + $0x18] sm:$0xff]
      %v1545 = vld [vmem:[%s1540 + $0x20] sm:$0xff]
      %v1546 = vld [vmem:[%s1540 + $0x28] sm:$0xff]
      %v1547 = vld [vmem:[%s1540 + $0x30] sm:$0xff]
      %v1548 = vld [vmem:[%s1540 + $0x38] sm:$0xff]
      %v1549 = vld [vmem:[%s1540 + $0x40] sm:$0xff]
      %v1550 = vld [vmem:[%s1540 + $0x48] sm:$0xff]
      %v1551 = vld [vmem:[%s1540 + $0x50] sm:$0xff]
      %v1552 = vld [vmem:[%s1540 + $0x58] sm:$0xff]
      %v1553 = vld [vmem:[%s1540 + $0x60] sm:$0xff]
      %v1554 = vld [vmem:[%s1540 + $0x68] sm:$0xff]
      %v1555 = vld [vmem:[%s1540 + $0x70] sm:$0xff]
      %v1556 = vld [vmem:[%s1540 + $0x78] sm:$0xff]
      %v1557 = vld [vmem:[%s1540 + $0x80] sm:$0xff]
      %v1558 = vld [vmem:[%s1540 + $0x88] sm:$0xff]
      %v1559 = vld [vmem:[%s1540 + $0x90] sm:$0xff]
      %v1560 = vld [vmem:[%s1540 + $0x98] sm:$0xff]
      %v1561 = vld [vmem:[%s1540 + $0xa0] sm:$0xff]
      %v1562 = vld [vmem:[%s1540 + $0xa8] sm:$0xff]
      %v1563 = vld [vmem:[%s1540 + $0xb0] sm:$0xff]
      %v1564 = vld [vmem:[%s1540 + $0xb8] sm:$0xff]
      %v1565 = vld [vmem:[%s1540 + $0xc0] sm:$0xff]
      %v1566 = vld [vmem:[%s1540 + $0xc8] sm:$0xff]
      %v1567 = vld [vmem:[%s1540 + $0xd0] sm:$0xff]
      %v1568 = vld [vmem:[%s1540 + $0xd8] sm:$0xff]
      %v1569 = vld [vmem:[%s1540 + $0xe0] sm:$0xff]
      %v1570 = vld [vmem:[%s1540 + $0xe8] sm:$0xff]
      %v1571 = vld [vmem:[%s1540 + $0xf0] sm:$0xff]
      %v1572 = vld [vmem:[%s1540 + $0xf8] sm:$0xff]
      %v1605 = vunpack.c.l.b16 %v1541
      %v1606 = vunpack.c.h.b16 %v1541
      %v1607 = vunpack.c.l.b16 %v1542
      %v1608 = vunpack.c.h.b16 %v1542
      %v1609 = vunpack.c.l.b16 %v1543
      %v1610 = vunpack.c.h.b16 %v1543
      %v1611 = vunpack.c.l.b16 %v1544
      %v1612 = vunpack.c.h.b16 %v1544
      %v1613 = vunpack.c.l.b16 %v1545
      %v1614 = vunpack.c.h.b16 %v1545
      %v1615 = vunpack.c.l.b16 %v1546
      %v1616 = vunpack.c.h.b16 %v1546
      %v1617 = vunpack.c.l.b16 %v1547
      %v1618 = vunpack.c.h.b16 %v1547
      %v1619 = vunpack.c.l.b16 %v1548
      %v1620 = vunpack.c.h.b16 %v1548
      %v1621 = vunpack.c.l.b16 %v1549
      %v1622 = vunpack.c.h.b16 %v1549
      %v1623 = vunpack.c.l.b16 %v1550
      %v1624 = vunpack.c.h.b16 %v1550
      %v1625 = vunpack.c.l.b16 %v1551
      %v1626 = vunpack.c.h.b16 %v1551
      %v1627 = vunpack.c.l.b16 %v1552
      %v1628 = vunpack.c.h.b16 %v1552
      %v1629 = vunpack.c.l.b16 %v1553
      %v1630 = vunpack.c.h.b16 %v1553
      %v1631 = vunpack.c.l.b16 %v1554
      %v1632 = vunpack.c.h.b16 %v1554
      %v1633 = vunpack.c.l.b16 %v1555
      %v1634 = vunpack.c.h.b16 %v1555
      %v1635 = vunpack.c.l.b16 %v1556
      %v1636 = vunpack.c.h.b16 %v1556
      %v1637 = vunpack.c.l.b16 %v1557
      %v1638 = vunpack.c.h.b16 %v1557
      %v1639 = vunpack.c.l.b16 %v1558
      %v1640 = vunpack.c.h.b16 %v1558
      %v1641 = vunpack.c.l.b16 %v1559
      %v1642 = vunpack.c.h.b16 %v1559
      %v1643 = vunpack.c.l.b16 %v1560
      %v1644 = vunpack.c.h.b16 %v1560
      %v1645 = vunpack.c.l.b16 %v1561
      %v1646 = vunpack.c.h.b16 %v1561
      %v1647 = vunpack.c.l.b16 %v1562
      %v1648 = vunpack.c.h.b16 %v1562
      %v1649 = vunpack.c.l.b16 %v1563
      %v1650 = vunpack.c.h.b16 %v1563
      %v1651 = vunpack.c.l.b16 %v1564
      %v1652 = vunpack.c.h.b16 %v1564
      %v1653 = vunpack.c.l.b16 %v1565
      %v1654 = vunpack.c.h.b16 %v1565
      %v1655 = vunpack.c.l.b16 %v1566
      %v1656 = vunpack.c.h.b16 %v1566
      %v1657 = vunpack.c.l.b16 %v1567
      %v1658 = vunpack.c.h.b16 %v1567
      %v1659 = vunpack.c.l.b16 %v1568
      %v1660 = vunpack.c.h.b16 %v1568
      %v1661 = vunpack.c.l.b16 %v1569
      %v1662 = vunpack.c.h.b16 %v1569
      %v1663 = vunpack.c.l.b16 %v1570
      %v1664 = vunpack.c.h.b16 %v1570
      %v1665 = vunpack.c.l.b16 %v1571
      %v1666 = vunpack.c.h.b16 %v1571
      %v1667 = vunpack.c.l.b16 %v1572
      %v1668 = vunpack.c.h.b16 %v1572
      %v1669 = vpack.c.b16 %v1607, %v1605
      %v1670 = vpack.c.b16 %v1608, %v1606
      %v1671 = vpack.c.b16 %v1611, %v1609
      %v1672 = vpack.c.b16 %v1612, %v1610
      %v1673 = vpack.c.b16 %v1615, %v1613
      %v1674 = vpack.c.b16 %v1616, %v1614
      %v1675 = vpack.c.b16 %v1619, %v1617
      %v1676 = vpack.c.b16 %v1620, %v1618
      %v1677 = vpack.c.b16 %v1623, %v1621
      %v1678 = vpack.c.b16 %v1624, %v1622
      %v1679 = vpack.c.b16 %v1627, %v1625
      %v1680 = vpack.c.b16 %v1628, %v1626
      %v1681 = vpack.c.b16 %v1631, %v1629
      %v1682 = vpack.c.b16 %v1632, %v1630
      %v1683 = vpack.c.b16 %v1635, %v1633
      %v1684 = vpack.c.b16 %v1636, %v1634
      %v1685 = vpack.c.b16 %v1639, %v1637
      %v1686 = vpack.c.b16 %v1640, %v1638
      %v1687 = vpack.c.b16 %v1643, %v1641
      %v1688 = vpack.c.b16 %v1644, %v1642
      %v1689 = vpack.c.b16 %v1647, %v1645
      %v1690 = vpack.c.b16 %v1648, %v1646
      %v1691 = vpack.c.b16 %v1651, %v1649
      %v1692 = vpack.c.b16 %v1652, %v1650
      %v1693 = vpack.c.b16 %v1655, %v1653
      %v1694 = vpack.c.b16 %v1656, %v1654
      %v1695 = vpack.c.b16 %v1659, %v1657
      %v1696 = vpack.c.b16 %v1660, %v1658
      %v1697 = vpack.c.b16 %v1663, %v1661
      %v1698 = vpack.c.b16 %v1664, %v1662
      %v1699 = vpack.c.b16 %v1667, %v1665
      %v1700 = vpack.c.b16 %v1668, %v1666
      %1733 = vmatpush.bf16.msra.mxu0 %v1683
      %1734 = vmatpush.bf16.msra.mxu0 %v1681
      %1735 = vmatpush.bf16.msra.mxu0 %v1679
      %1736 = vmatpush.bf16.msra.mxu0 %v1677
      %1737 = vmatpush.bf16.msra.mxu0 %v1675
      %1738 = vmatpush.bf16.msra.mxu0 %v1673
      %1739 = vmatpush.bf16.msra.mxu0 %v1671
      %1740 = vmatpush.bf16.msra.mxu0 %v1669
      %1741 = vmatmul.bf16.gmra.mxu0 %v1532
      %v1742 = vpop.f32.mrf.mxu0
      %v1743 = vadd.f32 0.0, %v1742
      %v1744 = vpop.f32.mrf.mxu0
      %v1745 = vadd.f32 0.0, %v1744
      %1746 = vmatmul.bf16.gmra.mxu0 %v1534
      %v1747 = vpop.f32.mrf.mxu0
      %v1748 = vadd.f32 0.0, %v1747
      %v1749 = vpop.f32.mrf.mxu0
      %v1750 = vadd.f32 0.0, %v1749
      %1751 = vmatmul.bf16.gmra.mxu0 %v1536
      %v1752 = vpop.f32.mrf.mxu0
      %v1753 = vadd.f32 0.0, %v1752
      %v1754 = vpop.f32.mrf.mxu0
      %v1755 = vadd.f32 0.0, %v1754
      %1756 = vmatmul.bf16.gmra.mxu0 %v1538
      %v1757 = vpop.f32.mrf.mxu0
      %v1758 = vadd.f32 0.0, %v1757
      %v1759 = vpop.f32.mrf.mxu0
      %v1760 = vadd.f32 0.0, %v1759
      %1761 = vdwg.mxu0
      %1762 = vmatpush.bf16.msra.mxu0 %v1699
      %1763 = vmatpush.bf16.msra.mxu0 %v1697
      %1764 = vmatpush.bf16.msra.mxu0 %v1695
      %1765 = vmatpush.bf16.msra.mxu0 %v1693
      %1766 = vmatpush.bf16.msra.mxu0 %v1691
      %1767 = vmatpush.bf16.msra.mxu0 %v1689
      %1768 = vmatpush.bf16.msra.mxu0 %v1687
      %1769 = vmatpush.bf16.msra.mxu0 %v1685
      %1770 = vmatmul.bf16.gmra.mxu0 %v1533
      %v1771 = vpop.f32.mrf.mxu0
      %v1772 = vadd.f32 %v1743, %v1771
      %v1773 = vpop.f32.mrf.mxu0
      %v1774 = vadd.f32 %v1745, %v1773
      %1775 = vmatmul.bf16.gmra.mxu0 %v1535
      %v1776 = vpop.f32.mrf.mxu0
      %v1777 = vadd.f32 %v1748, %v1776
      %v1778 = vpop.f32.mrf.mxu0
      %v1779 = vadd.f32 %v1750, %v1778
      %1780 = vmatmul.bf16.gmra.mxu0 %v1537
      %v1781 = vpop.f32.mrf.mxu0
      %v1782 = vadd.f32 %v1753, %v1781
      %v1783 = vpop.f32.mrf.mxu0
      %v1784 = vadd.f32 %v1755, %v1783
      %1785 = vmatmul.bf16.gmra.mxu0 %v1539
      %v1786 = vpop.f32.mrf.mxu0
      %v1787 = vadd.f32 %v1758, %v1786
      %v1788 = vpop.f32.mrf.mxu0
      %v1789 = vadd.f32 %v1760, %v1788
      %1790 = vdwg.mxu0
      %1791 = vmatpush.bf16.msra.mxu0 %v1684
      %1792 = vmatpush.bf16.msra.mxu0 %v1682
      %1793 = vmatpush.bf16.msra.mxu0 %v1680
      %1794 = vmatpush.bf16.msra.mxu0 %v1678
      %1795 = vmatpush.bf16.msra.mxu0 %v1676
      %1796 = vmatpush.bf16.msra.mxu0 %v1674
      %1797 = vmatpush.bf16.msra.mxu0 %v1672
      %1798 = vmatpush.bf16.msra.mxu0 %v1670
      %1799 = vmatmul.bf16.gmra.mxu0 %v1532
      %v1800 = vpop.f32.mrf.mxu0
      %v1801 = vadd.f32 0.0, %v1800
      %v1802 = vpop.f32.mrf.mxu0
      %v1803 = vadd.f32 0.0, %v1802
      %1804 = vmatmul.bf16.gmra.mxu0 %v1534
      %v1805 = vpop.f32.mrf.mxu0
      %v1806 = vadd.f32 0.0, %v1805
      %v1807 = vpop.f32.mrf.mxu0
      %v1808 = vadd.f32 0.0, %v1807
      %1809 = vmatmul.bf16.gmra.mxu0 %v1536
      %v1810 = vpop.f32.mrf.mxu0
      %v1811 = vadd.f32 0.0, %v1810
      %v1812 = vpop.f32.mrf.mxu0
      %v1813 = vadd.f32 0.0, %v1812
      %1814 = vmatmul.bf16.gmra.mxu0 %v1538
      %v1815 = vpop.f32.mrf.mxu0
      %v1816 = vadd.f32 0.0, %v1815
      %v1817 = vpop.f32.mrf.mxu0
      %v1818 = vadd.f32 0.0, %v1817
      %1819 = vdwg.mxu0
      %1820 = vmatpush.bf16.msra.mxu0 %v1700
      %1821 = vmatpush.bf16.msra.mxu0 %v1698
      %1822 = vmatpush.bf16.msra.mxu0 %v1696
      %1823 = vmatpush.bf16.msra.mxu0 %v1694
      %1824 = vmatpush.bf16.msra.mxu0 %v1692
      %1825 = vmatpush.bf16.msra.mxu0 %v1690
      %1826 = vmatpush.bf16.msra.mxu0 %v1688
      %1827 = vmatpush.bf16.msra.mxu0 %v1686
      %1828 = vmatmul.bf16.gmra.mxu0 %v1533
      %v1829 = vpop.f32.mrf.mxu0
      %v1830 = vadd.f32 %v1801, %v1829
      %v1831 = vpop.f32.mrf.mxu0
      %v1832 = vadd.f32 %v1803, %v1831
      %1833 = vmatmul.bf16.gmra.mxu0 %v1535
      %v1834 = vpop.f32.mrf.mxu0
      %v1835 = vadd.f32 %v1806, %v1834
      %v1836 = vpop.f32.mrf.mxu0
      %v1837 = vadd.f32 %v1808, %v1836
      %1838 = vmatmul.bf16.gmra.mxu0 %v1537
      %v1839 = vpop.f32.mrf.mxu0
      %v1840 = vadd.f32 %v1811, %v1839
      %v1841 = vpop.f32.mrf.mxu0
      %v1842 = vadd.f32 %v1813, %v1841
      %1843 = vmatmul.bf16.gmra.mxu0 %v1539
      %v1844 = vpop.f32.mrf.mxu0
      %v1845 = vadd.f32 %v1816, %v1844
      %v1846 = vpop.f32.mrf.mxu0
      %v1847 = vadd.f32 %v1818, %v1846
      %1848 = vdwg.mxu0
      %v1849 = vadd.f32 %v1516, %v1772
      %v1850 = vadd.f32 %v1517, %v1830
      %v1851 = vadd.f32 %v1518, %v1774
      %v1852 = vadd.f32 %v1519, %v1832
      %v1853 = vadd.f32 %v1520, %v1777
      %v1854 = vadd.f32 %v1521, %v1835
      %v1855 = vadd.f32 %v1522, %v1779
      %v1856 = vadd.f32 %v1523, %v1837
      %v1857 = vadd.f32 %v1524, %v1782
      %v1858 = vadd.f32 %v1525, %v1840
      %v1859 = vadd.f32 %v1526, %v1784
      %v1860 = vadd.f32 %v1527, %v1842
      %v1861 = vadd.f32 %v1528, %v1787
      %v1862 = vadd.f32 %v1529, %v1845
      %v1863 = vadd.f32 %v1530, %v1789
      %v1864 = vadd.f32 %v1531, %v1847
      %1865 = vst [vmem:[#allocation3] sm:$0xff] %v1849
      %1866 = vst [vmem:[#allocation3 + $0x8] sm:$0xff] %v1850
      %1867 = vst [vmem:[#allocation3 + $0x10] sm:$0xff] %v1851
      %1868 = vst [vmem:[#allocation3 + $0x18] sm:$0xff] %v1852
      %1869 = vst [vmem:[#allocation3 + $0x20] sm:$0xff] %v1853
      %1870 = vst [vmem:[#allocation3 + $0x28] sm:$0xff] %v1854
      %1871 = vst [vmem:[#allocation3 + $0x30] sm:$0xff] %v1855
      %1872 = vst [vmem:[#allocation3 + $0x38] sm:$0xff] %v1856
      %1873 = vst [vmem:[#allocation3 + $0x40] sm:$0xff] %v1857
      %1874 = vst [vmem:[#allocation3 + $0x48] sm:$0xff] %v1858
      %1875 = vst [vmem:[#allocation3 + $0x50] sm:$0xff] %v1859
      %1876 = vst [vmem:[#allocation3 + $0x58] sm:$0xff] %v1860
      %1877 = vst [vmem:[#allocation3 + $0x60] sm:$0xff] %v1861
      %1878 = vst [vmem:[#allocation3 + $0x68] sm:$0xff] %v1862
      %1879 = vst [vmem:[#allocation3 + $0x70] sm:$0xff] %v1863
      %1880 = vst [vmem:[#allocation3 + $0x78] sm:$0xff] %v1864
      %v1881 = vld [vmem:[%s464] sm:$0xff]
      %v1882 = vld [vmem:[%s464 + $0x8] sm:$0xff]
      %v1883 = vld [vmem:[%s464 + $0x20] sm:$0xff]
      %v1884 = vld [vmem:[%s464 + $0x28] sm:$0xff]
      %v1885 = vld [vmem:[%s464 + $0x40] sm:$0xff]
      %v1886 = vld [vmem:[%s464 + $0x48] sm:$0xff]
      %v1887 = vld [vmem:[%s464 + $0x60] sm:$0xff]
      %v1888 = vld [vmem:[%s464 + $0x68] sm:$0xff]
      %v1889 = vld [vmem:[%s464 + $0x80] sm:$0xff]
      %v1890 = vld [vmem:[%s464 + $0x88] sm:$0xff]
      %v1891 = vld [vmem:[%s464 + $0xa0] sm:$0xff]
      %v1892 = vld [vmem:[%s464 + $0xa8] sm:$0xff]
      %v1893 = vld [vmem:[%s464 + $0xc0] sm:$0xff]
      %v1894 = vld [vmem:[%s464 + $0xc8] sm:$0xff]
      %v1895 = vld [vmem:[%s464 + $0xe0] sm:$0xff]
      %v1896 = vld [vmem:[%s464 + $0xe8] sm:$0xff]
      %v1897 = vld [vmem:[#allocation3] sm:$0xff]
      %v1898 = vld [vmem:[#allocation3 + $0x8] sm:$0xff]
      %v1899 = vld [vmem:[#allocation3 + $0x10] sm:$0xff]
      %v1900 = vld [vmem:[#allocation3 + $0x18] sm:$0xff]
      %v1901 = vld [vmem:[#allocation3 + $0x20] sm:$0xff]
      %v1902 = vld [vmem:[#allocation3 + $0x28] sm:$0xff]
      %v1903 = vld [vmem:[#allocation3 + $0x30] sm:$0xff]
      %v1904 = vld [vmem:[#allocation3 + $0x38] sm:$0xff]
      %v1905 = vld [vmem:[#allocation3 + $0x40] sm:$0xff]
      %v1906 = vld [vmem:[#allocation3 + $0x48] sm:$0xff]
      %v1907 = vld [vmem:[#allocation3 + $0x50] sm:$0xff]
      %v1908 = vld [vmem:[#allocation3 + $0x58] sm:$0xff]
      %v1909 = vld [vmem:[#allocation3 + $0x60] sm:$0xff]
      %v1910 = vld [vmem:[#allocation3 + $0x68] sm:$0xff]
      %v1911 = vld [vmem:[#allocation3 + $0x70] sm:$0xff]
      %v1912 = vld [vmem:[#allocation3 + $0x78] sm:$0xff]
      %v1913 = vpack.c.bf16 %v1883, %v1881
      %v1914 = vpack.c.bf16 %v1884, %v1882
      %v1915 = vpack.c.bf16 %v1887, %v1885
      %v1916 = vpack.c.bf16 %v1888, %v1886
      %v1917 = vpack.c.bf16 %v1891, %v1889
      %v1918 = vpack.c.bf16 %v1892, %v1890
      %v1919 = vpack.c.bf16 %v1895, %v1893
      %v1920 = vpack.c.bf16 %v1896, %v1894
      %s1921 = scalar_lea.vmem %s3, 768
      %v1922 = vld [vmem:[%s1921] sm:$0xff]
      %v1923 = vld [vmem:[%s1921 + $0x8] sm:$0xff]
      %v1924 = vld [vmem:[%s1921 + $0x10] sm:$0xff]
      %v1925 = vld [vmem:[%s1921 + $0x18] sm:$0xff]
      %v1926 = vld [vmem:[%s1921 + $0x20] sm:$0xff]
      %v1927 = vld [vmem:[%s1921 + $0x28] sm:$0xff]
      %v1928 = vld [vmem:[%s1921 + $0x30] sm:$0xff]
      %v1929 = vld [vmem:[%s1921 + $0x38] sm:$0xff]
      %v1930 = vld [vmem:[%s1921 + $0x40] sm:$0xff]
      %v1931 = vld [vmem:[%s1921 + $0x48] sm:$0xff]
      %v1932 = vld [vmem:[%s1921 + $0x50] sm:$0xff]
      %v1933 = vld [vmem:[%s1921 + $0x58] sm:$0xff]
      %v1934 = vld [vmem:[%s1921 + $0x60] sm:$0xff]
      %v1935 = vld [vmem:[%s1921 + $0x68] sm:$0xff]
      %v1936 = vld [vmem:[%s1921 + $0x70] sm:$0xff]
      %v1937 = vld [vmem:[%s1921 + $0x78] sm:$0xff]
      %v1938 = vld [vmem:[%s1921 + $0x80] sm:$0xff]
      %v1939 = vld [vmem:[%s1921 + $0x88] sm:$0xff]
      %v1940 = vld [vmem:[%s1921 + $0x90] sm:$0xff]
      %v1941 = vld [vmem:[%s1921 + $0x98] sm:$0xff]
      %v1942 = vld [vmem:[%s1921 + $0xa0] sm:$0xff]
      %v1943 = vld [vmem:[%s1921 + $0xa8] sm:$0xff]
      %v1944 = vld [vmem:[%s1921 + $0xb0] sm:$0xff]
      %v1945 = vld [vmem:[%s1921 + $0xb8] sm:$0xff]
      %v1946 = vld [vmem:[%s1921 + $0xc0] sm:$0xff]
      %v1947 = vld [vmem:[%s1921 + $0xc8] sm:$0xff]
      %v1948 = vld [vmem:[%s1921 + $0xd0] sm:$0xff]
      %v1949 = vld [vmem:[%s1921 + $0xd8] sm:$0xff]
      %v1950 = vld [vmem:[%s1921 + $0xe0] sm:$0xff]
      %v1951 = vld [vmem:[%s1921 + $0xe8] sm:$0xff]
      %v1952 = vld [vmem:[%s1921 + $0xf0] sm:$0xff]
      %v1953 = vld [vmem:[%s1921 + $0xf8] sm:$0xff]
      %v1986 = vunpack.c.l.b16 %v1922
      %v1987 = vunpack.c.h.b16 %v1922
      %v1988 = vunpack.c.l.b16 %v1923
      %v1989 = vunpack.c.h.b16 %v1923
      %v1990 = vunpack.c.l.b16 %v1924
      %v1991 = vunpack.c.h.b16 %v1924
      %v1992 = vunpack.c.l.b16 %v1925
      %v1993 = vunpack.c.h.b16 %v1925
      %v1994 = vunpack.c.l.b16 %v1926
      %v1995 = vunpack.c.h.b16 %v1926
      %v1996 = vunpack.c.l.b16 %v1927
      %v1997 = vunpack.c.h.b16 %v1927
      %v1998 = vunpack.c.l.b16 %v1928
      %v1999 = vunpack.c.h.b16 %v1928
      %v2000 = vunpack.c.l.b16 %v1929
      %v2001 = vunpack.c.h.b16 %v1929
      %v2002 = vunpack.c.l.b16 %v1930
      %v2003 = vunpack.c.h.b16 %v1930
      %v2004 = vunpack.c.l.b16 %v1931
      %v2005 = vunpack.c.h.b16 %v1931
      %v2006 = vunpack.c.l.b16 %v1932
      %v2007 = vunpack.c.h.b16 %v1932
      %v2008 = vunpack.c.l.b16 %v1933
      %v2009 = vunpack.c.h.b16 %v1933
      %v2010 = vunpack.c.l.b16 %v1934
      %v2011 = vunpack.c.h.b16 %v1934
      %v2012 = vunpack.c.l.b16 %v1935
      %v2013 = vunpack.c.h.b16 %v1935
      %v2014 = vunpack.c.l.b16 %v1936
      %v2015 = vunpack.c.h.b16 %v1936
      %v2016 = vunpack.c.l.b16 %v1937
      %v2017 = vunpack.c.h.b16 %v1937
      %v2018 = vunpack.c.l.b16 %v1938
      %v2019 = vunpack.c.h.b16 %v1938
      %v2020 = vunpack.c.l.b16 %v1939
      %v2021 = vunpack.c.h.b16 %v1939
      %v2022 = vunpack.c.l.b16 %v1940
      %v2023 = vunpack.c.h.b16 %v1940
      %v2024 = vunpack.c.l.b16 %v1941
      %v2025 = vunpack.c.h.b16 %v1941
      %v2026 = vunpack.c.l.b16 %v1942
      %v2027 = vunpack.c.h.b16 %v1942
      %v2028 = vunpack.c.l.b16 %v1943
      %v2029 = vunpack.c.h.b16 %v1943
      %v2030 = vunpack.c.l.b16 %v1944
      %v2031 = vunpack.c.h.b16 %v1944
      %v2032 = vunpack.c.l.b16 %v1945
      %v2033 = vunpack.c.h.b16 %v1945
      %v2034 = vunpack.c.l.b16 %v1946
      %v2035 = vunpack.c.h.b16 %v1946
      %v2036 = vunpack.c.l.b16 %v1947
      %v2037 = vunpack.c.h.b16 %v1947
      %v2038 = vunpack.c.l.b16 %v1948
      %v2039 = vunpack.c.h.b16 %v1948
      %v2040 = vunpack.c.l.b16 %v1949
      %v2041 = vunpack.c.h.b16 %v1949
      %v2042 = vunpack.c.l.b16 %v1950
      %v2043 = vunpack.c.h.b16 %v1950
      %v2044 = vunpack.c.l.b16 %v1951
      %v2045 = vunpack.c.h.b16 %v1951
      %v2046 = vunpack.c.l.b16 %v1952
      %v2047 = vunpack.c.h.b16 %v1952
      %v2048 = vunpack.c.l.b16 %v1953
      %v2049 = vunpack.c.h.b16 %v1953
      %v2050 = vpack.c.b16 %v1988, %v1986
      %v2051 = vpack.c.b16 %v1989, %v1987
      %v2052 = vpack.c.b16 %v1992, %v1990
      %v2053 = vpack.c.b16 %v1993, %v1991
      %v2054 = vpack.c.b16 %v1996, %v1994
      %v2055 = vpack.c.b16 %v1997, %v1995
      %v2056 = vpack.c.b16 %v2000, %v1998
      %v2057 = vpack.c.b16 %v2001, %v1999
      %v2058 = vpack.c.b16 %v2004, %v2002
      %v2059 = vpack.c.b16 %v2005, %v2003
      %v2060 = vpack.c.b16 %v2008, %v2006
      %v2061 = vpack.c.b16 %v2009, %v2007
      %v2062 = vpack.c.b16 %v2012, %v2010
      %v2063 = vpack.c.b16 %v2013, %v2011
      %v2064 = vpack.c.b16 %v2016, %v2014
      %v2065 = vpack.c.b16 %v2017, %v2015
      %v2066 = vpack.c.b16 %v2020, %v2018
      %v2067 = vpack.c.b16 %v2021, %v2019
      %v2068 = vpack.c.b16 %v2024, %v2022
      %v2069 = vpack.c.b16 %v2025, %v2023
      %v2070 = vpack.c.b16 %v2028, %v2026
      %v2071 = vpack.c.b16 %v2029, %v2027
      %v2072 = vpack.c.b16 %v2032, %v2030
      %v2073 = vpack.c.b16 %v2033, %v2031
      %v2074 = vpack.c.b16 %v2036, %v2034
      %v2075 = vpack.c.b16 %v2037, %v2035
      %v2076 = vpack.c.b16 %v2040, %v2038
      %v2077 = vpack.c.b16 %v2041, %v2039
      %v2078 = vpack.c.b16 %v2044, %v2042
      %v2079 = vpack.c.b16 %v2045, %v2043
      %v2080 = vpack.c.b16 %v2048, %v2046
      %v2081 = vpack.c.b16 %v2049, %v2047
      %2114 = vmatpush.bf16.msra.mxu0 %v2064
      %2115 = vmatpush.bf16.msra.mxu0 %v2062
      %2116 = vmatpush.bf16.msra.mxu0 %v2060
      %2117 = vmatpush.bf16.msra.mxu0 %v2058
      %2118 = vmatpush.bf16.msra.mxu0 %v2056
      %2119 = vmatpush.bf16.msra.mxu0 %v2054
      %2120 = vmatpush.bf16.msra.mxu0 %v2052
      %2121 = vmatpush.bf16.msra.mxu0 %v2050
      %2122 = vmatmul.bf16.gmra.mxu0 %v1913
      %v2123 = vpop.f32.mrf.mxu0
      %v2124 = vadd.f32 0.0, %v2123
      %v2125 = vpop.f32.mrf.mxu0
      %v2126 = vadd.f32 0.0, %v2125
      %2127 = vmatmul.bf16.gmra.mxu0 %v1915
      %v2128 = vpop.f32.mrf.mxu0
      %v2129 = vadd.f32 0.0, %v2128
      %v2130 = vpop.f32.mrf.mxu0
      %v2131 = vadd.f32 0.0, %v2130
      %2132 = vmatmul.bf16.gmra.mxu0 %v1917
      %v2133 = vpop.f32.mrf.mxu0
      %v2134 = vadd.f32 0.0, %v2133
      %v2135 = vpop.f32.mrf.mxu0
      %v2136 = vadd.f32 0.0, %v2135
      %2137 = vmatmul.bf16.gmra.mxu0 %v1919
      %v2138 = vpop.f32.mrf.mxu0
      %v2139 = vadd.f32 0.0, %v2138
      %v2140 = vpop.f32.mrf.mxu0
      %v2141 = vadd.f32 0.0, %v2140
      %2142 = vdwg.mxu0
      %2143 = vmatpush.bf16.msra.mxu0 %v2080
      %2144 = vmatpush.bf16.msra.mxu0 %v2078
      %2145 = vmatpush.bf16.msra.mxu0 %v2076
      %2146 = vmatpush.bf16.msra.mxu0 %v2074
      %2147 = vmatpush.bf16.msra.mxu0 %v2072
      %2148 = vmatpush.bf16.msra.mxu0 %v2070
      %2149 = vmatpush.bf16.msra.mxu0 %v2068
      %2150 = vmatpush.bf16.msra.mxu0 %v2066
      %2151 = vmatmul.bf16.gmra.mxu0 %v1914
      %v2152 = vpop.f32.mrf.mxu0
      %v2153 = vadd.f32 %v2124, %v2152
      %v2154 = vpop.f32.mrf.mxu0
      %v2155 = vadd.f32 %v2126, %v2154
      %2156 = vmatmul.bf16.gmra.mxu0 %v1916
      %v2157 = vpop.f32.mrf.mxu0
      %v2158 = vadd.f32 %v2129, %v2157
      %v2159 = vpop.f32.mrf.mxu0
      %v2160 = vadd.f32 %v2131, %v2159
      %2161 = vmatmul.bf16.gmra.mxu0 %v1918
      %v2162 = vpop.f32.mrf.mxu0
      %v2163 = vadd.f32 %v2134, %v2162
      %v2164 = vpop.f32.mrf.mxu0
      %v2165 = vadd.f32 %v2136, %v2164
      %2166 = vmatmul.bf16.gmra.mxu0 %v1920
      %v2167 = vpop.f32.mrf.mxu0
      %v2168 = vadd.f32 %v2139, %v2167
      %v2169 = vpop.f32.mrf.mxu0
      %v2170 = vadd.f32 %v2141, %v2169
      %2171 = vdwg.mxu0
      %2172 = vmatpush.bf16.msra.mxu0 %v2065
      %2173 = vmatpush.bf16.msra.mxu0 %v2063
      %2174 = vmatpush.bf16.msra.mxu0 %v2061
      %2175 = vmatpush.bf16.msra.mxu0 %v2059
      %2176 = vmatpush.bf16.msra.mxu0 %v2057
      %2177 = vmatpush.bf16.msra.mxu0 %v2055
      %2178 = vmatpush.bf16.msra.mxu0 %v2053
      %2179 = vmatpush.bf16.msra.mxu0 %v2051
      %2180 = vmatmul.bf16.gmra.mxu0 %v1913
      %v2181 = vpop.f32.mrf.mxu0
      %v2182 = vadd.f32 0.0, %v2181
      %v2183 = vpop.f32.mrf.mxu0
      %v2184 = vadd.f32 0.0, %v2183
      %2185 = vmatmul.bf16.gmra.mxu0 %v1915
      %v2186 = vpop.f32.mrf.mxu0
      %v2187 = vadd.f32 0.0, %v2186
      %v2188 = vpop.f32.mrf.mxu0
      %v2189 = vadd.f32 0.0, %v2188
      %2190 = vmatmul.bf16.gmra.mxu0 %v1917
      %v2191 = vpop.f32.mrf.mxu0
      %v2192 = vadd.f32 0.0, %v2191
      %v2193 = vpop.f32.mrf.mxu0
      %v2194 = vadd.f32 0.0, %v2193
      %2195 = vmatmul.bf16.gmra.mxu0 %v1919
      %v2196 = vpop.f32.mrf.mxu0
      %v2197 = vadd.f32 0.0, %v2196
      %v2198 = vpop.f32.mrf.mxu0
      %v2199 = vadd.f32 0.0, %v2198
      %2200 = vdwg.mxu0
      %2201 = vmatpush.bf16.msra.mxu0 %v2081
      %2202 = vmatpush.bf16.msra.mxu0 %v2079
      %2203 = vmatpush.bf16.msra.mxu0 %v2077
      %2204 = vmatpush.bf16.msra.mxu0 %v2075
      %2205 = vmatpush.bf16.msra.mxu0 %v2073
      %2206 = vmatpush.bf16.msra.mxu0 %v2071
      %2207 = vmatpush.bf16.msra.mxu0 %v2069
      %2208 = vmatpush.bf16.msra.mxu0 %v2067
      %2209 = vmatmul.bf16.gmra.mxu0 %v1914
      %v2210 = vpop.f32.mrf.mxu0
      %v2211 = vadd.f32 %v2182, %v2210
      %v2212 = vpop.f32.mrf.mxu0
      %v2213 = vadd.f32 %v2184, %v2212
      %2214 = vmatmul.bf16.gmra.mxu0 %v1916
      %v2215 = vpop.f32.mrf.mxu0
      %v2216 = vadd.f32 %v2187, %v2215
      %v2217 = vpop.f32.mrf.mxu0
      %v2218 = vadd.f32 %v2189, %v2217
      %2219 = vmatmul.bf16.gmra.mxu0 %v1918
      %v2220 = vpop.f32.mrf.mxu0
      %v2221 = vadd.f32 %v2192, %v2220
      %v2222 = vpop.f32.mrf.mxu0
      %v2223 = vadd.f32 %v2194, %v2222
      %2224 = vmatmul.bf16.gmra.mxu0 %v1920
      %v2225 = vpop.f32.mrf.mxu0
      %v2226 = vadd.f32 %v2197, %v2225
      %v2227 = vpop.f32.mrf.mxu0
      %v2228 = vadd.f32 %v2199, %v2227
      %2229 = vdwg.mxu0
      %v2230 = vadd.f32 %v1897, %v2153
      %v2231 = vadd.f32 %v1898, %v2211
      %v2232 = vadd.f32 %v1899, %v2155
      %v2233 = vadd.f32 %v1900, %v2213
      %v2234 = vadd.f32 %v1901, %v2158
      %v2235 = vadd.f32 %v1902, %v2216
      %v2236 = vadd.f32 %v1903, %v2160
      %v2237 = vadd.f32 %v1904, %v2218
      %v2238 = vadd.f32 %v1905, %v2163
      %v2239 = vadd.f32 %v1906, %v2221
      %v2240 = vadd.f32 %v1907, %v2165
      %v2241 = vadd.f32 %v1908, %v2223
      %v2242 = vadd.f32 %v1909, %v2168
      %v2243 = vadd.f32 %v1910, %v2226
      %v2244 = vadd.f32 %v1911, %v2170
      %v2245 = vadd.f32 %v1912, %v2228
      %2246 = vst [vmem:[#allocation3] sm:$0xff] %v2230
      %2247 = vst [vmem:[#allocation3 + $0x8] sm:$0xff] %v2231
      %2248 = vst [vmem:[#allocation3 + $0x10] sm:$0xff] %v2232
      %2249 = vst [vmem:[#allocation3 + $0x18] sm:$0xff] %v2233
      %2250 = vst [vmem:[#allocation3 + $0x20] sm:$0xff] %v2234
      %2251 = vst [vmem:[#allocation3 + $0x28] sm:$0xff] %v2235
      %2252 = vst [vmem:[#allocation3 + $0x30] sm:$0xff] %v2236
      %2253 = vst [vmem:[#allocation3 + $0x38] sm:$0xff] %v2237
      %2254 = vst [vmem:[#allocation3 + $0x40] sm:$0xff] %v2238
      %2255 = vst [vmem:[#allocation3 + $0x48] sm:$0xff] %v2239
      %2256 = vst [vmem:[#allocation3 + $0x50] sm:$0xff] %v2240
      %2257 = vst [vmem:[#allocation3 + $0x58] sm:$0xff] %v2241
      %2258 = vst [vmem:[#allocation3 + $0x60] sm:$0xff] %v2242
      %2259 = vst [vmem:[#allocation3 + $0x68] sm:$0xff] %v2243
      %2260 = vst [vmem:[#allocation3 + $0x70] sm:$0xff] %v2244
      %2261 = vst [vmem:[#allocation3 + $0x78] sm:$0xff] %v2245
      %v2262 = vld [vmem:[%s464] sm:$0xfe]
      %v2263 = vld [vmem:[%s464 + $0x8] sm:$0xfe]
      %v2264 = vld [vmem:[%s464 + $0x10] sm:$0x1]
      %v2265 = vld [vmem:[%s464 + $0x18] sm:$0x1]
      %v2266 = vld [vmem:[%s464 + $0x20] sm:$0xfe]
      %v2267 = vld [vmem:[%s464 + $0x28] sm:$0xfe]
      %v2268 = vld [vmem:[%s464 + $0x30] sm:$0x1]
      %v2269 = vld [vmem:[%s464 + $0x38] sm:$0x1]
      %v2270 = vld [vmem:[%s464 + $0x40] sm:$0xfe]
      %v2271 = vld [vmem:[%s464 + $0x48] sm:$0xfe]
      %v2272 = vld [vmem:[%s464 + $0x50] sm:$0x1]
      %v2273 = vld [vmem:[%s464 + $0x58] sm:$0x1]
      %v2274 = vld [vmem:[%s464 + $0x60] sm:$0xfe]
      %v2275 = vld [vmem:[%s464 + $0x68] sm:$0xfe]
      %v2276 = vld [vmem:[%s464 + $0x70] sm:$0x1]
      %v2277 = vld [vmem:[%s464 + $0x78] sm:$0x1]
      %v2278 = vld [vmem:[%s464 + $0x80] sm:$0xfe]
      %v2279 = vld [vmem:[%s464 + $0x88] sm:$0xfe]
      %v2280 = vld [vmem:[%s464 + $0x90] sm:$0x1]
      %v2281 = vld [vmem:[%s464 + $0x98] sm:$0x1]
      %v2282 = vld [vmem:[%s464 + $0xa0] sm:$0xfe]
      %v2283 = vld [vmem:[%s464 + $0xa8] sm:$0xfe]
      %v2284 = vld [vmem:[%s464 + $0xb0] sm:$0x1]
      %v2285 = vld [vmem:[%s464 + $0xb8] sm:$0x1]
      %v2286 = vld [vmem:[%s464 + $0xc0] sm:$0xfe]
      %v2287 = vld [vmem:[%s464 + $0xc8] sm:$0xfe]
      %v2288 = vld [vmem:[%s464 + $0xd0] sm:$0x1]
      %v2289 = vld [vmem:[%s464 + $0xd8] sm:$0x1]
      %v2290 = vld [vmem:[%s464 + $0xe0] sm:$0xfe]
      %v2291 = vld [vmem:[%s464 + $0xe8] sm:$0xfe]
      %v2292 = vld [vmem:[%s464 + $0xf0] sm:$0x1]
      %v2293 = vld [vmem:[%s464 + $0xf8] sm:$0x1]
      %v2326 = vrot.slane %v2262, 1
      %v2327 = vrot.slane %v2264, 1
      %v2328 = vsel %vm957, %v2326, %v2327
      %v2329 = vrot.slane %v2263, 1
      %v2330 = vrot.slane %v2265, 1
      %v2331 = vsel %vm957, %v2329, %v2330
      %v2332 = vrot.slane %v2266, 1
      %v2333 = vrot.slane %v2268, 1
      %v2334 = vsel %vm957, %v2332, %v2333
      %v2335 = vrot.slane %v2267, 1
      %v2336 = vrot.slane %v2269, 1
      %v2337 = vsel %vm957, %v2335, %v2336
      %v2338 = vrot.slane %v2270, 1
      %v2339 = vrot.slane %v2272, 1
      %v2340 = vsel %vm957, %v2338, %v2339
      %v2341 = vrot.slane %v2271, 1
      %v2342 = vrot.slane %v2273, 1
      %v2343 = vsel %vm957, %v2341, %v2342
      %v2344 = vrot.slane %v2274, 1
      %v2345 = vrot.slane %v2276, 1
      %v2346 = vsel %vm957, %v2344, %v2345
      %v2347 = vrot.slane %v2275, 1
      %v2348 = vrot.slane %v2277, 1
      %v2349 = vsel %vm957, %v2347, %v2348
      %v2350 = vrot.slane %v2278, 1
      %v2351 = vrot.slane %v2280, 1
      %v2352 = vsel %vm957, %v2350, %v2351
      %v2353 = vrot.slane %v2279, 1
      %v2354 = vrot.slane %v2281, 1
      %v2355 = vsel %vm957, %v2353, %v2354
      %v2356 = vrot.slane %v2282, 1
      %v2357 = vrot.slane %v2284, 1
      %v2358 = vsel %vm957, %v2356, %v2357
      %v2359 = vrot.slane %v2283, 1
      %v2360 = vrot.slane %v2285, 1
      %v2361 = vsel %vm957, %v2359, %v2360
      %v2362 = vrot.slane %v2286, 1
      %v2363 = vrot.slane %v2288, 1
      %v2364 = vsel %vm957, %v2362, %v2363
      %v2365 = vrot.slane %v2287, 1
      %v2366 = vrot.slane %v2289, 1
      %v2367 = vsel %vm957, %v2365, %v2366
      %v2368 = vrot.slane %v2290, 1
      %v2369 = vrot.slane %v2292, 1
      %v2370 = vsel %vm957, %v2368, %v2369
      %v2371 = vrot.slane %v2291, 1
      %v2372 = vrot.slane %v2293, 1
      %v2373 = vsel %vm957, %v2371, %v2372
      %v2390 = vld [vmem:[#allocation3] sm:$0xff]
      %v2391 = vld [vmem:[#allocation3 + $0x8] sm:$0xff]
      %v2392 = vld [vmem:[#allocation3 + $0x10] sm:$0xff]
      %v2393 = vld [vmem:[#allocation3 + $0x18] sm:$0xff]
      %v2394 = vld [vmem:[#allocation3 + $0x20] sm:$0xff]
      %v2395 = vld [vmem:[#allocation3 + $0x28] sm:$0xff]
      %v2396 = vld [vmem:[#allocation3 + $0x30] sm:$0xff]
      %v2397 = vld [vmem:[#allocation3 + $0x38] sm:$0xff]
      %v2398 = vld [vmem:[#allocation3 + $0x40] sm:$0xff]
      %v2399 = vld [vmem:[#allocation3 + $0x48] sm:$0xff]
      %v2400 = vld [vmem:[#allocation3 + $0x50] sm:$0xff]
      %v2401 = vld [vmem:[#allocation3 + $0x58] sm:$0xff]
      %v2402 = vld [vmem:[#allocation3 + $0x60] sm:$0xff]
      %v2403 = vld [vmem:[#allocation3 + $0x68] sm:$0xff]
      %v2404 = vld [vmem:[#allocation3 + $0x70] sm:$0xff]
      %v2405 = vld [vmem:[#allocation3 + $0x78] sm:$0xff]
      %v2406 = vpack.c.bf16 %v2334, %v2328
      %v2407 = vpack.c.bf16 %v2337, %v2331
      %v2408 = vpack.c.bf16 %v2346, %v2340
      %v2409 = vpack.c.bf16 %v2349, %v2343
      %v2410 = vpack.c.bf16 %v2358, %v2352
      %v2411 = vpack.c.bf16 %v2361, %v2355
      %v2412 = vpack.c.bf16 %v2370, %v2364
      %v2413 = vpack.c.bf16 %v2373, %v2367
      %s2414 = scalar_lea.vmem %s3, 1024
      %v2415 = vld [vmem:[%s2414] sm:$0xff]
      %v2416 = vld [vmem:[%s2414 + $0x8] sm:$0xff]
      %v2417 = vld [vmem:[%s2414 + $0x10] sm:$0xff]
      %v2418 = vld [vmem:[%s2414 + $0x18] sm:$0xff]
      %v2419 = vld [vmem:[%s2414 + $0x20] sm:$0xff]
      %v2420 = vld [vmem:[%s2414 + $0x28] sm:$0xff]
      %v2421 = vld [vmem:[%s2414 + $0x30] sm:$0xff]
      %v2422 = vld [vmem:[%s2414 + $0x38] sm:$0xff]
      %v2423 = vld [vmem:[%s2414 + $0x40] sm:$0xff]
      %v2424 = vld [vmem:[%s2414 + $0x48] sm:$0xff]
      %v2425 = vld [vmem:[%s2414 + $0x50] sm:$0xff]
      %v2426 = vld [vmem:[%s2414 + $0x58] sm:$0xff]
      %v2427 = vld [vmem:[%s2414 + $0x60] sm:$0xff]
      %v2428 = vld [vmem:[%s2414 + $0x68] sm:$0xff]
      %v2429 = vld [vmem:[%s2414 + $0x70] sm:$0xff]
      %v2430 = vld [vmem:[%s2414 + $0x78] sm:$0xff]
      %v2431 = vld [vmem:[%s2414 + $0x80] sm:$0xff]
      %v2432 = vld [vmem:[%s2414 + $0x88] sm:$0xff]
      %v2433 = vld [vmem:[%s2414 + $0x90] sm:$0xff]
      %v2434 = vld [vmem:[%s2414 + $0x98] sm:$0xff]
      %v2435 = vld [vmem:[%s2414 + $0xa0] sm:$0xff]
      %v2436 = vld [vmem:[%s2414 + $0xa8] sm:$0xff]
      %v2437 = vld [vmem:[%s2414 + $0xb0] sm:$0xff]
      %v2438 = vld [vmem:[%s2414 + $0xb8] sm:$0xff]
      %v2439 = vld [vmem:[%s2414 + $0xc0] sm:$0xff]
      %v2440 = vld [vmem:[%s2414 + $0xc8] sm:$0xff]
      %v2441 = vld [vmem:[%s2414 + $0xd0] sm:$0xff]
      %v2442 = vld [vmem:[%s2414 + $0xd8] sm:$0xff]
      %v2443 = vld [vmem:[%s2414 + $0xe0] sm:$0xff]
      %v2444 = vld [vmem:[%s2414 + $0xe8] sm:$0xff]
      %v2445 = vld [vmem:[%s2414 + $0xf0] sm:$0xff]
      %v2446 = vld [vmem:[%s2414 + $0xf8] sm:$0xff]
      %v2479 = vunpack.c.l.b16 %v2415
      %v2480 = vunpack.c.h.b16 %v2415
      %v2481 = vunpack.c.l.b16 %v2416
      %v2482 = vunpack.c.h.b16 %v2416
      %v2483 = vunpack.c.l.b16 %v2417
      %v2484 = vunpack.c.h.b16 %v2417
      %v2485 = vunpack.c.l.b16 %v2418
      %v2486 = vunpack.c.h.b16 %v2418
      %v2487 = vunpack.c.l.b16 %v2419
      %v2488 = vunpack.c.h.b16 %v2419
      %v2489 = vunpack.c.l.b16 %v2420
      %v2490 = vunpack.c.h.b16 %v2420
      %v2491 = vunpack.c.l.b16 %v2421
      %v2492 = vunpack.c.h.b16 %v2421
      %v2493 = vunpack.c.l.b16 %v2422
      %v2494 = vunpack.c.h.b16 %v2422
      %v2495 = vunpack.c.l.b16 %v2423
      %v2496 = vunpack.c.h.b16 %v2423
      %v2497 = vunpack.c.l.b16 %v2424
      %v2498 = vunpack.c.h.b16 %v2424
      %v2499 = vunpack.c.l.b16 %v2425
      %v2500 = vunpack.c.h.b16 %v2425
      %v2501 = vunpack.c.l.b16 %v2426
      %v2502 = vunpack.c.h.b16 %v2426
      %v2503 = vunpack.c.l.b16 %v2427
      %v2504 = vunpack.c.h.b16 %v2427
      %v2505 = vunpack.c.l.b16 %v2428
      %v2506 = vunpack.c.h.b16 %v2428
      %v2507 = vunpack.c.l.b16 %v2429
      %v2508 = vunpack.c.h.b16 %v2429
      %v2509 = vunpack.c.l.b16 %v2430
      %v2510 = vunpack.c.h.b16 %v2430
      %v2511 = vunpack.c.l.b16 %v2431
      %v2512 = vunpack.c.h.b16 %v2431
      %v2513 = vunpack.c.l.b16 %v2432
      %v2514 = vunpack.c.h.b16 %v2432
      %v2515 = vunpack.c.l.b16 %v2433
      %v2516 = vunpack.c.h.b16 %v2433
      %v2517 = vunpack.c.l.b16 %v2434
      %v2518 = vunpack.c.h.b16 %v2434
      %v2519 = vunpack.c.l.b16 %v2435
      %v2520 = vunpack.c.h.b16 %v2435
      %v2521 = vunpack.c.l.b16 %v2436
      %v2522 = vunpack.c.h.b16 %v2436
      %v2523 = vunpack.c.l.b16 %v2437
      %v2524 = vunpack.c.h.b16 %v2437
      %v2525 = vunpack.c.l.b16 %v2438
      %v2526 = vunpack.c.h.b16 %v2438
      %v2527 = vunpack.c.l.b16 %v2439
      %v2528 = vunpack.c.h.b16 %v2439
      %v2529 = vunpack.c.l.b16 %v2440
      %v2530 = vunpack.c.h.b16 %v2440
      %v2531 = vunpack.c.l.b16 %v2441
      %v2532 = vunpack.c.h.b16 %v2441
      %v2533 = vunpack.c.l.b16 %v2442
      %v2534 = vunpack.c.h.b16 %v2442
      %v2535 = vunpack.c.l.b16 %v2443
      %v2536 = vunpack.c.h.b16 %v2443
      %v2537 = vunpack.c.l.b16 %v2444
      %v2538 = vunpack.c.h.b16 %v2444
      %v2539 = vunpack.c.l.b16 %v2445
      %v2540 = vunpack.c.h.b16 %v2445
      %v2541 = vunpack.c.l.b16 %v2446
      %v2542 = vunpack.c.h.b16 %v2446
      %v2543 = vpack.c.b16 %v2481, %v2479
      %v2544 = vpack.c.b16 %v2482, %v2480
      %v2545 = vpack.c.b16 %v2485, %v2483
      %v2546 = vpack.c.b16 %v2486, %v2484
      %v2547 = vpack.c.b16 %v2489, %v2487
      %v2548 = vpack.c.b16 %v2490, %v2488
      %v2549 = vpack.c.b16 %v2493, %v2491
      %v2550 = vpack.c.b16 %v2494, %v2492
      %v2551 = vpack.c.b16 %v2497, %v2495
      %v2552 = vpack.c.b16 %v2498, %v2496
      %v2553 = vpack.c.b16 %v2501, %v2499
      %v2554 = vpack.c.b16 %v2502, %v2500
      %v2555 = vpack.c.b16 %v2505, %v2503
      %v2556 = vpack.c.b16 %v2506, %v2504
      %v2557 = vpack.c.b16 %v2509, %v2507
      %v2558 = vpack.c.b16 %v2510, %v2508
      %v2559 = vpack.c.b16 %v2513, %v2511
      %v2560 = vpack.c.b16 %v2514, %v2512
      %v2561 = vpack.c.b16 %v2517, %v2515
      %v2562 = vpack.c.b16 %v2518, %v2516
      %v2563 = vpack.c.b16 %v2521, %v2519
      %v2564 = vpack.c.b16 %v2522, %v2520
      %v2565 = vpack.c.b16 %v2525, %v2523
      %v2566 = vpack.c.b16 %v2526, %v2524
      %v2567 = vpack.c.b16 %v2529, %v2527
      %v2568 = vpack.c.b16 %v2530, %v2528
      %v2569 = vpack.c.b16 %v2533, %v2531
      %v2570 = vpack.c.b16 %v2534, %v2532
      %v2571 = vpack.c.b16 %v2537, %v2535
      %v2572 = vpack.c.b16 %v2538, %v2536
      %v2573 = vpack.c.b16 %v2541, %v2539
      %v2574 = vpack.c.b16 %v2542, %v2540
      %2607 = vmatpush.bf16.msra.mxu0 %v2557
      %2608 = vmatpush.bf16.msra.mxu0 %v2555
      %2609 = vmatpush.bf16.msra.mxu0 %v2553
      %2610 = vmatpush.bf16.msra.mxu0 %v2551
      %2611 = vmatpush.bf16.msra.mxu0 %v2549
      %2612 = vmatpush.bf16.msra.mxu0 %v2547
      %2613 = vmatpush.bf16.msra.mxu0 %v2545
      %2614 = vmatpush.bf16.msra.mxu0 %v2543
      %2615 = vmatmul.bf16.gmra.mxu0 %v2406
      %v2616 = vpop.f32.mrf.mxu0
      %v2617 = vadd.f32 0.0, %v2616
      %v2618 = vpop.f32.mrf.mxu0
      %v2619 = vadd.f32 0.0, %v2618
      %2620 = vmatmul.bf16.gmra.mxu0 %v2408
      %v2621 = vpop.f32.mrf.mxu0
      %v2622 = vadd.f32 0.0, %v2621
      %v2623 = vpop.f32.mrf.mxu0
      %v2624 = vadd.f32 0.0, %v2623
      %2625 = vmatmul.bf16.gmra.mxu0 %v2410
      %v2626 = vpop.f32.mrf.mxu0
      %v2627 = vadd.f32 0.0, %v2626
      %v2628 = vpop.f32.mrf.mxu0
      %v2629 = vadd.f32 0.0, %v2628
      %2630 = vmatmul.bf16.gmra.mxu0 %v2412
      %v2631 = vpop.f32.mrf.mxu0
      %v2632 = vadd.f32 0.0, %v2631
      %v2633 = vpop.f32.mrf.mxu0
      %v2634 = vadd.f32 0.0, %v2633
      %2635 = vdwg.mxu0
      %2636 = vmatpush.bf16.msra.mxu0 %v2573
      %2637 = vmatpush.bf16.msra.mxu0 %v2571
      %2638 = vmatpush.bf16.msra.mxu0 %v2569
      %2639 = vmatpush.bf16.msra.mxu0 %v2567
      %2640 = vmatpush.bf16.msra.mxu0 %v2565
      %2641 = vmatpush.bf16.msra.mxu0 %v2563
      %2642 = vmatpush.bf16.msra.mxu0 %v2561
      %2643 = vmatpush.bf16.msra.mxu0 %v2559
      %2644 = vmatmul.bf16.gmra.mxu0 %v2407
      %v2645 = vpop.f32.mrf.mxu0
      %v2646 = vadd.f32 %v2617, %v2645
      %v2647 = vpop.f32.mrf.mxu0
      %v2648 = vadd.f32 %v2619, %v2647
      %2649 = vmatmul.bf16.gmra.mxu0 %v2409
      %v2650 = vpop.f32.mrf.mxu0
      %v2651 = vadd.f32 %v2622, %v2650
      %v2652 = vpop.f32.mrf.mxu0
      %v2653 = vadd.f32 %v2624, %v2652
      %2654 = vmatmul.bf16.gmra.mxu0 %v2411
      %v2655 = vpop.f32.mrf.mxu0
      %v2656 = vadd.f32 %v2627, %v2655
      %v2657 = vpop.f32.mrf.mxu0
      %v2658 = vadd.f32 %v2629, %v2657
      %2659 = vmatmul.bf16.gmra.mxu0 %v2413
      %v2660 = vpop.f32.mrf.mxu0
      %v2661 = vadd.f32 %v2632, %v2660
      %v2662 = vpop.f32.mrf.mxu0
      %v2663 = vadd.f32 %v2634, %v2662
      %2664 = vdwg.mxu0
      %2665 = vmatpush.bf16.msra.mxu0 %v2558
      %2666 = vmatpush.bf16.msra.mxu0 %v2556
      %2667 = vmatpush.bf16.msra.mxu0 %v2554
      %2668 = vmatpush.bf16.msra.mxu0 %v2552
      %2669 = vmatpush.bf16.msra.mxu0 %v2550
      %2670 = vmatpush.bf16.msra.mxu0 %v2548
      %2671 = vmatpush.bf16.msra.mxu0 %v2546
      %2672 = vmatpush.bf16.msra.mxu0 %v2544
      %2673 = vmatmul.bf16.gmra.mxu0 %v2406
      %v2674 = vpop.f32.mrf.mxu0
      %v2675 = vadd.f32 0.0, %v2674
      %v2676 = vpop.f32.mrf.mxu0
      %v2677 = vadd.f32 0.0, %v2676
      %2678 = vmatmul.bf16.gmra.mxu0 %v2408
      %v2679 = vpop.f32.mrf.mxu0
      %v2680 = vadd.f32 0.0, %v2679
      %v2681 = vpop.f32.mrf.mxu0
      %v2682 = vadd.f32 0.0, %v2681
      %2683 = vmatmul.bf16.gmra.mxu0 %v2410
      %v2684 = vpop.f32.mrf.mxu0
      %v2685 = vadd.f32 0.0, %v2684
      %v2686 = vpop.f32.mrf.mxu0
      %v2687 = vadd.f32 0.0, %v2686
      %2688 = vmatmul.bf16.gmra.mxu0 %v2412
      %v2689 = vpop.f32.mrf.mxu0
      %v2690 = vadd.f32 0.0, %v2689
      %v2691 = vpop.f32.mrf.mxu0
      %v2692 = vadd.f32 0.0, %v2691
      %2693 = vdwg.mxu0
      %2694 = vmatpush.bf16.msra.mxu0 %v2574
      %2695 = vmatpush.bf16.msra.mxu0 %v2572
      %2696 = vmatpush.bf16.msra.mxu0 %v2570
      %2697 = vmatpush.bf16.msra.mxu0 %v2568
      %2698 = vmatpush.bf16.msra.mxu0 %v2566
      %2699 = vmatpush.bf16.msra.mxu0 %v2564
      %2700 = vmatpush.bf16.msra.mxu0 %v2562
      %2701 = vmatpush.bf16.msra.mxu0 %v2560
      %2702 = vmatmul.bf16.gmra.mxu0 %v2407
      %v2703 = vpop.f32.mrf.mxu0
      %v2704 = vadd.f32 %v2675, %v2703
      %v2705 = vpop.f32.mrf.mxu0
      %v2706 = vadd.f32 %v2677, %v2705
      %2707 = vmatmul.bf16.gmra.mxu0 %v2409
      %v2708 = vpop.f32.mrf.mxu0
      %v2709 = vadd.f32 %v2680, %v2708
      %v2710 = vpop.f32.mrf.mxu0
      %v2711 = vadd.f32 %v2682, %v2710
      %2712 = vmatmul.bf16.gmra.mxu0 %v2411
      %v2713 = vpop.f32.mrf.mxu0
      %v2714 = vadd.f32 %v2685, %v2713
      %v2715 = vpop.f32.mrf.mxu0
      %v2716 = vadd.f32 %v2687, %v2715
      %2717 = vmatmul.bf16.gmra.mxu0 %v2413
      %v2718 = vpop.f32.mrf.mxu0
      %v2719 = vadd.f32 %v2690, %v2718
      %v2720 = vpop.f32.mrf.mxu0
      %v2721 = vadd.f32 %v2692, %v2720
      %2722 = vdwg.mxu0
      %v2723 = vadd.f32 %v2390, %v2646
      %v2724 = vadd.f32 %v2391, %v2704
      %v2725 = vadd.f32 %v2392, %v2648
      %v2726 = vadd.f32 %v2393, %v2706
      %v2727 = vadd.f32 %v2394, %v2651
      %v2728 = vadd.f32 %v2395, %v2709
      %v2729 = vadd.f32 %v2396, %v2653
      %v2730 = vadd.f32 %v2397, %v2711
      %v2731 = vadd.f32 %v2398, %v2656
      %v2732 = vadd.f32 %v2399, %v2714
      %v2733 = vadd.f32 %v2400, %v2658
      %v2734 = vadd.f32 %v2401, %v2716
      %v2735 = vadd.f32 %v2402, %v2661
      %v2736 = vadd.f32 %v2403, %v2719
      %v2737 = vadd.f32 %v2404, %v2663
      %v2738 = vadd.f32 %v2405, %v2721
      %2739 = vst [vmem:[#allocation3] sm:$0xff] %v2723
      %2740 = vst [vmem:[#allocation3 + $0x8] sm:$0xff] %v2724
      %2741 = vst [vmem:[#allocation3 + $0x10] sm:$0xff] %v2725
      %2742 = vst [vmem:[#allocation3 + $0x18] sm:$0xff] %v2726
      %2743 = vst [vmem:[#allocation3 + $0x20] sm:$0xff] %v2727
      %2744 = vst [vmem:[#allocation3 + $0x28] sm:$0xff] %v2728
      %2745 = vst [vmem:[#allocation3 + $0x30] sm:$0xff] %v2729
      %2746 = vst [vmem:[#allocation3 + $0x38] sm:$0xff] %v2730
      %2747 = vst [vmem:[#allocation3 + $0x40] sm:$0xff] %v2731
      %2748 = vst [vmem:[#allocation3 + $0x48] sm:$0xff] %v2732
      %2749 = vst [vmem:[#allocation3 + $0x50] sm:$0xff] %v2733
      %2750 = vst [vmem:[#allocation3 + $0x58] sm:$0xff] %v2734
      %2751 = vst [vmem:[#allocation3 + $0x60] sm:$0xff] %v2735
      %2752 = vst [vmem:[#allocation3 + $0x68] sm:$0xff] %v2736
      %2753 = vst [vmem:[#allocation3 + $0x70] sm:$0xff] %v2737
      %2754 = vst [vmem:[#allocation3 + $0x78] sm:$0xff] %v2738
      %v2755 = vld [vmem:[%s464] sm:$0xfc]
      %v2756 = vld [vmem:[%s464 + $0x8] sm:$0xfc]
      %v2757 = vld [vmem:[%s464 + $0x10] sm:$0x3]
      %v2758 = vld [vmem:[%s464 + $0x18] sm:$0x3]
      %v2759 = vld [vmem:[%s464 + $0x20] sm:$0xfc]
      %v2760 = vld [vmem:[%s464 + $0x28] sm:$0xfc]
      %v2761 = vld [vmem:[%s464 + $0x30] sm:$0x3]
      %v2762 = vld [vmem:[%s464 + $0x38] sm:$0x3]
      %v2763 = vld [vmem:[%s464 + $0x40] sm:$0xfc]
      %v2764 = vld [vmem:[%s464 + $0x48] sm:$0xfc]
      %v2765 = vld [vmem:[%s464 + $0x50] sm:$0x3]
      %v2766 = vld [vmem:[%s464 + $0x58] sm:$0x3]
      %v2767 = vld [vmem:[%s464 + $0x60] sm:$0xfc]
      %v2768 = vld [vmem:[%s464 + $0x68] sm:$0xfc]
      %v2769 = vld [vmem:[%s464 + $0x70] sm:$0x3]
      %v2770 = vld [vmem:[%s464 + $0x78] sm:$0x3]
      %v2771 = vld [vmem:[%s464 + $0x80] sm:$0xfc]
      %v2772 = vld [vmem:[%s464 + $0x88] sm:$0xfc]
      %v2773 = vld [vmem:[%s464 + $0x90] sm:$0x3]
      %v2774 = vld [vmem:[%s464 + $0x98] sm:$0x3]
      %v2775 = vld [vmem:[%s464 + $0xa0] sm:$0xfc]
      %v2776 = vld [vmem:[%s464 + $0xa8] sm:$0xfc]
      %v2777 = vld [vmem:[%s464 + $0xb0] sm:$0x3]
      %v2778 = vld [vmem:[%s464 + $0xb8] sm:$0x3]
      %v2779 = vld [vmem:[%s464 + $0xc0] sm:$0xfc]
      %v2780 = vld [vmem:[%s464 + $0xc8] sm:$0xfc]
      %v2781 = vld [vmem:[%s464 + $0xd0] sm:$0x3]
      %v2782 = vld [vmem:[%s464 + $0xd8] sm:$0x3]
      %v2783 = vld [vmem:[%s464 + $0xe0] sm:$0xfc]
      %v2784 = vld [vmem:[%s464 + $0xe8] sm:$0xfc]
      %v2785 = vld [vmem:[%s464 + $0xf0] sm:$0x3]
      %v2786 = vld [vmem:[%s464 + $0xf8] sm:$0x3]
      %v2819 = vrot.slane %v2755, 2
      %v2820 = vrot.slane %v2757, 2
      %v2821 = vsel %vm1451, %v2819, %v2820
      %v2822 = vrot.slane %v2756, 2
      %v2823 = vrot.slane %v2758, 2
      %v2824 = vsel %vm1451, %v2822, %v2823
      %v2825 = vrot.slane %v2759, 2
      %v2826 = vrot.slane %v2761, 2
      %v2827 = vsel %vm1451, %v2825, %v2826
      %v2828 = vrot.slane %v2760, 2
      %v2829 = vrot.slane %v2762, 2
      %v2830 = vsel %vm1451, %v2828, %v2829
      %v2831 = vrot.slane %v2763, 2
      %v2832 = vrot.slane %v2765, 2
      %v2833 = vsel %vm1451, %v2831, %v2832
      %v2834 = vrot.slane %v2764, 2
      %v2835 = vrot.slane %v2766, 2
      %v2836 = vsel %vm1451, %v2834, %v2835
      %v2837 = vrot.slane %v2767, 2
      %v2838 = vrot.slane %v2769, 2
      %v2839 = vsel %vm1451, %v2837, %v2838
      %v2840 = vrot.slane %v2768, 2
      %v2841 = vrot.slane %v2770, 2
      %v2842 = vsel %vm1451, %v2840, %v2841
      %v2843 = vrot.slane %v2771, 2
      %v2844 = vrot.slane %v2773, 2
      %v2845 = vsel %vm1451, %v2843, %v2844
      %v2846 = vrot.slane %v2772, 2
      %v2847 = vrot.slane %v2774, 2
      %v2848 = vsel %vm1451, %v2846, %v2847
      %v2849 = vrot.slane %v2775, 2
      %v2850 = vrot.slane %v2777, 2
      %v2851 = vsel %vm1451, %v2849, %v2850
      %v2852 = vrot.slane %v2776, 2
      %v2853 = vrot.slane %v2778, 2
      %v2854 = vsel %vm1451, %v2852, %v2853
      %v2855 = vrot.slane %v2779, 2
      %v2856 = vrot.slane %v2781, 2
      %v2857 = vsel %vm1451, %v2855, %v2856
      %v2858 = vrot.slane %v2780, 2
      %v2859 = vrot.slane %v2782, 2
      %v2860 = vsel %vm1451, %v2858, %v2859
      %v2861 = vrot.slane %v2783, 2
      %v2862 = vrot.slane %v2785, 2
      %v2863 = vsel %vm1451, %v2861, %v2862
      %v2864 = vrot.slane %v2784, 2
      %v2865 = vrot.slane %v2786, 2
      %v2866 = vsel %vm1451, %v2864, %v2865
      %v2883 = vld [vmem:[#allocation3] sm:$0xff]
      %v2884 = vld [vmem:[#allocation3 + $0x8] sm:$0xff]
      %v2885 = vld [vmem:[#allocation3 + $0x10] sm:$0xff]
      %v2886 = vld [vmem:[#allocation3 + $0x18] sm:$0xff]
      %v2887 = vld [vmem:[#allocation3 + $0x20] sm:$0xff]
      %v2888 = vld [vmem:[#allocation3 + $0x28] sm:$0xff]
      %v2889 = vld [vmem:[#allocation3 + $0x30] sm:$0xff]
      %v2890 = vld [vmem:[#allocation3 + $0x38] sm:$0xff]
      %v2891 = vld [vmem:[#allocation3 + $0x40] sm:$0xff]
      %v2892 = vld [vmem:[#allocation3 + $0x48] sm:$0xff]
      %v2893 = vld [vmem:[#allocation3 + $0x50] sm:$0xff]
      %v2894 = vld [vmem:[#allocation3 + $0x58] sm:$0xff]
      %v2895 = vld [vmem:[#allocation3 + $0x60] sm:$0xff]
      %v2896 = vld [vmem:[#allocation3 + $0x68] sm:$0xff]
      %v2897 = vld [vmem:[#allocation3 + $0x70] sm:$0xff]
      %v2898 = vld [vmem:[#allocation3 + $0x78] sm:$0xff]
      %v2899 = vpack.c.bf16 %v2827, %v2821
      %v2900 = vpack.c.bf16 %v2830, %v2824
      %v2901 = vpack.c.bf16 %v2839, %v2833
      %v2902 = vpack.c.bf16 %v2842, %v2836
      %v2903 = vpack.c.bf16 %v2851, %v2845
      %v2904 = vpack.c.bf16 %v2854, %v2848
      %v2905 = vpack.c.bf16 %v2863, %v2857
      %v2906 = vpack.c.bf16 %v2866, %v2860
      %s2907 = scalar_lea.vmem %s3, 1280
      %v2908 = vld [vmem:[%s2907] sm:$0xff]
      %v2909 = vld [vmem:[%s2907 + $0x8] sm:$0xff]
      %v2910 = vld [vmem:[%s2907 + $0x10] sm:$0xff]
      %v2911 = vld [vmem:[%s2907 + $0x18] sm:$0xff]
      %v2912 = vld [vmem:[%s2907 + $0x20] sm:$0xff]
      %v2913 = vld [vmem:[%s2907 + $0x28] sm:$0xff]
      %v2914 = vld [vmem:[%s2907 + $0x30] sm:$0xff]
      %v2915 = vld [vmem:[%s2907 + $0x38] sm:$0xff]
      %v2916 = vld [vmem:[%s2907 + $0x40] sm:$0xff]
      %v2917 = vld [vmem:[%s2907 + $0x48] sm:$0xff]
      %v2918 = vld [vmem:[%s2907 + $0x50] sm:$0xff]
      %v2919 = vld [vmem:[%s2907 + $0x58] sm:$0xff]
      %v2920 = vld [vmem:[%s2907 + $0x60] sm:$0xff]
      %v2921 = vld [vmem:[%s2907 + $0x68] sm:$0xff]
      %v2922 = vld [vmem:[%s2907 + $0x70] sm:$0xff]
      %v2923 = vld [vmem:[%s2907 + $0x78] sm:$0xff]
      %v2924 = vld [vmem:[%s2907 + $0x80] sm:$0xff]
      %v2925 = vld [vmem:[%s2907 + $0x88] sm:$0xff]
      %v2926 = vld [vmem:[%s2907 + $0x90] sm:$0xff]
      %v2927 = vld [vmem:[%s2907 + $0x98] sm:$0xff]
      %v2928 = vld [vmem:[%s2907 + $0xa0] sm:$0xff]
      %v2929 = vld [vmem:[%s2907 + $0xa8] sm:$0xff]
      %v2930 = vld [vmem:[%s2907 + $0xb0] sm:$0xff]
      %v2931 = vld [vmem:[%s2907 + $0xb8] sm:$0xff]
      %v2932 = vld [vmem:[%s2907 + $0xc0] sm:$0xff]
      %v2933 = vld [vmem:[%s2907 + $0xc8] sm:$0xff]
      %v2934 = vld [vmem:[%s2907 + $0xd0] sm:$0xff]
      %v2935 = vld [vmem:[%s2907 + $0xd8] sm:$0xff]
      %v2936 = vld [vmem:[%s2907 + $0xe0] sm:$0xff]
      %v2937 = vld [vmem:[%s2907 + $0xe8] sm:$0xff]
      %v2938 = vld [vmem:[%s2907 + $0xf0] sm:$0xff]
      %v2939 = vld [vmem:[%s2907 + $0xf8] sm:$0xff]
      %v2972 = vunpack.c.l.b16 %v2908
      %v2973 = vunpack.c.h.b16 %v2908
      %v2974 = vunpack.c.l.b16 %v2909
      %v2975 = vunpack.c.h.b16 %v2909
      %v2976 = vunpack.c.l.b16 %v2910
      %v2977 = vunpack.c.h.b16 %v2910
      %v2978 = vunpack.c.l.b16 %v2911
      %v2979 = vunpack.c.h.b16 %v2911
      %v2980 = vunpack.c.l.b16 %v2912
      %v2981 = vunpack.c.h.b16 %v2912
      %v2982 = vunpack.c.l.b16 %v2913
      %v2983 = vunpack.c.h.b16 %v2913
      %v2984 = vunpack.c.l.b16 %v2914
      %v2985 = vunpack.c.h.b16 %v2914
      %v2986 = vunpack.c.l.b16 %v2915
      %v2987 = vunpack.c.h.b16 %v2915
      %v2988 = vunpack.c.l.b16 %v2916
      %v2989 = vunpack.c.h.b16 %v2916
      %v2990 = vunpack.c.l.b16 %v2917
      %v2991 = vunpack.c.h.b16 %v2917
      %v2992 = vunpack.c.l.b16 %v2918
      %v2993 = vunpack.c.h.b16 %v2918
      %v2994 = vunpack.c.l.b16 %v2919
      %v2995 = vunpack.c.h.b16 %v2919
      %v2996 = vunpack.c.l.b16 %v2920
      %v2997 = vunpack.c.h.b16 %v2920
      %v2998 = vunpack.c.l.b16 %v2921
      %v2999 = vunpack.c.h.b16 %v2921
      %v3000 = vunpack.c.l.b16 %v2922
      %v3001 = vunpack.c.h.b16 %v2922
      %v3002 = vunpack.c.l.b16 %v2923
      %v3003 = vunpack.c.h.b16 %v2923
      %v3004 = vunpack.c.l.b16 %v2924
      %v3005 = vunpack.c.h.b16 %v2924
      %v3006 = vunpack.c.l.b16 %v2925
      %v3007 = vunpack.c.h.b16 %v2925
      %v3008 = vunpack.c.l.b16 %v2926
      %v3009 = vunpack.c.h.b16 %v2926
      %v3010 = vunpack.c.l.b16 %v2927
      %v3011 = vunpack.c.h.b16 %v2927
      %v3012 = vunpack.c.l.b16 %v2928
      %v3013 = vunpack.c.h.b16 %v2928
      %v3014 = vunpack.c.l.b16 %v2929
      %v3015 = vunpack.c.h.b16 %v2929
      %v3016 = vunpack.c.l.b16 %v2930
      %v3017 = vunpack.c.h.b16 %v2930
      %v3018 = vunpack.c.l.b16 %v2931
      %v3019 = vunpack.c.h.b16 %v2931
      %v3020 = vunpack.c.l.b16 %v2932
      %v3021 = vunpack.c.h.b16 %v2932
      %v3022 = vunpack.c.l.b16 %v2933
      %v3023 = vunpack.c.h.b16 %v2933
      %v3024 = vunpack.c.l.b16 %v2934
      %v3025 = vunpack.c.h.b16 %v2934
      %v3026 = vunpack.c.l.b16 %v2935
      %v3027 = vunpack.c.h.b16 %v2935
      %v3028 = vunpack.c.l.b16 %v2936
      %v3029 = vunpack.c.h.b16 %v2936
      %v3030 = vunpack.c.l.b16 %v2937
      %v3031 = vunpack.c.h.b16 %v2937
      %v3032 = vunpack.c.l.b16 %v2938
      %v3033 = vunpack.c.h.b16 %v2938
      %v3034 = vunpack.c.l.b16 %v2939
      %v3035 = vunpack.c.h.b16 %v2939
      %v3036 = vpack.c.b16 %v2974, %v2972
      %v3037 = vpack.c.b16 %v2975, %v2973
      %v3038 = vpack.c.b16 %v2978, %v2976
      %v3039 = vpack.c.b16 %v2979, %v2977
      %v3040 = vpack.c.b16 %v2982, %v2980
      %v3041 = vpack.c.b16 %v2983, %v2981
      %v3042 = vpack.c.b16 %v2986, %v2984
      %v3043 = vpack.c.b16 %v2987, %v2985
      %v3044 = vpack.c.b16 %v2990, %v2988
      %v3045 = vpack.c.b16 %v2991, %v2989
      %v3046 = vpack.c.b16 %v2994, %v2992
      %v3047 = vpack.c.b16 %v2995, %v2993
      %v3048 = vpack.c.b16 %v2998, %v2996
      %v3049 = vpack.c.b16 %v2999, %v2997
      %v3050 = vpack.c.b16 %v3002, %v3000
      %v3051 = vpack.c.b16 %v3003, %v3001
      %v3052 = vpack.c.b16 %v3006, %v3004
      %v3053 = vpack.c.b16 %v3007, %v3005
      %v3054 = vpack.c.b16 %v3010, %v3008
      %v3055 = vpack.c.b16 %v3011, %v3009
      %v3056 = vpack.c.b16 %v3014, %v3012
      %v3057 = vpack.c.b16 %v3015, %v3013
      %v3058 = vpack.c.b16 %v3018, %v3016
      %v3059 = vpack.c.b16 %v3019, %v3017
      %v3060 = vpack.c.b16 %v3022, %v3020
      %v3061 = vpack.c.b16 %v3023, %v3021
      %v3062 = vpack.c.b16 %v3026, %v3024
      %v3063 = vpack.c.b16 %v3027, %v3025
      %v3064 = vpack.c.b16 %v3030, %v3028
      %v3065 = vpack.c.b16 %v3031, %v3029
      %v3066 = vpack.c.b16 %v3034, %v3032
      %v3067 = vpack.c.b16 %v3035, %v3033
      %3100 = vmatpush.bf16.msra.mxu0 %v3050
      %3101 = vmatpush.bf16.msra.mxu0 %v3048
      %3102 = vmatpush.bf16.msra.mxu0 %v3046
      %3103 = vmatpush.bf16.msra.mxu0 %v3044
      %3104 = vmatpush.bf16.msra.mxu0 %v3042
      %3105 = vmatpush.bf16.msra.mxu0 %v3040
      %3106 = vmatpush.bf16.msra.mxu0 %v3038
      %3107 = vmatpush.bf16.msra.mxu0 %v3036
      %3108 = vmatmul.bf16.gmra.mxu0 %v2899
      %v3109 = vpop.f32.mrf.mxu0
      %v3110 = vadd.f32 0.0, %v3109
      %v3111 = vpop.f32.mrf.mxu0
      %v3112 = vadd.f32 0.0, %v3111
      %3113 = vmatmul.bf16.gmra.mxu0 %v2901
      %v3114 = vpop.f32.mrf.mxu0
      %v3115 = vadd.f32 0.0, %v3114
      %v3116 = vpop.f32.mrf.mxu0
      %v3117 = vadd.f32 0.0, %v3116
      %3118 = vmatmul.bf16.gmra.mxu0 %v2903
      %v3119 = vpop.f32.mrf.mxu0
      %v3120 = vadd.f32 0.0, %v3119
      %v3121 = vpop.f32.mrf.mxu0
      %v3122 = vadd.f32 0.0, %v3121
      %3123 = vmatmul.bf16.gmra.mxu0 %v2905
      %v3124 = vpop.f32.mrf.mxu0
      %v3125 = vadd.f32 0.0, %v3124
      %v3126 = vpop.f32.mrf.mxu0
      %v3127 = vadd.f32 0.0, %v3126
      %3128 = vdwg.mxu0
      %3129 = vmatpush.bf16.msra.mxu0 %v3066
      %3130 = vmatpush.bf16.msra.mxu0 %v3064
      %3131 = vmatpush.bf16.msra.mxu0 %v3062
      %3132 = vmatpush.bf16.msra.mxu0 %v3060
      %3133 = vmatpush.bf16.msra.mxu0 %v3058
      %3134 = vmatpush.bf16.msra.mxu0 %v3056
      %3135 = vmatpush.bf16.msra.mxu0 %v3054
      %3136 = vmatpush.bf16.msra.mxu0 %v3052
      %3137 = vmatmul.bf16.gmra.mxu0 %v2900
      %v3138 = vpop.f32.mrf.mxu0
      %v3139 = vadd.f32 %v3110, %v3138
      %v3140 = vpop.f32.mrf.mxu0
      %v3141 = vadd.f32 %v3112, %v3140
      %3142 = vmatmul.bf16.gmra.mxu0 %v2902
      %v3143 = vpop.f32.mrf.mxu0
      %v3144 = vadd.f32 %v3115, %v3143
      %v3145 = vpop.f32.mrf.mxu0
      %v3146 = vadd.f32 %v3117, %v3145
      %3147 = vmatmul.bf16.gmra.mxu0 %v2904
      %v3148 = vpop.f32.mrf.mxu0
      %v3149 = vadd.f32 %v3120, %v3148
      %v3150 = vpop.f32.mrf.mxu0
      %v3151 = vadd.f32 %v3122, %v3150
      %3152 = vmatmul.bf16.gmra.mxu0 %v2906
      %v3153 = vpop.f32.mrf.mxu0
      %v3154 = vadd.f32 %v3125, %v3153
      %v3155 = vpop.f32.mrf.mxu0
      %v3156 = vadd.f32 %v3127, %v3155
      %3157 = vdwg.mxu0
      %3158 = vmatpush.bf16.msra.mxu0 %v3051
      %3159 = vmatpush.bf16.msra.mxu0 %v3049
      %3160 = vmatpush.bf16.msra.mxu0 %v3047
      %3161 = vmatpush.bf16.msra.mxu0 %v3045
      %3162 = vmatpush.bf16.msra.mxu0 %v3043
      %3163 = vmatpush.bf16.msra.mxu0 %v3041
      %3164 = vmatpush.bf16.msra.mxu0 %v3039
      %3165 = vmatpush.bf16.msra.mxu0 %v3037
      %3166 = vmatmul.bf16.gmra.mxu0 %v2899
      %v3167 = vpop.f32.mrf.mxu0
      %v3168 = vadd.f32 0.0, %v3167
      %v3169 = vpop.f32.mrf.mxu0
      %v3170 = vadd.f32 0.0, %v3169
      %3171 = vmatmul.bf16.gmra.mxu0 %v2901
      %v3172 = vpop.f32.mrf.mxu0
      %v3173 = vadd.f32 0.0, %v3172
      %v3174 = vpop.f32.mrf.mxu0
      %v3175 = vadd.f32 0.0, %v3174
      %3176 = vmatmul.bf16.gmra.mxu0 %v2903
      %v3177 = vpop.f32.mrf.mxu0
      %v3178 = vadd.f32 0.0, %v3177
      %v3179 = vpop.f32.mrf.mxu0
      %v3180 = vadd.f32 0.0, %v3179
      %3181 = vmatmul.bf16.gmra.mxu0 %v2905
      %v3182 = vpop.f32.mrf.mxu0
      %v3183 = vadd.f32 0.0, %v3182
      %v3184 = vpop.f32.mrf.mxu0
      %v3185 = vadd.f32 0.0, %v3184
      %3186 = vdwg.mxu0
      %3187 = vmatpush.bf16.msra.mxu0 %v3067
      %3188 = vmatpush.bf16.msra.mxu0 %v3065
      %3189 = vmatpush.bf16.msra.mxu0 %v3063
      %3190 = vmatpush.bf16.msra.mxu0 %v3061
      %3191 = vmatpush.bf16.msra.mxu0 %v3059
      %3192 = vmatpush.bf16.msra.mxu0 %v3057
      %3193 = vmatpush.bf16.msra.mxu0 %v3055
      %3194 = vmatpush.bf16.msra.mxu0 %v3053
      %3195 = vmatmul.bf16.gmra.mxu0 %v2900
      %v3196 = vpop.f32.mrf.mxu0
      %v3197 = vadd.f32 %v3168, %v3196
      %v3198 = vpop.f32.mrf.mxu0
      %v3199 = vadd.f32 %v3170, %v3198
      %3200 = vmatmul.bf16.gmra.mxu0 %v2902
      %v3201 = vpop.f32.mrf.mxu0
      %v3202 = vadd.f32 %v3173, %v3201
      %v3203 = vpop.f32.mrf.mxu0
      %v3204 = vadd.f32 %v3175, %v3203
      %3205 = vmatmul.bf16.gmra.mxu0 %v2904
      %v3206 = vpop.f32.mrf.mxu0
      %v3207 = vadd.f32 %v3178, %v3206
      %v3208 = vpop.f32.mrf.mxu0
      %v3209 = vadd.f32 %v3180, %v3208
      %3210 = vmatmul.bf16.gmra.mxu0 %v2906
      %v3211 = vpop.f32.mrf.mxu0
      %v3212 = vadd.f32 %v3183, %v3211
      %v3213 = vpop.f32.mrf.mxu0
      %v3214 = vadd.f32 %v3185, %v3213
      %3215 = vdwg.mxu0
      %v3216 = vadd.f32 %v2883, %v3139
      %v3217 = vadd.f32 %v2884, %v3197
      %v3218 = vadd.f32 %v2885, %v3141
      %v3219 = vadd.f32 %v2886, %v3199
      %v3220 = vadd.f32 %v2887, %v3144
      %v3221 = vadd.f32 %v2888, %v3202
      %v3222 = vadd.f32 %v2889, %v3146
      %v3223 = vadd.f32 %v2890, %v3204
      %v3224 = vadd.f32 %v2891, %v3149
      %v3225 = vadd.f32 %v2892, %v3207
      %v3226 = vadd.f32 %v2893, %v3151
      %v3227 = vadd.f32 %v2894, %v3209
      %v3228 = vadd.f32 %v2895, %v3154
      %v3229 = vadd.f32 %v2896, %v3212
      %v3230 = vadd.f32 %v2897, %v3156
      %v3231 = vadd.f32 %v2898, %v3214
      %3232 = vst [vmem:[#allocation3] sm:$0xff] %v3216
      %3233 = vst [vmem:[#allocation3 + $0x8] sm:$0xff] %v3217
      %3234 = vst [vmem:[#allocation3 + $0x10] sm:$0xff] %v3218
      %3235 = vst [vmem:[#allocation3 + $0x18] sm:$0xff] %v3219
      %3236 = vst [vmem:[#allocation3 + $0x20] sm:$0xff] %v3220
      %3237 = vst [vmem:[#allocation3 + $0x28] sm:$0xff] %v3221
      %3238 = vst [vmem:[#allocation3 + $0x30] sm:$0xff] %v3222
      %3239 = vst [vmem:[#allocation3 + $0x38] sm:$0xff] %v3223
      %3240 = vst [vmem:[#allocation3 + $0x40] sm:$0xff] %v3224
      %3241 = vst [vmem:[#allocation3 + $0x48] sm:$0xff] %v3225
      %3242 = vst [vmem:[#allocation3 + $0x50] sm:$0xff] %v3226
      %3243 = vst [vmem:[#allocation3 + $0x58] sm:$0xff] %v3227
      %3244 = vst [vmem:[#allocation3 + $0x60] sm:$0xff] %v3228
      %3245 = vst [vmem:[#allocation3 + $0x68] sm:$0xff] %v3229
      %3246 = vst [vmem:[#allocation3 + $0x70] sm:$0xff] %v3230
      %3247 = vst [vmem:[#allocation3 + $0x78] sm:$0xff] %v3231
      %s3248 = scalar_lea.vmem [#allocation2], 64
      %v3249 = vld [vmem:[%s3248] sm:$0xff]
      %v3250 = vld [vmem:[%s3248 + $0x8] sm:$0xff]
      %v3251 = vld [vmem:[%s3248 + $0x20] sm:$0xff]
      %v3252 = vld [vmem:[%s3248 + $0x28] sm:$0xff]
      %v3253 = vld [vmem:[%s3248 + $0x40] sm:$0xff]
      %v3254 = vld [vmem:[%s3248 + $0x48] sm:$0xff]
      %v3255 = vld [vmem:[%s3248 + $0x60] sm:$0xff]
      %v3256 = vld [vmem:[%s3248 + $0x68] sm:$0xff]
      %v3257 = vld [vmem:[%s3248 + $0x80] sm:$0xff]
      %v3258 = vld [vmem:[%s3248 + $0x88] sm:$0xff]
      %v3259 = vld [vmem:[%s3248 + $0xa0] sm:$0xff]
      %v3260 = vld [vmem:[%s3248 + $0xa8] sm:$0xff]
      %v3261 = vld [vmem:[%s3248 + $0xc0] sm:$0xff]
      %v3262 = vld [vmem:[%s3248 + $0xc8] sm:$0xff]
      %v3263 = vld [vmem:[%s3248 + $0xe0] sm:$0xff]
      %v3264 = vld [vmem:[%s3248 + $0xe8] sm:$0xff]
      %v3265 = vld [vmem:[#allocation3] sm:$0xff]
      %v3266 = vld [vmem:[#allocation3 + $0x8] sm:$0xff]
      %v3267 = vld [vmem:[#allocation3 + $0x10] sm:$0xff]
      %v3268 = vld [vmem:[#allocation3 + $0x18] sm:$0xff]
      %v3269 = vld [vmem:[#allocation3 + $0x20] sm:$0xff]
      %v3270 = vld [vmem:[#allocation3 + $0x28] sm:$0xff]
      %v3271 = vld [vmem:[#allocation3 + $0x30] sm:$0xff]
      %v3272 = vld [vmem:[#allocation3 + $0x38] sm:$0xff]
      %v3273 = vld [vmem:[#allocation3 + $0x40] sm:$0xff]
      %v3274 = vld [vmem:[#allocation3 + $0x48] sm:$0xff]
      %v3275 = vld [vmem:[#allocation3 + $0x50] sm:$0xff]
      %v3276 = vld [vmem:[#allocation3 + $0x58] sm:$0xff]
      %v3277 = vld [vmem:[#allocation3 + $0x60] sm:$0xff]
      %v3278 = vld [vmem:[#allocation3 + $0x68] sm:$0xff]
      %v3279 = vld [vmem:[#allocation3 + $0x70] sm:$0xff]
      %v3280 = vld [vmem:[#allocation3 + $0x78] sm:$0xff]
      %v3281 = vpack.c.bf16 %v3251, %v3249
      %v3282 = vpack.c.bf16 %v3252, %v3250
      %v3283 = vpack.c.bf16 %v3255, %v3253
      %v3284 = vpack.c.bf16 %v3256, %v3254
      %v3285 = vpack.c.bf16 %v3259, %v3257
      %v3286 = vpack.c.bf16 %v3260, %v3258
      %v3287 = vpack.c.bf16 %v3263, %v3261
      %v3288 = vpack.c.bf16 %v3264, %v3262
      %s3289 = scalar_lea.vmem %s3, 1536
      %v3290 = vld [vmem:[%s3289] sm:$0xff]
      %v3291 = vld [vmem:[%s3289 + $0x8] sm:$0xff]
      %v3292 = vld [vmem:[%s3289 + $0x10] sm:$0xff]
      %v3293 = vld [vmem:[%s3289 + $0x18] sm:$0xff]
      %v3294 = vld [vmem:[%s3289 + $0x20] sm:$0xff]
      %v3295 = vld [vmem:[%s3289 + $0x28] sm:$0xff]
      %v3296 = vld [vmem:[%s3289 + $0x30] sm:$0xff]
      %v3297 = vld [vmem:[%s3289 + $0x38] sm:$0xff]
      %v3298 = vld [vmem:[%s3289 + $0x40] sm:$0xff]
      %v3299 = vld [vmem:[%s3289 + $0x48] sm:$0xff]
      %v3300 = vld [vmem:[%s3289 + $0x50] sm:$0xff]
      %v3301 = vld [vmem:[%s3289 + $0x58] sm:$0xff]
      %v3302 = vld [vmem:[%s3289 + $0x60] sm:$0xff]
      %v3303 = vld [vmem:[%s3289 + $0x68] sm:$0xff]
      %v3304 = vld [vmem:[%s3289 + $0x70] sm:$0xff]
      %v3305 = vld [vmem:[%s3289 + $0x78] sm:$0xff]
      %v3306 = vld [vmem:[%s3289 + $0x80] sm:$0xff]
      %v3307 = vld [vmem:[%s3289 + $0x88] sm:$0xff]
      %v3308 = vld [vmem:[%s3289 + $0x90] sm:$0xff]
      %v3309 = vld [vmem:[%s3289 + $0x98] sm:$0xff]
      %v3310 = vld [vmem:[%s3289 + $0xa0] sm:$0xff]
      %v3311 = vld [vmem:[%s3289 + $0xa8] sm:$0xff]
      %v3312 = vld [vmem:[%s3289 + $0xb0] sm:$0xff]
      %v3313 = vld [vmem:[%s3289 + $0xb8] sm:$0xff]
      %v3314 = vld [vmem:[%s3289 + $0xc0] sm:$0xff]
      %v3315 = vld [vmem:[%s3289 + $0xc8] sm:$0xff]
      %v3316 = vld [vmem:[%s3289 + $0xd0] sm:$0xff]
      %v3317 = vld [vmem:[%s3289 + $0xd8] sm:$0xff]
      %v3318 = vld [vmem:[%s3289 + $0xe0] sm:$0xff]
      %v3319 = vld [vmem:[%s3289 + $0xe8] sm:$0xff]
      %v3320 = vld [vmem:[%s3289 + $0xf0] sm:$0xff]
      %v3321 = vld [vmem:[%s3289 + $0xf8] sm:$0xff]
      %v3354 = vunpack.c.l.b16 %v3290
      %v3355 = vunpack.c.h.b16 %v3290
      %v3356 = vunpack.c.l.b16 %v3291
      %v3357 = vunpack.c.h.b16 %v3291
      %v3358 = vunpack.c.l.b16 %v3292
      %v3359 = vunpack.c.h.b16 %v3292
      %v3360 = vunpack.c.l.b16 %v3293
      %v3361 = vunpack.c.h.b16 %v3293
      %v3362 = vunpack.c.l.b16 %v3294
      %v3363 = vunpack.c.h.b16 %v3294
      %v3364 = vunpack.c.l.b16 %v3295
      %v3365 = vunpack.c.h.b16 %v3295
      %v3366 = vunpack.c.l.b16 %v3296
      %v3367 = vunpack.c.h.b16 %v3296
      %v3368 = vunpack.c.l.b16 %v3297
      %v3369 = vunpack.c.h.b16 %v3297
      %v3370 = vunpack.c.l.b16 %v3298
      %v3371 = vunpack.c.h.b16 %v3298
      %v3372 = vunpack.c.l.b16 %v3299
      %v3373 = vunpack.c.h.b16 %v3299
      %v3374 = vunpack.c.l.b16 %v3300
      %v3375 = vunpack.c.h.b16 %v3300
      %v3376 = vunpack.c.l.b16 %v3301
      %v3377 = vunpack.c.h.b16 %v3301
      %v3378 = vunpack.c.l.b16 %v3302
      %v3379 = vunpack.c.h.b16 %v3302
      %v3380 = vunpack.c.l.b16 %v3303
      %v3381 = vunpack.c.h.b16 %v3303
      %v3382 = vunpack.c.l.b16 %v3304
      %v3383 = vunpack.c.h.b16 %v3304
      %v3384 = vunpack.c.l.b16 %v3305
      %v3385 = vunpack.c.h.b16 %v3305
      %v3386 = vunpack.c.l.b16 %v3306
      %v3387 = vunpack.c.h.b16 %v3306
      %v3388 = vunpack.c.l.b16 %v3307
      %v3389 = vunpack.c.h.b16 %v3307
      %v3390 = vunpack.c.l.b16 %v3308
      %v3391 = vunpack.c.h.b16 %v3308
      %v3392 = vunpack.c.l.b16 %v3309
      %v3393 = vunpack.c.h.b16 %v3309
      %v3394 = vunpack.c.l.b16 %v3310
      %v3395 = vunpack.c.h.b16 %v3310
      %v3396 = vunpack.c.l.b16 %v3311
      %v3397 = vunpack.c.h.b16 %v3311
      %v3398 = vunpack.c.l.b16 %v3312
      %v3399 = vunpack.c.h.b16 %v3312
      %v3400 = vunpack.c.l.b16 %v3313
      %v3401 = vunpack.c.h.b16 %v3313
      %v3402 = vunpack.c.l.b16 %v3314
      %v3403 = vunpack.c.h.b16 %v3314
      %v3404 = vunpack.c.l.b16 %v3315
      %v3405 = vunpack.c.h.b16 %v3315
      %v3406 = vunpack.c.l.b16 %v3316
      %v3407 = vunpack.c.h.b16 %v3316
      %v3408 = vunpack.c.l.b16 %v3317
      %v3409 = vunpack.c.h.b16 %v3317
      %v3410 = vunpack.c.l.b16 %v3318
      %v3411 = vunpack.c.h.b16 %v3318
      %v3412 = vunpack.c.l.b16 %v3319
      %v3413 = vunpack.c.h.b16 %v3319
      %v3414 = vunpack.c.l.b16 %v3320
      %v3415 = vunpack.c.h.b16 %v3320
      %v3416 = vunpack.c.l.b16 %v3321
      %v3417 = vunpack.c.h.b16 %v3321
      %v3418 = vpack.c.b16 %v3356, %v3354
      %v3419 = vpack.c.b16 %v3357, %v3355
      %v3420 = vpack.c.b16 %v3360, %v3358
      %v3421 = vpack.c.b16 %v3361, %v3359
      %v3422 = vpack.c.b16 %v3364, %v3362
      %v3423 = vpack.c.b16 %v3365, %v3363
      %v3424 = vpack.c.b16 %v3368, %v3366
      %v3425 = vpack.c.b16 %v3369, %v3367
      %v3426 = vpack.c.b16 %v3372, %v3370
      %v3427 = vpack.c.b16 %v3373, %v3371
      %v3428 = vpack.c.b16 %v3376, %v3374
      %v3429 = vpack.c.b16 %v3377, %v3375
      %v3430 = vpack.c.b16 %v3380, %v3378
      %v3431 = vpack.c.b16 %v3381, %v3379
      %v3432 = vpack.c.b16 %v3384, %v3382
      %v3433 = vpack.c.b16 %v3385, %v3383
      %v3434 = vpack.c.b16 %v3388, %v3386
      %v3435 = vpack.c.b16 %v3389, %v3387
      %v3436 = vpack.c.b16 %v3392, %v3390
      %v3437 = vpack.c.b16 %v3393, %v3391
      %v3438 = vpack.c.b16 %v3396, %v3394
      %v3439 = vpack.c.b16 %v3397, %v3395
      %v3440 = vpack.c.b16 %v3400, %v3398
      %v3441 = vpack.c.b16 %v3401, %v3399
      %v3442 = vpack.c.b16 %v3404, %v3402
      %v3443 = vpack.c.b16 %v3405, %v3403
      %v3444 = vpack.c.b16 %v3408, %v3406
      %v3445 = vpack.c.b16 %v3409, %v3407
      %v3446 = vpack.c.b16 %v3412, %v3410
      %v3447 = vpack.c.b16 %v3413, %v3411
      %v3448 = vpack.c.b16 %v3416, %v3414
      %v3449 = vpack.c.b16 %v3417, %v3415
      %3482 = vmatpush.bf16.msra.mxu0 %v3432
      %3483 = vmatpush.bf16.msra.mxu0 %v3430
      %3484 = vmatpush.bf16.msra.mxu0 %v3428
      %3485 = vmatpush.bf16.msra.mxu0 %v3426
      %3486 = vmatpush.bf16.msra.mxu0 %v3424
      %3487 = vmatpush.bf16.msra.mxu0 %v3422
      %3488 = vmatpush.bf16.msra.mxu0 %v3420
      %3489 = vmatpush.bf16.msra.mxu0 %v3418
      %3490 = vmatmul.bf16.gmra.mxu0 %v3281
      %v3491 = vpop.f32.mrf.mxu0
      %v3492 = vadd.f32 0.0, %v3491
      %v3493 = vpop.f32.mrf.mxu0
      %v3494 = vadd.f32 0.0, %v3493
      %3495 = vmatmul.bf16.gmra.mxu0 %v3283
      %v3496 = vpop.f32.mrf.mxu0
      %v3497 = vadd.f32 0.0, %v3496
      %v3498 = vpop.f32.mrf.mxu0
      %v3499 = vadd.f32 0.0, %v3498
      %3500 = vmatmul.bf16.gmra.mxu0 %v3285
      %v3501 = vpop.f32.mrf.mxu0
      %v3502 = vadd.f32 0.0, %v3501
      %v3503 = vpop.f32.mrf.mxu0
      %v3504 = vadd.f32 0.0, %v3503
      %3505 = vmatmul.bf16.gmra.mxu0 %v3287
      %v3506 = vpop.f32.mrf.mxu0
      %v3507 = vadd.f32 0.0, %v3506
      %v3508 = vpop.f32.mrf.mxu0
      %v3509 = vadd.f32 0.0, %v3508
      %3510 = vdwg.mxu0
      %3511 = vmatpush.bf16.msra.mxu0 %v3448
      %3512 = vmatpush.bf16.msra.mxu0 %v3446
      %3513 = vmatpush.bf16.msra.mxu0 %v3444
      %3514 = vmatpush.bf16.msra.mxu0 %v3442
      %3515 = vmatpush.bf16.msra.mxu0 %v3440
      %3516 = vmatpush.bf16.msra.mxu0 %v3438
      %3517 = vmatpush.bf16.msra.mxu0 %v3436
      %3518 = vmatpush.bf16.msra.mxu0 %v3434
      %3519 = vmatmul.bf16.gmra.mxu0 %v3282
      %v3520 = vpop.f32.mrf.mxu0
      %v3521 = vadd.f32 %v3492, %v3520
      %v3522 = vpop.f32.mrf.mxu0
      %v3523 = vadd.f32 %v3494, %v3522
      %3524 = vmatmul.bf16.gmra.mxu0 %v3284
      %v3525 = vpop.f32.mrf.mxu0
      %v3526 = vadd.f32 %v3497, %v3525
      %v3527 = vpop.f32.mrf.mxu0
      %v3528 = vadd.f32 %v3499, %v3527
      %3529 = vmatmul.bf16.gmra.mxu0 %v3286
      %v3530 = vpop.f32.mrf.mxu0
      %v3531 = vadd.f32 %v3502, %v3530
      %v3532 = vpop.f32.mrf.mxu0
      %v3533 = vadd.f32 %v3504, %v3532
      %3534 = vmatmul.bf16.gmra.mxu0 %v3288
      %v3535 = vpop.f32.mrf.mxu0
      %v3536 = vadd.f32 %v3507, %v3535
      %v3537 = vpop.f32.mrf.mxu0
      %v3538 = vadd.f32 %v3509, %v3537
      %3539 = vdwg.mxu0
      %3540 = vmatpush.bf16.msra.mxu0 %v3433
      %3541 = vmatpush.bf16.msra.mxu0 %v3431
      %3542 = vmatpush.bf16.msra.mxu0 %v3429
      %3543 = vmatpush.bf16.msra.mxu0 %v3427
      %3544 = vmatpush.bf16.msra.mxu0 %v3425
      %3545 = vmatpush.bf16.msra.mxu0 %v3423
      %3546 = vmatpush.bf16.msra.mxu0 %v3421
      %3547 = vmatpush.bf16.msra.mxu0 %v3419
      %3548 = vmatmul.bf16.gmra.mxu0 %v3281
      %v3549 = vpop.f32.mrf.mxu0
      %v3550 = vadd.f32 0.0, %v3549
      %v3551 = vpop.f32.mrf.mxu0
      %v3552 = vadd.f32 0.0, %v3551
      %3553 = vmatmul.bf16.gmra.mxu0 %v3283
      %v3554 = vpop.f32.mrf.mxu0
      %v3555 = vadd.f32 0.0, %v3554
      %v3556 = vpop.f32.mrf.mxu0
      %v3557 = vadd.f32 0.0, %v3556
      %3558 = vmatmul.bf16.gmra.mxu0 %v3285
      %v3559 = vpop.f32.mrf.mxu0
      %v3560 = vadd.f32 0.0, %v3559
      %v3561 = vpop.f32.mrf.mxu0
      %v3562 = vadd.f32 0.0, %v3561
      %3563 = vmatmul.bf16.gmra.mxu0 %v3287
      %v3564 = vpop.f32.mrf.mxu0
      %v3565 = vadd.f32 0.0, %v3564
      %v3566 = vpop.f32.mrf.mxu0
      %v3567 = vadd.f32 0.0, %v3566
      %3568 = vdwg.mxu0
      %3569 = vmatpush.bf16.msra.mxu0 %v3449
      %3570 = vmatpush.bf16.msra.mxu0 %v3447
      %3571 = vmatpush.bf16.msra.mxu0 %v3445
      %3572 = vmatpush.bf16.msra.mxu0 %v3443
      %3573 = vmatpush.bf16.msra.mxu0 %v3441
      %3574 = vmatpush.bf16.msra.mxu0 %v3439
      %3575 = vmatpush.bf16.msra.mxu0 %v3437
      %3576 = vmatpush.bf16.msra.mxu0 %v3435
      %3577 = vmatmul.bf16.gmra.mxu0 %v3282
      %v3578 = vpop.f32.mrf.mxu0
      %v3579 = vadd.f32 %v3550, %v3578
      %v3580 = vpop.f32.mrf.mxu0
      %v3581 = vadd.f32 %v3552, %v3580
      %3582 = vmatmul.bf16.gmra.mxu0 %v3284
      %v3583 = vpop.f32.mrf.mxu0
      %v3584 = vadd.f32 %v3555, %v3583
      %v3585 = vpop.f32.mrf.mxu0
      %v3586 = vadd.f32 %v3557, %v3585
      %3587 = vmatmul.bf16.gmra.mxu0 %v3286
      %v3588 = vpop.f32.mrf.mxu0
      %v3589 = vadd.f32 %v3560, %v3588
      %v3590 = vpop.f32.mrf.mxu0
      %v3591 = vadd.f32 %v3562, %v3590
      %3592 = vmatmul.bf16.gmra.mxu0 %v3288
      %v3593 = vpop.f32.mrf.mxu0
      %v3594 = vadd.f32 %v3565, %v3593
      %v3595 = vpop.f32.mrf.mxu0
      %v3596 = vadd.f32 %v3567, %v3595
      %3597 = vdwg.mxu0
      %v3598 = vadd.f32 %v3265, %v3521
      %v3599 = vadd.f32 %v3266, %v3579
      %v3600 = vadd.f32 %v3267, %v3523
      %v3601 = vadd.f32 %v3268, %v3581
      %v3602 = vadd.f32 %v3269, %v3526
      %v3603 = vadd.f32 %v3270, %v3584
      %v3604 = vadd.f32 %v3271, %v3528
      %v3605 = vadd.f32 %v3272, %v3586
      %v3606 = vadd.f32 %v3273, %v3531
      %v3607 = vadd.f32 %v3274, %v3589
      %v3608 = vadd.f32 %v3275, %v3533
      %v3609 = vadd.f32 %v3276, %v3591
      %v3610 = vadd.f32 %v3277, %v3536
      %v3611 = vadd.f32 %v3278, %v3594
      %v3612 = vadd.f32 %v3279, %v3538
      %v3613 = vadd.f32 %v3280, %v3596
      %3614 = vst [vmem:[#allocation3] sm:$0xff] %v3598
      %3615 = vst [vmem:[#allocation3 + $0x8] sm:$0xff] %v3599
      %3616 = vst [vmem:[#allocation3 + $0x10] sm:$0xff] %v3600
      %3617 = vst [vmem:[#allocation3 + $0x18] sm:$0xff] %v3601
      %3618 = vst [vmem:[#allocation3 + $0x20] sm:$0xff] %v3602
      %3619 = vst [vmem:[#allocation3 + $0x28] sm:$0xff] %v3603
      %3620 = vst [vmem:[#allocation3 + $0x30] sm:$0xff] %v3604
      %3621 = vst [vmem:[#allocation3 + $0x38] sm:$0xff] %v3605
      %3622 = vst [vmem:[#allocation3 + $0x40] sm:$0xff] %v3606
      %3623 = vst [vmem:[#allocation3 + $0x48] sm:$0xff] %v3607
      %3624 = vst [vmem:[#allocation3 + $0x50] sm:$0xff] %v3608
      %3625 = vst [vmem:[#allocation3 + $0x58] sm:$0xff] %v3609
      %3626 = vst [vmem:[#allocation3 + $0x60] sm:$0xff] %v3610
      %3627 = vst [vmem:[#allocation3 + $0x68] sm:$0xff] %v3611
      %3628 = vst [vmem:[#allocation3 + $0x70] sm:$0xff] %v3612
      %3629 = vst [vmem:[#allocation3 + $0x78] sm:$0xff] %v3613
      %v3630 = vld [vmem:[%s3248] sm:$0xfe]
      %v3631 = vld [vmem:[%s3248 + $0x8] sm:$0xfe]
      %v3632 = vld [vmem:[%s3248 + $0x10] sm:$0x1]
      %v3633 = vld [vmem:[%s3248 + $0x18] sm:$0x1]
      %v3634 = vld [vmem:[%s3248 + $0x20] sm:$0xfe]
      %v3635 = vld [vmem:[%s3248 + $0x28] sm:$0xfe]
      %v3636 = vld [vmem:[%s3248 + $0x30] sm:$0x1]
      %v3637 = vld [vmem:[%s3248 + $0x38] sm:$0x1]
      %v3638 = vld [vmem:[%s3248 + $0x40] sm:$0xfe]
      %v3639 = vld [vmem:[%s3248 + $0x48] sm:$0xfe]
      %v3640 = vld [vmem:[%s3248 + $0x50] sm:$0x1]
      %v3641 = vld [vmem:[%s3248 + $0x58] sm:$0x1]
      %v3642 = vld [vmem:[%s3248 + $0x60] sm:$0xfe]
      %v3643 = vld [vmem:[%s3248 + $0x68] sm:$0xfe]
      %v3644 = vld [vmem:[%s3248 + $0x70] sm:$0x1]
      %v3645 = vld [vmem:[%s3248 + $0x78] sm:$0x1]
      %v3646 = vld [vmem:[%s3248 + $0x80] sm:$0xfe]
      %v3647 = vld [vmem:[%s3248 + $0x88] sm:$0xfe]
      %v3648 = vld [vmem:[%s3248 + $0x90] sm:$0x1]
      %v3649 = vld [vmem:[%s3248 + $0x98] sm:$0x1]
      %v3650 = vld [vmem:[%s3248 + $0xa0] sm:$0xfe]
      %v3651 = vld [vmem:[%s3248 + $0xa8] sm:$0xfe]
      %v3652 = vld [vmem:[%s3248 + $0xb0] sm:$0x1]
      %v3653 = vld [vmem:[%s3248 + $0xb8] sm:$0x1]
      %v3654 = vld [vmem:[%s3248 + $0xc0] sm:$0xfe]
      %v3655 = vld [vmem:[%s3248 + $0xc8] sm:$0xfe]
      %v3656 = vld [vmem:[%s3248 + $0xd0] sm:$0x1]
      %v3657 = vld [vmem:[%s3248 + $0xd8] sm:$0x1]
      %v3658 = vld [vmem:[%s3248 + $0xe0] sm:$0xfe]
      %v3659 = vld [vmem:[%s3248 + $0xe8] sm:$0xfe]
      %v3660 = vld [vmem:[%s3248 + $0xf0] sm:$0x1]
      %v3661 = vld [vmem:[%s3248 + $0xf8] sm:$0x1]
      %v3694 = vrot.slane %v3630, 1
      %v3695 = vrot.slane %v3632, 1
      %v3696 = vsel %vm957, %v3694, %v3695
      %v3697 = vrot.slane %v3631, 1
      %v3698 = vrot.slane %v3633, 1
      %v3699 = vsel %vm957, %v3697, %v3698
      %v3700 = vrot.slane %v3634, 1
      %v3701 = vrot.slane %v3636, 1
      %v3702 = vsel %vm957, %v3700, %v3701
      %v3703 = vrot.slane %v3635, 1
      %v3704 = vrot.slane %v3637, 1
      %v3705 = vsel %vm957, %v3703, %v3704
      %v3706 = vrot.slane %v3638, 1
      %v3707 = vrot.slane %v3640, 1
      %v3708 = vsel %vm957, %v3706, %v3707
      %v3709 = vrot.slane %v3639, 1
      %v3710 = vrot.slane %v3641, 1
      %v3711 = vsel %vm957, %v3709, %v3710
      %v3712 = vrot.slane %v3642, 1
      %v3713 = vrot.slane %v3644, 1
      %v3714 = vsel %vm957, %v3712, %v3713
      %v3715 = vrot.slane %v3643, 1
      %v3716 = vrot.slane %v3645, 1
      %v3717 = vsel %vm957, %v3715, %v3716
      %v3718 = vrot.slane %v3646, 1
      %v3719 = vrot.slane %v3648, 1
      %v3720 = vsel %vm957, %v3718, %v3719
      %v3721 = vrot.slane %v3647, 1
      %v3722 = vrot.slane %v3649, 1
      %v3723 = vsel %vm957, %v3721, %v3722
      %v3724 = vrot.slane %v3650, 1
      %v3725 = vrot.slane %v3652, 1
      %v3726 = vsel %vm957, %v3724, %v3725
      %v3727 = vrot.slane %v3651, 1
      %v3728 = vrot.slane %v3653, 1
      %v3729 = vsel %vm957, %v3727, %v3728
      %v3730 = vrot.slane %v3654, 1
      %v3731 = vrot.slane %v3656, 1
      %v3732 = vsel %vm957, %v3730, %v3731
      %v3733 = vrot.slane %v3655, 1
      %v3734 = vrot.slane %v3657, 1
      %v3735 = vsel %vm957, %v3733, %v3734
      %v3736 = vrot.slane %v3658, 1
      %v3737 = vrot.slane %v3660, 1
      %v3738 = vsel %vm957, %v3736, %v3737
      %v3739 = vrot.slane %v3659, 1
      %v3740 = vrot.slane %v3661, 1
      %v3741 = vsel %vm957, %v3739, %v3740
      %v3758 = vld [vmem:[#allocation3] sm:$0xff]
      %v3759 = vld [vmem:[#allocation3 + $0x8] sm:$0xff]
      %v3760 = vld [vmem:[#allocation3 + $0x10] sm:$0xff]
      %v3761 = vld [vmem:[#allocation3 + $0x18] sm:$0xff]
      %v3762 = vld [vmem:[#allocation3 + $0x20] sm:$0xff]
      %v3763 = vld [vmem:[#allocation3 + $0x28] sm:$0xff]
      %v3764 = vld [vmem:[#allocation3 + $0x30] sm:$0xff]
      %v3765 = vld [vmem:[#allocation3 + $0x38] sm:$0xff]
      %v3766 = vld [vmem:[#allocation3 + $0x40] sm:$0xff]
      %v3767 = vld [vmem:[#allocation3 + $0x48] sm:$0xff]
      %v3768 = vld [vmem:[#allocation3 + $0x50] sm:$0xff]
      %v3769 = vld [vmem:[#allocation3 + $0x58] sm:$0xff]
      %v3770 = vld [vmem:[#allocation3 + $0x60] sm:$0xff]
      %v3771 = vld [vmem:[#allocation3 + $0x68] sm:$0xff]
      %v3772 = vld [vmem:[#allocation3 + $0x70] sm:$0xff]
      %v3773 = vld [vmem:[#allocation3 + $0x78] sm:$0xff]
      %v3774 = vpack.c.bf16 %v3702, %v3696
      %v3775 = vpack.c.bf16 %v3705, %v3699
      %v3776 = vpack.c.bf16 %v3714, %v3708
      %v3777 = vpack.c.bf16 %v3717, %v3711
      %v3778 = vpack.c.bf16 %v3726, %v3720
      %v3779 = vpack.c.bf16 %v3729, %v3723
      %v3780 = vpack.c.bf16 %v3738, %v3732
      %v3781 = vpack.c.bf16 %v3741, %v3735
      %s3782 = scalar_lea.vmem %s3, 1792
      %v3783 = vld [vmem:[%s3782] sm:$0xff]
      %v3784 = vld [vmem:[%s3782 + $0x8] sm:$0xff]
      %v3785 = vld [vmem:[%s3782 + $0x10] sm:$0xff]
      %v3786 = vld [vmem:[%s3782 + $0x18] sm:$0xff]
      %v3787 = vld [vmem:[%s3782 + $0x20] sm:$0xff]
      %v3788 = vld [vmem:[%s3782 + $0x28] sm:$0xff]
      %v3789 = vld [vmem:[%s3782 + $0x30] sm:$0xff]
      %v3790 = vld [vmem:[%s3782 + $0x38] sm:$0xff]
      %v3791 = vld [vmem:[%s3782 + $0x40] sm:$0xff]
      %v3792 = vld [vmem:[%s3782 + $0x48] sm:$0xff]
      %v3793 = vld [vmem:[%s3782 + $0x50] sm:$0xff]
      %v3794 = vld [vmem:[%s3782 + $0x58] sm:$0xff]
      %v3795 = vld [vmem:[%s3782 + $0x60] sm:$0xff]
      %v3796 = vld [vmem:[%s3782 + $0x68] sm:$0xff]
      %v3797 = vld [vmem:[%s3782 + $0x70] sm:$0xff]
      %v3798 = vld [vmem:[%s3782 + $0x78] sm:$0xff]
      %v3799 = vld [vmem:[%s3782 + $0x80] sm:$0xff]
      %v3800 = vld [vmem:[%s3782 + $0x88] sm:$0xff]
      %v3801 = vld [vmem:[%s3782 + $0x90] sm:$0xff]
      %v3802 = vld [vmem:[%s3782 + $0x98] sm:$0xff]
      %v3803 = vld [vmem:[%s3782 + $0xa0] sm:$0xff]
      %v3804 = vld [vmem:[%s3782 + $0xa8] sm:$0xff]
      %v3805 = vld [vmem:[%s3782 + $0xb0] sm:$0xff]
      %v3806 = vld [vmem:[%s3782 + $0xb8] sm:$0xff]
      %v3807 = vld [vmem:[%s3782 + $0xc0] sm:$0xff]
      %v3808 = vld [vmem:[%s3782 + $0xc8] sm:$0xff]
      %v3809 = vld [vmem:[%s3782 + $0xd0] sm:$0xff]
      %v3810 = vld [vmem:[%s3782 + $0xd8] sm:$0xff]
      %v3811 = vld [vmem:[%s3782 + $0xe0] sm:$0xff]
      %v3812 = vld [vmem:[%s3782 + $0xe8] sm:$0xff]
      %v3813 = vld [vmem:[%s3782 + $0xf0] sm:$0xff]
      %v3814 = vld [vmem:[%s3782 + $0xf8] sm:$0xff]
      %v3847 = vunpack.c.l.b16 %v3783
      %v3848 = vunpack.c.h.b16 %v3783
      %v3849 = vunpack.c.l.b16 %v3784
      %v3850 = vunpack.c.h.b16 %v3784
      %v3851 = vunpack.c.l.b16 %v3785
      %v3852 = vunpack.c.h.b16 %v3785
      %v3853 = vunpack.c.l.b16 %v3786
      %v3854 = vunpack.c.h.b16 %v3786
      %v3855 = vunpack.c.l.b16 %v3787
      %v3856 = vunpack.c.h.b16 %v3787
      %v3857 = vunpack.c.l.b16 %v3788
      %v3858 = vunpack.c.h.b16 %v3788
      %v3859 = vunpack.c.l.b16 %v3789
      %v3860 = vunpack.c.h.b16 %v3789
      %v3861 = vunpack.c.l.b16 %v3790
      %v3862 = vunpack.c.h.b16 %v3790
      %v3863 = vunpack.c.l.b16 %v3791
      %v3864 = vunpack.c.h.b16 %v3791
      %v3865 = vunpack.c.l.b16 %v3792
      %v3866 = vunpack.c.h.b16 %v3792
      %v3867 = vunpack.c.l.b16 %v3793
      %v3868 = vunpack.c.h.b16 %v3793
      %v3869 = vunpack.c.l.b16 %v3794
      %v3870 = vunpack.c.h.b16 %v3794
      %v3871 = vunpack.c.l.b16 %v3795
      %v3872 = vunpack.c.h.b16 %v3795
      %v3873 = vunpack.c.l.b16 %v3796
      %v3874 = vunpack.c.h.b16 %v3796
      %v3875 = vunpack.c.l.b16 %v3797
      %v3876 = vunpack.c.h.b16 %v3797
      %v3877 = vunpack.c.l.b16 %v3798
      %v3878 = vunpack.c.h.b16 %v3798
      %v3879 = vunpack.c.l.b16 %v3799
      %v3880 = vunpack.c.h.b16 %v3799
      %v3881 = vunpack.c.l.b16 %v3800
      %v3882 = vunpack.c.h.b16 %v3800
      %v3883 = vunpack.c.l.b16 %v3801
      %v3884 = vunpack.c.h.b16 %v3801
      %v3885 = vunpack.c.l.b16 %v3802
      %v3886 = vunpack.c.h.b16 %v3802
      %v3887 = vunpack.c.l.b16 %v3803
      %v3888 = vunpack.c.h.b16 %v3803
      %v3889 = vunpack.c.l.b16 %v3804
      %v3890 = vunpack.c.h.b16 %v3804
      %v3891 = vunpack.c.l.b16 %v3805
      %v3892 = vunpack.c.h.b16 %v3805
      %v3893 = vunpack.c.l.b16 %v3806
      %v3894 = vunpack.c.h.b16 %v3806
      %v3895 = vunpack.c.l.b16 %v3807
      %v3896 = vunpack.c.h.b16 %v3807
      %v3897 = vunpack.c.l.b16 %v3808
      %v3898 = vunpack.c.h.b16 %v3808
      %v3899 = vunpack.c.l.b16 %v3809
      %v3900 = vunpack.c.h.b16 %v3809
      %v3901 = vunpack.c.l.b16 %v3810
      %v3902 = vunpack.c.h.b16 %v3810
      %v3903 = vunpack.c.l.b16 %v3811
      %v3904 = vunpack.c.h.b16 %v3811
      %v3905 = vunpack.c.l.b16 %v3812
      %v3906 = vunpack.c.h.b16 %v3812
      %v3907 = vunpack.c.l.b16 %v3813
      %v3908 = vunpack.c.h.b16 %v3813
      %v3909 = vunpack.c.l.b16 %v3814
      %v3910 = vunpack.c.h.b16 %v3814
      %v3911 = vpack.c.b16 %v3849, %v3847
      %v3912 = vpack.c.b16 %v3850, %v3848
      %v3913 = vpack.c.b16 %v3853, %v3851
      %v3914 = vpack.c.b16 %v3854, %v3852
      %v3915 = vpack.c.b16 %v3857, %v3855
      %v3916 = vpack.c.b16 %v3858, %v3856
      %v3917 = vpack.c.b16 %v3861, %v3859
      %v3918 = vpack.c.b16 %v3862, %v3860
      %v3919 = vpack.c.b16 %v3865, %v3863
      %v3920 = vpack.c.b16 %v3866, %v3864
      %v3921 = vpack.c.b16 %v3869, %v3867
      %v3922 = vpack.c.b16 %v3870, %v3868
      %v3923 = vpack.c.b16 %v3873, %v3871
      %v3924 = vpack.c.b16 %v3874, %v3872
      %v3925 = vpack.c.b16 %v3877, %v3875
      %v3926 = vpack.c.b16 %v3878, %v3876
      %v3927 = vpack.c.b16 %v3881, %v3879
      %v3928 = vpack.c.b16 %v3882, %v3880
      %v3929 = vpack.c.b16 %v3885, %v3883
      %v3930 = vpack.c.b16 %v3886, %v3884
      %v3931 = vpack.c.b16 %v3889, %v3887
      %v3932 = vpack.c.b16 %v3890, %v3888
      %v3933 = vpack.c.b16 %v3893, %v3891
      %v3934 = vpack.c.b16 %v3894, %v3892
      %v3935 = vpack.c.b16 %v3897, %v3895
      %v3936 = vpack.c.b16 %v3898, %v3896
      %v3937 = vpack.c.b16 %v3901, %v3899
      %v3938 = vpack.c.b16 %v3902, %v3900
      %v3939 = vpack.c.b16 %v3905, %v3903
      %v3940 = vpack.c.b16 %v3906, %v3904
      %v3941 = vpack.c.b16 %v3909, %v3907
      %v3942 = vpack.c.b16 %v3910, %v3908
      %3975 = vmatpush.bf16.msra.mxu0 %v3925
      %3976 = vmatpush.bf16.msra.mxu0 %v3923
      %3977 = vmatpush.bf16.msra.mxu0 %v3921
      %3978 = vmatpush.bf16.msra.mxu0 %v3919
      %3979 = vmatpush.bf16.msra.mxu0 %v3917
      %3980 = vmatpush.bf16.msra.mxu0 %v3915
      %3981 = vmatpush.bf16.msra.mxu0 %v3913
      %3982 = vmatpush.bf16.msra.mxu0 %v3911
      %3983 = vmatmul.bf16.gmra.mxu0 %v3774
      %v3984 = vpop.f32.mrf.mxu0
      %v3985 = vadd.f32 0.0, %v3984
      %v3986 = vpop.f32.mrf.mxu0
      %v3987 = vadd.f32 0.0, %v3986
      %3988 = vmatmul.bf16.gmra.mxu0 %v3776
      %v3989 = vpop.f32.mrf.mxu0
      %v3990 = vadd.f32 0.0, %v3989
      %v3991 = vpop.f32.mrf.mxu0
      %v3992 = vadd.f32 0.0, %v3991
      %3993 = vmatmul.bf16.gmra.mxu0 %v3778
      %v3994 = vpop.f32.mrf.mxu0
      %v3995 = vadd.f32 0.0, %v3994
      %v3996 = vpop.f32.mrf.mxu0
      %v3997 = vadd.f32 0.0, %v3996
      %3998 = vmatmul.bf16.gmra.mxu0 %v3780
      %v3999 = vpop.f32.mrf.mxu0
      %v4000 = vadd.f32 0.0, %v3999
      %v4001 = vpop.f32.mrf.mxu0
      %v4002 = vadd.f32 0.0, %v4001
      %4003 = vdwg.mxu0
      %4004 = vmatpush.bf16.msra.mxu0 %v3941
      %4005 = vmatpush.bf16.msra.mxu0 %v3939
      %4006 = vmatpush.bf16.msra.mxu0 %v3937
      %4007 = vmatpush.bf16.msra.mxu0 %v3935
      %4008 = vmatpush.bf16.msra.mxu0 %v3933
      %4009 = vmatpush.bf16.msra.mxu0 %v3931
      %4010 = vmatpush.bf16.msra.mxu0 %v3929
      %4011 = vmatpush.bf16.msra.mxu0 %v3927
      %4012 = vmatmul.bf16.gmra.mxu0 %v3775
      %v4013 = vpop.f32.mrf.mxu0
      %v4014 = vadd.f32 %v3985, %v4013
      %v4015 = vpop.f32.mrf.mxu0
      %v4016 = vadd.f32 %v3987, %v4015
      %4017 = vmatmul.bf16.gmra.mxu0 %v3777
      %v4018 = vpop.f32.mrf.mxu0
      %v4019 = vadd.f32 %v3990, %v4018
      %v4020 = vpop.f32.mrf.mxu0
      %v4021 = vadd.f32 %v3992, %v4020
      %4022 = vmatmul.bf16.gmra.mxu0 %v3779
      %v4023 = vpop.f32.mrf.mxu0
      %v4024 = vadd.f32 %v3995, %v4023
      %v4025 = vpop.f32.mrf.mxu0
      %v4026 = vadd.f32 %v3997, %v4025
      %4027 = vmatmul.bf16.gmra.mxu0 %v3781
      %v4028 = vpop.f32.mrf.mxu0
      %v4029 = vadd.f32 %v4000, %v4028
      %v4030 = vpop.f32.mrf.mxu0
      %v4031 = vadd.f32 %v4002, %v4030
      %4032 = vdwg.mxu0
      %4033 = vmatpush.bf16.msra.mxu0 %v3926
      %4034 = vmatpush.bf16.msra.mxu0 %v3924
      %4035 = vmatpush.bf16.msra.mxu0 %v3922
      %4036 = vmatpush.bf16.msra.mxu0 %v3920
      %4037 = vmatpush.bf16.msra.mxu0 %v3918
      %4038 = vmatpush.bf16.msra.mxu0 %v3916
      %4039 = vmatpush.bf16.msra.mxu0 %v3914
      %4040 = vmatpush.bf16.msra.mxu0 %v3912
      %4041 = vmatmul.bf16.gmra.mxu0 %v3774
      %v4042 = vpop.f32.mrf.mxu0
      %v4043 = vadd.f32 0.0, %v4042
      %v4044 = vpop.f32.mrf.mxu0
      %v4045 = vadd.f32 0.0, %v4044
      %4046 = vmatmul.bf16.gmra.mxu0 %v3776
      %v4047 = vpop.f32.mrf.mxu0
      %v4048 = vadd.f32 0.0, %v4047
      %v4049 = vpop.f32.mrf.mxu0
      %v4050 = vadd.f32 0.0, %v4049
      %4051 = vmatmul.bf16.gmra.mxu0 %v3778
      %v4052 = vpop.f32.mrf.mxu0
      %v4053 = vadd.f32 0.0, %v4052
      %v4054 = vpop.f32.mrf.mxu0
      %v4055 = vadd.f32 0.0, %v4054
      %4056 = vmatmul.bf16.gmra.mxu0 %v3780
      %v4057 = vpop.f32.mrf.mxu0
      %v4058 = vadd.f32 0.0, %v4057
      %v4059 = vpop.f32.mrf.mxu0
      %v4060 = vadd.f32 0.0, %v4059
      %4061 = vdwg.mxu0
      %4062 = vmatpush.bf16.msra.mxu0 %v3942
      %4063 = vmatpush.bf16.msra.mxu0 %v3940
      %4064 = vmatpush.bf16.msra.mxu0 %v3938
      %4065 = vmatpush.bf16.msra.mxu0 %v3936
      %4066 = vmatpush.bf16.msra.mxu0 %v3934
      %4067 = vmatpush.bf16.msra.mxu0 %v3932
      %4068 = vmatpush.bf16.msra.mxu0 %v3930
      %4069 = vmatpush.bf16.msra.mxu0 %v3928
      %4070 = vmatmul.bf16.gmra.mxu0 %v3775
      %v4071 = vpop.f32.mrf.mxu0
      %v4072 = vadd.f32 %v4043, %v4071
      %v4073 = vpop.f32.mrf.mxu0
      %v4074 = vadd.f32 %v4045, %v4073
      %4075 = vmatmul.bf16.gmra.mxu0 %v3777
      %v4076 = vpop.f32.mrf.mxu0
      %v4077 = vadd.f32 %v4048, %v4076
      %v4078 = vpop.f32.mrf.mxu0
      %v4079 = vadd.f32 %v4050, %v4078
      %4080 = vmatmul.bf16.gmra.mxu0 %v3779
      %v4081 = vpop.f32.mrf.mxu0
      %v4082 = vadd.f32 %v4053, %v4081
      %v4083 = vpop.f32.mrf.mxu0
      %v4084 = vadd.f32 %v4055, %v4083
      %4085 = vmatmul.bf16.gmra.mxu0 %v3781
      %v4086 = vpop.f32.mrf.mxu0
      %v4087 = vadd.f32 %v4058, %v4086
      %v4088 = vpop.f32.mrf.mxu0
      %v4089 = vadd.f32 %v4060, %v4088
      %4090 = vdwg.mxu0
      %v4091 = vadd.f32 %v3758, %v4014
      %v4092 = vadd.f32 %v3759, %v4072
      %v4093 = vadd.f32 %v3760, %v4016
      %v4094 = vadd.f32 %v3761, %v4074
      %v4095 = vadd.f32 %v3762, %v4019
      %v4096 = vadd.f32 %v3763, %v4077
      %v4097 = vadd.f32 %v3764, %v4021
      %v4098 = vadd.f32 %v3765, %v4079
      %v4099 = vadd.f32 %v3766, %v4024
      %v4100 = vadd.f32 %v3767, %v4082
      %v4101 = vadd.f32 %v3768, %v4026
      %v4102 = vadd.f32 %v3769, %v4084
      %v4103 = vadd.f32 %v3770, %v4029
      %v4104 = vadd.f32 %v3771, %v4087
      %v4105 = vadd.f32 %v3772, %v4031
      %v4106 = vadd.f32 %v3773, %v4089
      %4107 = vst [vmem:[#allocation3] sm:$0xff] %v4091
      %4108 = vst [vmem:[#allocation3 + $0x8] sm:$0xff] %v4092
      %4109 = vst [vmem:[#allocation3 + $0x10] sm:$0xff] %v4093
      %4110 = vst [vmem:[#allocation3 + $0x18] sm:$0xff] %v4094
      %4111 = vst [vmem:[#allocation3 + $0x20] sm:$0xff] %v4095
      %4112 = vst [vmem:[#allocation3 + $0x28] sm:$0xff] %v4096
      %4113 = vst [vmem:[#allocation3 + $0x30] sm:$0xff] %v4097
      %4114 = vst [vmem:[#allocation3 + $0x38] sm:$0xff] %v4098
      %4115 = vst [vmem:[#allocation3 + $0x40] sm:$0xff] %v4099
      %4116 = vst [vmem:[#allocation3 + $0x48] sm:$0xff] %v4100
      %4117 = vst [vmem:[#allocation3 + $0x50] sm:$0xff] %v4101
      %4118 = vst [vmem:[#allocation3 + $0x58] sm:$0xff] %v4102
      %4119 = vst [vmem:[#allocation3 + $0x60] sm:$0xff] %v4103
      %4120 = vst [vmem:[#allocation3 + $0x68] sm:$0xff] %v4104
      %4121 = vst [vmem:[#allocation3 + $0x70] sm:$0xff] %v4105
      %4122 = vst [vmem:[#allocation3 + $0x78] sm:$0xff] %v4106
      %v4123 = vld [vmem:[%s3248] sm:$0xfc]
      %v4124 = vld [vmem:[%s3248 + $0x8] sm:$0xfc]
      %v4125 = vld [vmem:[%s3248 + $0x10] sm:$0x3]
      %v4126 = vld [vmem:[%s3248 + $0x18] sm:$0x3]
      %v4127 = vld [vmem:[%s3248 + $0x20] sm:$0xfc]
      %v4128 = vld [vmem:[%s3248 + $0x28] sm:$0xfc]
      %v4129 = vld [vmem:[%s3248 + $0x30] sm:$0x3]
      %v4130 = vld [vmem:[%s3248 + $0x38] sm:$0x3]
      %v4131 = vld [vmem:[%s3248 + $0x40] sm:$0xfc]
      %v4132 = vld [vmem:[%s3248 + $0x48] sm:$0xfc]
      %v4133 = vld [vmem:[%s3248 + $0x50] sm:$0x3]
      %v4134 = vld [vmem:[%s3248 + $0x58] sm:$0x3]
      %v4135 = vld [vmem:[%s3248 + $0x60] sm:$0xfc]
      %v4136 = vld [vmem:[%s3248 + $0x68] sm:$0xfc]
      %v4137 = vld [vmem:[%s3248 + $0x70] sm:$0x3]
      %v4138 = vld [vmem:[%s3248 + $0x78] sm:$0x3]
      %v4139 = vld [vmem:[%s3248 + $0x80] sm:$0xfc]
      %v4140 = vld [vmem:[%s3248 + $0x88] sm:$0xfc]
      %v4141 = vld [vmem:[%s3248 + $0x90] sm:$0x3]
      %v4142 = vld [vmem:[%s3248 + $0x98] sm:$0x3]
      %v4143 = vld [vmem:[%s3248 + $0xa0] sm:$0xfc]
      %v4144 = vld [vmem:[%s3248 + $0xa8] sm:$0xfc]
      %v4145 = vld [vmem:[%s3248 + $0xb0] sm:$0x3]
      %v4146 = vld [vmem:[%s3248 + $0xb8] sm:$0x3]
      %v4147 = vld [vmem:[%s3248 + $0xc0] sm:$0xfc]
      %v4148 = vld [vmem:[%s3248 + $0xc8] sm:$0xfc]
      %v4149 = vld [vmem:[%s3248 + $0xd0] sm:$0x3]
      %v4150 = vld [vmem:[%s3248 + $0xd8] sm:$0x3]
      %v4151 = vld [vmem:[%s3248 + $0xe0] sm:$0xfc]
      %v4152 = vld [vmem:[%s3248 + $0xe8] sm:$0xfc]
      %v4153 = vld [vmem:[%s3248 + $0xf0] sm:$0x3]
      %v4154 = vld [vmem:[%s3248 + $0xf8] sm:$0x3]
      %v4187 = vrot.slane %v4123, 2
      %v4188 = vrot.slane %v4125, 2
      %v4189 = vsel %vm1451, %v4187, %v4188
      %v4190 = vrot.slane %v4124, 2
      %v4191 = vrot.slane %v4126, 2
      %v4192 = vsel %vm1451, %v4190, %v4191
      %v4193 = vrot.slane %v4127, 2
      %v4194 = vrot.slane %v4129, 2
      %v4195 = vsel %vm1451, %v4193, %v4194
      %v4196 = vrot.slane %v4128, 2
      %v4197 = vrot.slane %v4130, 2
      %v4198 = vsel %vm1451, %v4196, %v4197
      %v4199 = vrot.slane %v4131, 2
      %v4200 = vrot.slane %v4133, 2
      %v4201 = vsel %vm1451, %v4199, %v4200
      %v4202 = vrot.slane %v4132, 2
      %v4203 = vrot.slane %v4134, 2
      %v4204 = vsel %vm1451, %v4202, %v4203
      %v4205 = vrot.slane %v4135, 2
      %v4206 = vrot.slane %v4137, 2
      %v4207 = vsel %vm1451, %v4205, %v4206
      %v4208 = vrot.slane %v4136, 2
      %v4209 = vrot.slane %v4138, 2
      %v4210 = vsel %vm1451, %v4208, %v4209
      %v4211 = vrot.slane %v4139, 2
      %v4212 = vrot.slane %v4141, 2
      %v4213 = vsel %vm1451, %v4211, %v4212
      %v4214 = vrot.slane %v4140, 2
      %v4215 = vrot.slane %v4142, 2
      %v4216 = vsel %vm1451, %v4214, %v4215
      %v4217 = vrot.slane %v4143, 2
      %v4218 = vrot.slane %v4145, 2
      %v4219 = vsel %vm1451, %v4217, %v4218
      %v4220 = vrot.slane %v4144, 2
      %v4221 = vrot.slane %v4146, 2
      %v4222 = vsel %vm1451, %v4220, %v4221
      %v4223 = vrot.slane %v4147, 2
      %v4224 = vrot.slane %v4149, 2
      %v4225 = vsel %vm1451, %v4223, %v4224
      %v4226 = vrot.slane %v4148, 2
      %v4227 = vrot.slane %v4150, 2
      %v4228 = vsel %vm1451, %v4226, %v4227
      %v4229 = vrot.slane %v4151, 2
      %v4230 = vrot.slane %v4153, 2
      %v4231 = vsel %vm1451, %v4229, %v4230
      %v4232 = vrot.slane %v4152, 2
      %v4233 = vrot.slane %v4154, 2
      %v4234 = vsel %vm1451, %v4232, %v4233
      %v4251 = vld [vmem:[#allocation3] sm:$0xff]
      %v4252 = vld [vmem:[#allocation3 + $0x8] sm:$0xff]
      %v4253 = vld [vmem:[#allocation3 + $0x10] sm:$0xff]
      %v4254 = vld [vmem:[#allocation3 + $0x18] sm:$0xff]
      %v4255 = vld [vmem:[#allocation3 + $0x20] sm:$0xff]
      %v4256 = vld [vmem:[#allocation3 + $0x28] sm:$0xff]
      %v4257 = vld [vmem:[#allocation3 + $0x30] sm:$0xff]
      %v4258 = vld [vmem:[#allocation3 + $0x38] sm:$0xff]
      %v4259 = vld [vmem:[#allocation3 + $0x40] sm:$0xff]
      %v4260 = vld [vmem:[#allocation3 + $0x48] sm:$0xff]
      %v4261 = vld [vmem:[#allocation3 + $0x50] sm:$0xff]
      %v4262 = vld [vmem:[#allocation3 + $0x58] sm:$0xff]
      %v4263 = vld [vmem:[#allocation3 + $0x60] sm:$0xff]
      %v4264 = vld [vmem:[#allocation3 + $0x68] sm:$0xff]
      %v4265 = vld [vmem:[#allocation3 + $0x70] sm:$0xff]
      %v4266 = vld [vmem:[#allocation3 + $0x78] sm:$0xff]
      %v4267 = vpack.c.bf16 %v4195, %v4189
      %v4268 = vpack.c.bf16 %v4198, %v4192
      %v4269 = vpack.c.bf16 %v4207, %v4201
      %v4270 = vpack.c.bf16 %v4210, %v4204
      %v4271 = vpack.c.bf16 %v4219, %v4213
      %v4272 = vpack.c.bf16 %v4222, %v4216
      %v4273 = vpack.c.bf16 %v4231, %v4225
      %v4274 = vpack.c.bf16 %v4234, %v4228
      %s4275 = scalar_lea.vmem %s3, 2048
      %v4276 = vld [vmem:[%s4275] sm:$0xff]
      %v4277 = vld [vmem:[%s4275 + $0x8] sm:$0xff]
      %v4278 = vld [vmem:[%s4275 + $0x10] sm:$0xff]
      %v4279 = vld [vmem:[%s4275 + $0x18] sm:$0xff]
      %v4280 = vld [vmem:[%s4275 + $0x20] sm:$0xff]
      %v4281 = vld [vmem:[%s4275 + $0x28] sm:$0xff]
      %v4282 = vld [vmem:[%s4275 + $0x30] sm:$0xff]
      %v4283 = vld [vmem:[%s4275 + $0x38] sm:$0xff]
      %v4284 = vld [vmem:[%s4275 + $0x40] sm:$0xff]
      %v4285 = vld [vmem:[%s4275 + $0x48] sm:$0xff]
      %v4286 = vld [vmem:[%s4275 + $0x50] sm:$0xff]
      %v4287 = vld [vmem:[%s4275 + $0x58] sm:$0xff]
      %v4288 = vld [vmem:[%s4275 + $0x60] sm:$0xff]
      %v4289 = vld [vmem:[%s4275 + $0x68] sm:$0xff]
      %v4290 = vld [vmem:[%s4275 + $0x70] sm:$0xff]
      %v4291 = vld [vmem:[%s4275 + $0x78] sm:$0xff]
      %v4292 = vld [vmem:[%s4275 + $0x80] sm:$0xff]
      %v4293 = vld [vmem:[%s4275 + $0x88] sm:$0xff]
      %v4294 = vld [vmem:[%s4275 + $0x90] sm:$0xff]
      %v4295 = vld [vmem:[%s4275 + $0x98] sm:$0xff]
      %v4296 = vld [vmem:[%s4275 + $0xa0] sm:$0xff]
      %v4297 = vld [vmem:[%s4275 + $0xa8] sm:$0xff]
      %v4298 = vld [vmem:[%s4275 + $0xb0] sm:$0xff]
      %v4299 = vld [vmem:[%s4275 + $0xb8] sm:$0xff]
      %v4300 = vld [vmem:[%s4275 + $0xc0] sm:$0xff]
      %v4301 = vld [vmem:[%s4275 + $0xc8] sm:$0xff]
      %v4302 = vld [vmem:[%s4275 + $0xd0] sm:$0xff]
      %v4303 = vld [vmem:[%s4275 + $0xd8] sm:$0xff]
      %v4304 = vld [vmem:[%s4275 + $0xe0] sm:$0xff]
      %v4305 = vld [vmem:[%s4275 + $0xe8] sm:$0xff]
      %v4306 = vld [vmem:[%s4275 + $0xf0] sm:$0xff]
      %v4307 = vld [vmem:[%s4275 + $0xf8] sm:$0xff]
      %v4340 = vunpack.c.l.b16 %v4276
      %v4341 = vunpack.c.h.b16 %v4276
      %v4342 = vunpack.c.l.b16 %v4277
      %v4343 = vunpack.c.h.b16 %v4277
      %v4344 = vunpack.c.l.b16 %v4278
      %v4345 = vunpack.c.h.b16 %v4278
      %v4346 = vunpack.c.l.b16 %v4279
      %v4347 = vunpack.c.h.b16 %v4279
      %v4348 = vunpack.c.l.b16 %v4280
      %v4349 = vunpack.c.h.b16 %v4280
      %v4350 = vunpack.c.l.b16 %v4281
      %v4351 = vunpack.c.h.b16 %v4281
      %v4352 = vunpack.c.l.b16 %v4282
      %v4353 = vunpack.c.h.b16 %v4282
      %v4354 = vunpack.c.l.b16 %v4283
      %v4355 = vunpack.c.h.b16 %v4283
      %v4356 = vunpack.c.l.b16 %v4284
      %v4357 = vunpack.c.h.b16 %v4284
      %v4358 = vunpack.c.l.b16 %v4285
      %v4359 = vunpack.c.h.b16 %v4285
      %v4360 = vunpack.c.l.b16 %v4286
      %v4361 = vunpack.c.h.b16 %v4286
      %v4362 = vunpack.c.l.b16 %v4287
      %v4363 = vunpack.c.h.b16 %v4287
      %v4364 = vunpack.c.l.b16 %v4288
      %v4365 = vunpack.c.h.b16 %v4288
      %v4366 = vunpack.c.l.b16 %v4289
      %v4367 = vunpack.c.h.b16 %v4289
      %v4368 = vunpack.c.l.b16 %v4290
      %v4369 = vunpack.c.h.b16 %v4290
      %v4370 = vunpack.c.l.b16 %v4291
      %v4371 = vunpack.c.h.b16 %v4291
      %v4372 = vunpack.c.l.b16 %v4292
      %v4373 = vunpack.c.h.b16 %v4292
      %v4374 = vunpack.c.l.b16 %v4293
      %v4375 = vunpack.c.h.b16 %v4293
      %v4376 = vunpack.c.l.b16 %v4294
      %v4377 = vunpack.c.h.b16 %v4294
      %v4378 = vunpack.c.l.b16 %v4295
      %v4379 = vunpack.c.h.b16 %v4295
      %v4380 = vunpack.c.l.b16 %v4296
      %v4381 = vunpack.c.h.b16 %v4296
      %v4382 = vunpack.c.l.b16 %v4297
      %v4383 = vunpack.c.h.b16 %v4297
      %v4384 = vunpack.c.l.b16 %v4298
      %v4385 = vunpack.c.h.b16 %v4298
      %v4386 = vunpack.c.l.b16 %v4299
      %v4387 = vunpack.c.h.b16 %v4299
      %v4388 = vunpack.c.l.b16 %v4300
      %v4389 = vunpack.c.h.b16 %v4300
      %v4390 = vunpack.c.l.b16 %v4301
      %v4391 = vunpack.c.h.b16 %v4301
      %v4392 = vunpack.c.l.b16 %v4302
      %v4393 = vunpack.c.h.b16 %v4302
      %v4394 = vunpack.c.l.b16 %v4303
      %v4395 = vunpack.c.h.b16 %v4303
      %v4396 = vunpack.c.l.b16 %v4304
      %v4397 = vunpack.c.h.b16 %v4304
      %v4398 = vunpack.c.l.b16 %v4305
      %v4399 = vunpack.c.h.b16 %v4305
      %v4400 = vunpack.c.l.b16 %v4306
      %v4401 = vunpack.c.h.b16 %v4306
      %v4402 = vunpack.c.l.b16 %v4307
      %v4403 = vunpack.c.h.b16 %v4307
      %v4404 = vpack.c.b16 %v4342, %v4340
      %v4405 = vpack.c.b16 %v4343, %v4341
      %v4406 = vpack.c.b16 %v4346, %v4344
      %v4407 = vpack.c.b16 %v4347, %v4345
      %v4408 = vpack.c.b16 %v4350, %v4348
      %v4409 = vpack.c.b16 %v4351, %v4349
      %v4410 = vpack.c.b16 %v4354, %v4352
      %v4411 = vpack.c.b16 %v4355, %v4353
      %v4412 = vpack.c.b16 %v4358, %v4356
      %v4413 = vpack.c.b16 %v4359, %v4357
      %v4414 = vpack.c.b16 %v4362, %v4360
      %v4415 = vpack.c.b16 %v4363, %v4361
      %v4416 = vpack.c.b16 %v4366, %v4364
      %v4417 = vpack.c.b16 %v4367, %v4365
      %v4418 = vpack.c.b16 %v4370, %v4368
      %v4419 = vpack.c.b16 %v4371, %v4369
      %v4420 = vpack.c.b16 %v4374, %v4372
      %v4421 = vpack.c.b16 %v4375, %v4373
      %v4422 = vpack.c.b16 %v4378, %v4376
      %v4423 = vpack.c.b16 %v4379, %v4377
      %v4424 = vpack.c.b16 %v4382, %v4380
      %v4425 = vpack.c.b16 %v4383, %v4381
      %v4426 = vpack.c.b16 %v4386, %v4384
      %v4427 = vpack.c.b16 %v4387, %v4385
      %v4428 = vpack.c.b16 %v4390, %v4388
      %v4429 = vpack.c.b16 %v4391, %v4389
      %v4430 = vpack.c.b16 %v4394, %v4392
      %v4431 = vpack.c.b16 %v4395, %v4393
      %v4432 = vpack.c.b16 %v4398, %v4396
      %v4433 = vpack.c.b16 %v4399, %v4397
      %v4434 = vpack.c.b16 %v4402, %v4400
      %v4435 = vpack.c.b16 %v4403, %v4401
      %4468 = vmatpush.bf16.msra.mxu0 %v4418
      %4469 = vmatpush.bf16.msra.mxu0 %v4416
      %4470 = vmatpush.bf16.msra.mxu0 %v4414
      %4471 = vmatpush.bf16.msra.mxu0 %v4412
      %4472 = vmatpush.bf16.msra.mxu0 %v4410
      %4473 = vmatpush.bf16.msra.mxu0 %v4408
      %4474 = vmatpush.bf16.msra.mxu0 %v4406
      %4475 = vmatpush.bf16.msra.mxu0 %v4404
      %4476 = vmatmul.bf16.gmra.mxu0 %v4267
      %v4477 = vpop.f32.mrf.mxu0
      %v4478 = vadd.f32 0.0, %v4477
      %v4479 = vpop.f32.mrf.mxu0
      %v4480 = vadd.f32 0.0, %v4479
      %4481 = vmatmul.bf16.gmra.mxu0 %v4269
      %v4482 = vpop.f32.mrf.mxu0
      %v4483 = vadd.f32 0.0, %v4482
      %v4484 = vpop.f32.mrf.mxu0
      %v4485 = vadd.f32 0.0, %v4484
      %4486 = vmatmul.bf16.gmra.mxu0 %v4271
      %v4487 = vpop.f32.mrf.mxu0
      %v4488 = vadd.f32 0.0, %v4487
      %v4489 = vpop.f32.mrf.mxu0
      %v4490 = vadd.f32 0.0, %v4489
      %4491 = vmatmul.bf16.gmra.mxu0 %v4273
      %v4492 = vpop.f32.mrf.mxu0
      %v4493 = vadd.f32 0.0, %v4492
      %v4494 = vpop.f32.mrf.mxu0
      %v4495 = vadd.f32 0.0, %v4494
      %4496 = vdwg.mxu0
      %4497 = vmatpush.bf16.msra.mxu0 %v4434
      %4498 = vmatpush.bf16.msra.mxu0 %v4432
      %4499 = vmatpush.bf16.msra.mxu0 %v4430
      %4500 = vmatpush.bf16.msra.mxu0 %v4428
      %4501 = vmatpush.bf16.msra.mxu0 %v4426
      %4502 = vmatpush.bf16.msra.mxu0 %v4424
      %4503 = vmatpush.bf16.msra.mxu0 %v4422
      %4504 = vmatpush.bf16.msra.mxu0 %v4420
      %4505 = vmatmul.bf16.gmra.mxu0 %v4268
      %v4506 = vpop.f32.mrf.mxu0
      %v4507 = vadd.f32 %v4478, %v4506
      %v4508 = vpop.f32.mrf.mxu0
      %v4509 = vadd.f32 %v4480, %v4508
      %4510 = vmatmul.bf16.gmra.mxu0 %v4270
      %v4511 = vpop.f32.mrf.mxu0
      %v4512 = vadd.f32 %v4483, %v4511
      %v4513 = vpop.f32.mrf.mxu0
      %v4514 = vadd.f32 %v4485, %v4513
      %4515 = vmatmul.bf16.gmra.mxu0 %v4272
      %v4516 = vpop.f32.mrf.mxu0
      %v4517 = vadd.f32 %v4488, %v4516
      %v4518 = vpop.f32.mrf.mxu0
      %v4519 = vadd.f32 %v4490, %v4518
      %4520 = vmatmul.bf16.gmra.mxu0 %v4274
      %v4521 = vpop.f32.mrf.mxu0
      %v4522 = vadd.f32 %v4493, %v4521
      %v4523 = vpop.f32.mrf.mxu0
      %v4524 = vadd.f32 %v4495, %v4523
      %4525 = vdwg.mxu0
      %4526 = vmatpush.bf16.msra.mxu0 %v4419
      %4527 = vmatpush.bf16.msra.mxu0 %v4417
      %4528 = vmatpush.bf16.msra.mxu0 %v4415
      %4529 = vmatpush.bf16.msra.mxu0 %v4413
      %4530 = vmatpush.bf16.msra.mxu0 %v4411
      %4531 = vmatpush.bf16.msra.mxu0 %v4409
      %4532 = vmatpush.bf16.msra.mxu0 %v4407
      %4533 = vmatpush.bf16.msra.mxu0 %v4405
      %4534 = vmatmul.bf16.gmra.mxu0 %v4267
      %v4535 = vpop.f32.mrf.mxu0
      %v4536 = vadd.f32 0.0, %v4535
      %v4537 = vpop.f32.mrf.mxu0
      %v4538 = vadd.f32 0.0, %v4537
      %4539 = vmatmul.bf16.gmra.mxu0 %v4269
      %v4540 = vpop.f32.mrf.mxu0
      %v4541 = vadd.f32 0.0, %v4540
      %v4542 = vpop.f32.mrf.mxu0
      %v4543 = vadd.f32 0.0, %v4542
      %4544 = vmatmul.bf16.gmra.mxu0 %v4271
      %v4545 = vpop.f32.mrf.mxu0
      %v4546 = vadd.f32 0.0, %v4545
      %v4547 = vpop.f32.mrf.mxu0
      %v4548 = vadd.f32 0.0, %v4547
      %4549 = vmatmul.bf16.gmra.mxu0 %v4273
      %v4550 = vpop.f32.mrf.mxu0
      %v4551 = vadd.f32 0.0, %v4550
      %v4552 = vpop.f32.mrf.mxu0
      %v4553 = vadd.f32 0.0, %v4552
      %4554 = vdwg.mxu0
      %4555 = vmatpush.bf16.msra.mxu0 %v4435
      %4556 = vmatpush.bf16.msra.mxu0 %v4433
      %4557 = vmatpush.bf16.msra.mxu0 %v4431
      %4558 = vmatpush.bf16.msra.mxu0 %v4429
      %4559 = vmatpush.bf16.msra.mxu0 %v4427
      %4560 = vmatpush.bf16.msra.mxu0 %v4425
      %4561 = vmatpush.bf16.msra.mxu0 %v4423
      %4562 = vmatpush.bf16.msra.mxu0 %v4421
      %4563 = vmatmul.bf16.gmra.mxu0 %v4268
      %v4564 = vpop.f32.mrf.mxu0
      %v4565 = vadd.f32 %v4536, %v4564
      %v4566 = vpop.f32.mrf.mxu0
      %v4567 = vadd.f32 %v4538, %v4566
      %4568 = vmatmul.bf16.gmra.mxu0 %v4270
      %v4569 = vpop.f32.mrf.mxu0
      %v4570 = vadd.f32 %v4541, %v4569
      %v4571 = vpop.f32.mrf.mxu0
      %v4572 = vadd.f32 %v4543, %v4571
      %4573 = vmatmul.bf16.gmra.mxu0 %v4272
      %v4574 = vpop.f32.mrf.mxu0
      %v4575 = vadd.f32 %v4546, %v4574
      %v4576 = vpop.f32.mrf.mxu0
      %v4577 = vadd.f32 %v4548, %v4576
      %4578 = vmatmul.bf16.gmra.mxu0 %v4274
      %v4579 = vpop.f32.mrf.mxu0
      %v4580 = vadd.f32 %v4551, %v4579
      %v4581 = vpop.f32.mrf.mxu0
      %v4582 = vadd.f32 %v4553, %v4581
      %4583 = vdwg.mxu0
      %v4584 = vadd.f32 %v4251, %v4507
      %v4585 = vadd.f32 %v4252, %v4565
      %v4586 = vadd.f32 %v4253, %v4509
      %v4587 = vadd.f32 %v4254, %v4567
      %v4588 = vadd.f32 %v4255, %v4512
      %v4589 = vadd.f32 %v4256, %v4570
      %v4590 = vadd.f32 %v4257, %v4514
      %v4591 = vadd.f32 %v4258, %v4572
      %v4592 = vadd.f32 %v4259, %v4517
      %v4593 = vadd.f32 %v4260, %v4575
      %v4594 = vadd.f32 %v4261, %v4519
      %v4595 = vadd.f32 %v4262, %v4577
      %v4596 = vadd.f32 %v4263, %v4522
      %v4597 = vadd.f32 %v4264, %v4580
      %v4598 = vadd.f32 %v4265, %v4524
      %v4599 = vadd.f32 %v4266, %v4582
      %4600 = vst [vmem:[#allocation3] sm:$0xff] %v4584
      %4601 = vst [vmem:[#allocation3 + $0x8] sm:$0xff] %v4585
      %4602 = vst [vmem:[#allocation3 + $0x10] sm:$0xff] %v4586
      %4603 = vst [vmem:[#allocation3 + $0x18] sm:$0xff] %v4587
      %4604 = vst [vmem:[#allocation3 + $0x20] sm:$0xff] %v4588
      %4605 = vst [vmem:[#allocation3 + $0x28] sm:$0xff] %v4589
      %4606 = vst [vmem:[#allocation3 + $0x30] sm:$0xff] %v4590
      %4607 = vst [vmem:[#allocation3 + $0x38] sm:$0xff] %v4591
      %4608 = vst [vmem:[#allocation3 + $0x40] sm:$0xff] %v4592
      %4609 = vst [vmem:[#allocation3 + $0x48] sm:$0xff] %v4593
      %4610 = vst [vmem:[#allocation3 + $0x50] sm:$0xff] %v4594
      %4611 = vst [vmem:[#allocation3 + $0x58] sm:$0xff] %v4595
      %4612 = vst [vmem:[#allocation3 + $0x60] sm:$0xff] %v4596
      %4613 = vst [vmem:[#allocation3 + $0x68] sm:$0xff] %v4597
      %4614 = vst [vmem:[#allocation3 + $0x70] sm:$0xff] %v4598
      %4615 = vst [vmem:[#allocation3 + $0x78] sm:$0xff] %v4599
      %v4616 = vld [vmem:[#allocation3] sm:$0xff]
      %v4617 = vld [vmem:[#allocation3 + $0x8] sm:$0xff]
      %v4618 = vld [vmem:[#allocation3 + $0x10] sm:$0xff]
      %v4619 = vld [vmem:[#allocation3 + $0x18] sm:$0xff]
      %v4620 = vld [vmem:[#allocation3 + $0x20] sm:$0xff]
      %v4621 = vld [vmem:[#allocation3 + $0x28] sm:$0xff]
      %v4622 = vld [vmem:[#allocation3 + $0x30] sm:$0xff]
      %v4623 = vld [vmem:[#allocation3 + $0x38] sm:$0xff]
      %v4624 = vld [vmem:[#allocation3 + $0x40] sm:$0xff]
      %v4625 = vld [vmem:[#allocation3 + $0x48] sm:$0xff]
      %v4626 = vld [vmem:[#allocation3 + $0x50] sm:$0xff]
      %v4627 = vld [vmem:[#allocation3 + $0x58] sm:$0xff]
      %v4628 = vld [vmem:[#allocation3 + $0x60] sm:$0xff]
      %v4629 = vld [vmem:[#allocation3 + $0x68] sm:$0xff]
      %v4630 = vld [vmem:[#allocation3 + $0x70] sm:$0xff]
      %v4631 = vld [vmem:[#allocation3 + $0x78] sm:$0xff]
      %v4632 = vld [vmem:[%s4] sm:$0x3]
      %v4634 = vperm.slane %v4632, 0
      %v4635 = vperm.slane %v4632, 1
      %v4638 = vadd.f32 %v4616, %v4634
      %v4639 = vadd.f32 %v4617, %v4635
      %v4640 = vadd.f32 %v4618, %v4634
      %v4641 = vadd.f32 %v4619, %v4635
      %v4642 = vadd.f32 %v4620, %v4634
      %v4643 = vadd.f32 %v4621, %v4635
      %v4644 = vadd.f32 %v4622, %v4634
      %v4645 = vadd.f32 %v4623, %v4635
      %v4646 = vadd.f32 %v4624, %v4634
      %v4647 = vadd.f32 %v4625, %v4635
      %v4648 = vadd.f32 %v4626, %v4634
      %v4649 = vadd.f32 %v4627, %v4635
      %v4650 = vadd.f32 %v4628, %v4634
      %v4651 = vadd.f32 %v4629, %v4635
      %v4652 = vadd.f32 %v4630, %v4634
      %v4653 = vadd.f32 %v4631, %v4635
      %v4654 = vadd.f32 %v4638, %v4640
      %v4655 = vadd.f32 %v4654, %v4642
      %v4656 = vadd.f32 %v4655, %v4644
      %v4657 = vadd.f32 %v4656, %v4646
      %v4658 = vadd.f32 %v4657, %v4648
      %v4659 = vadd.f32 %v4658, %v4650
      %v4660 = vadd.f32 %v4659, %v4652
      %v4661 = vrot.slane %v4660, 4
      %v4662 = vadd.f32 %v4660, %v4661
      %v4663 = vrot.slane %v4662, 2
      %v4664 = vadd.f32 %v4662, %v4663
      %v4665 = vrot.slane %v4664, 1
      %v4666 = vadd.f32 %v4664, %v4665
      %v4667 = vadd.f32 %v4639, %v4641
      %v4668 = vadd.f32 %v4667, %v4643
      %v4669 = vadd.f32 %v4668, %v4645
      %v4670 = vadd.f32 %v4669, %v4647
      %v4671 = vadd.f32 %v4670, %v4649
      %v4672 = vadd.f32 %v4671, %v4651
      %v4673 = vadd.f32 %v4672, %v4653
      %v4674 = vrot.slane %v4673, 4
      %v4675 = vadd.f32 %v4673, %v4674
      %v4676 = vrot.slane %v4675, 2
      %v4677 = vadd.f32 %v4675, %v4676
      %v4678 = vrot.slane %v4677, 1
      %v4679 = vadd.f32 %v4677, %v4678
      %v4682 = vrot.slane %v4679, 7
      %vm4683 = vcmask 1040384
      %v4684 = vsel %vm4683, %v4666, %v4682
      %v4686 = vlaneseq
      %vm4687 = vcmp.ge.s32.totalorder %v4686, 0
      %vm4688 = vcmp.lt.s32.totalorder %v4686, 256
      %vm4689 = vmand %vm4687, %vm4688
      %4690 = vst.msk [vmem:[%s295] sm:$0x3] %vm4689, %v4684
      %v4691 = vmul.f32 %v4638, %v4638
      %v4692 = vmul.f32 %v4639, %v4639
      %v4693 = vmul.f32 %v4640, %v4640
      %v4694 = vmul.f32 %v4641, %v4641
      %v4695 = vmul.f32 %v4642, %v4642
      %v4696 = vmul.f32 %v4643, %v4643
      %v4697 = vmul.f32 %v4644, %v4644
      %v4698 = vmul.f32 %v4645, %v4645
      %v4699 = vmul.f32 %v4646, %v4646
      %v4700 = vmul.f32 %v4647, %v4647
      %v4701 = vmul.f32 %v4648, %v4648
      %v4702 = vmul.f32 %v4649, %v4649
      %v4703 = vmul.f32 %v4650, %v4650
      %v4704 = vmul.f32 %v4651, %v4651
      %v4705 = vmul.f32 %v4652, %v4652
      %v4706 = vmul.f32 %v4653, %v4653
      %v4707 = vadd.f32 %v4691, %v4693
      %v4708 = vadd.f32 %v4707, %v4695
      %v4709 = vadd.f32 %v4708, %v4697
      %v4710 = vadd.f32 %v4709, %v4699
      %v4711 = vadd.f32 %v4710, %v4701
      %v4712 = vadd.f32 %v4711, %v4703
      %v4713 = vadd.f32 %v4712, %v4705
      %v4714 = vrot.slane %v4713, 4
      %v4715 = vadd.f32 %v4713, %v4714
      %v4716 = vrot.slane %v4715, 2
      %v4717 = vadd.f32 %v4715, %v4716
      %v4718 = vrot.slane %v4717, 1
      %v4719 = vadd.f32 %v4717, %v4718
      %v4720 = vadd.f32 %v4692, %v4694
      %v4721 = vadd.f32 %v4720, %v4696
      %v4722 = vadd.f32 %v4721, %v4698
      %v4723 = vadd.f32 %v4722, %v4700
      %v4724 = vadd.f32 %v4723, %v4702
      %v4725 = vadd.f32 %v4724, %v4704
      %v4726 = vadd.f32 %v4725, %v4706
      %v4727 = vrot.slane %v4726, 4
      %v4728 = vadd.f32 %v4726, %v4727
      %v4729 = vrot.slane %v4728, 2
      %v4730 = vadd.f32 %v4728, %v4729
      %v4731 = vrot.slane %v4730, 1
      %v4732 = vadd.f32 %v4730, %v4731
      %v4735 = vrot.slane %v4732, 7
      %v4736 = vsel %vm4683, %v4719, %v4735
      %4738 = vst.msk [vmem:[%s299] sm:$0x3] %vm4689, %v4736
      %v4739 = vpack.c.bf16 %v4639, %v4638
      %v4740 = vpack.c.bf16 %v4641, %v4640
      %v4741 = vpack.c.bf16 %v4643, %v4642
      %v4742 = vpack.c.bf16 %v4645, %v4644
      %v4743 = vpack.c.bf16 %v4647, %v4646
      %v4744 = vpack.c.bf16 %v4649, %v4648
      %v4745 = vpack.c.bf16 %v4651, %v4650
      %v4746 = vpack.c.bf16 %v4653, %v4652
      %4747 = vst [vmem:[%s291] sm:$0xff] %v4739
      %4748 = vst [vmem:[%s291 + $0x8] sm:$0xff] %v4740
      %4749 = vst [vmem:[%s291 + $0x10] sm:$0xff] %v4741
      %4750 = vst [vmem:[%s291 + $0x18] sm:$0xff] %v4742
      %4751 = vst [vmem:[%s291 + $0x20] sm:$0xff] %v4743
      %4752 = vst [vmem:[%s291 + $0x28] sm:$0xff] %v4744
      %4753 = vst [vmem:[%s291 + $0x30] sm:$0xff] %v4745
      %4754 = vst [vmem:[%s291 + $0x38] sm:$0xff] %v4746
      %p4755 = scmp.lt.s32.totalorder %s19, 1
      %s4756 = scalar_select %p4755, %s19, 1
      %s4757 = smul.addr %s4756, 16
      %s4758 = smul.addr %s4757, 4
      %s4759 = scalar_lea.vmem %s5, %s4758
      %p4760 = scmp.lt.s32.totalorder %s19, 1
      %s4761 = scalar_select %p4760, %s19, 1
      %s4762 = smul.addr %s4761, 2
      %s4763 = scalar_lea.vmem %s6, %s4762
      %p4764 = scmp.lt.s32.totalorder %s19, 1
      %s4765 = scalar_select %p4764, %s19, 1
      %s4766 = smul.addr %s4765, 2
      %s4767 = scalar_lea.vmem %s7, %s4766
      // Predicated region
      $region41: #{model_forward.4} parent=39 // pred_check
        %p4768 = pneg %p147
      $region42: #{model_forward.4} parent=39 // pred_check_branch
        %4770 = sbr.rel (%p4768) target = $region44
      $region43: #{model_forward.4} parent=39 // pred_region
        _
      $region44: #{model_forward.4} parent=39 // pred_fallthru
        _
      // Predicated region
      $region45: #{model_forward.4} parent=39 // pred_check
        %p4771 = pneg %p173
      $region46: #{model_forward.4} parent=39 // pred_check_branch
        %4773 = sbr.rel (%p4771) target = $region48
      $region47: #{model_forward.4} parent=39 // pred_region
        _
      $region48: #{model_forward.4} parent=39 // pred_fallthru
        _
      // Predicated region
      $region49: #{model_forward.4} parent=39 // pred_check
        %p4774 = pneg %p199
      $region50: #{model_forward.4} parent=39 // pred_check_branch
        %4776 = sbr.rel (%p4774) target = $region52
      $region51: #{model_forward.4} parent=39 // pred_region
        _
      $region52: #{model_forward.4} parent=39 // pred_fallthru
        _
    $region40: #{model_forward.4} parent=5 // pred_fallthru
      _
    %p4777 = scmp.le.s32.totalorder 2, %s14
    // Predicated region
    $region53: #{model_forward.4} parent=5 // pred_check
      %p4778 = pneg %p4777
    $region54: #{model_forward.4} parent=5 // pred_check_branch
      %4780 = sbr.rel (%p4778) target = $region56
    $region55: #{model_forward.4} parent=5 // pred_region
      %s4781 = ssub.s32 %s14, 2
      // Predicated region
      $region57: #{model_forward.4} parent=55 // pred_check
        %p4782 = pneg %p153
      $region58: #{model_forward.4} parent=55 // pred_check_branch
        %4784 = sbr.rel (%p4782) target = $region60
      $region59: #{model_forward.4} parent=55 // pred_region
        %p4785 = scmp.lt.s32.totalorder %s20, 1
        %s4786 = scalar_select %p4785, %s20, 1
        %s4787 = smul.addr %s4786, 16
        %s4788 = smul.addr %s4787, 4
        %s4789 = scalar_lea.vmem %s5, %s4788
      $region60: #{model_forward.4} parent=55 // pred_fallthru
        _
      // Predicated region
      $region61: #{model_forward.4} parent=55 // pred_check
        %p4790 = pneg %p179
      $region62: #{model_forward.4} parent=55 // pred_check_branch
        %4792 = sbr.rel (%p4790) target = $region64
      $region63: #{model_forward.4} parent=55 // pred_region
        %p4793 = scmp.lt.s32.totalorder %s20, 1
        %s4794 = scalar_select %p4793, %s20, 1
        %s4795 = smul.addr %s4794, 2
        %s4796 = scalar_lea.vmem %s6, %s4795
      $region64: #{model_forward.4} parent=55 // pred_fallthru
        _
      // Predicated region
      $region65: #{model_forward.4} parent=55 // pred_check
        %p4797 = pneg %p205
      $region66: #{model_forward.4} parent=55 // pred_check_branch
        %4799 = sbr.rel (%p4797) target = $region68
      $region67: #{model_forward.4} parent=55 // pred_region
        %p4800 = scmp.lt.s32.totalorder %s20, 1
        %s4801 = scalar_select %p4800, %s20, 1
        %s4802 = smul.addr %s4801, 2
        %s4803 = scalar_lea.vmem %s7, %s4802
      $region68: #{model_forward.4} parent=55 // pred_fallthru
        _
    $region56: #{model_forward.4} parent=5 // pred_fallthru
      _
  $region6: #{model_forward.4} parent=0 // loop_footer
    %s18 = sadd.s32 1, %s14
  $region7: #{model_forward.4} parent=0 // loop_footer_branch
    %13 = sbr.rel target = $region3
  $region8: #{model_forward.4} parent=0 // loop_exit
    _

</llo_original>
